<compile_context>
chip_gen: v5e
topology: v5e:2x2
jax: 0.10.0
libtpu: 0.0.40
codegen_flags: <defaults>
</compile_context>

<pallas_src>
import jax
import jax.numpy as jnp
from jax import lax
from jax.experimental import pallas as pl
from jax.experimental.pallas import tpu as pltpu


K_ITERS = 6
EPS = 2e-8


def _nmf_kernel(x_ref, d_ref, c_ref, o_ref):
    # x_ref/o_ref: (bb, dim, n); d_ref: (dim, r); c_ref: (r, n)
    bb, dim, n = x_ref.shape

    D0 = d_ref[...]
    C0 = c_ref[...]

    xs = [jnp.maximum(x_ref[b], 0.0) for b in range(bb)]  # ReLU, once per batch
    Ds = [D0 for _ in range(bb)]
    Cs = [C0 for _ in range(bb)]

    # K multiplicative updates.  The bb independent per-batch chains are
    # unrolled next to each other so their dependent tiny matmuls interleave
    # in the VLIW schedule and keep the MXU pipeline busy.
    for _ in range(K_ITERS):
        new_Cs, new_Ds = [], []
        for b in range(bb):
            x, D, C = xs[b], Ds[b], Cs[b]

            # --- C update -------------------------------------------------
            # Fused: D.T @ [x | D] -> [D.T x | D.T D]  (contract over dim).
            xD = jnp.concatenate([x, D], axis=1)                       # (dim, n+r)
            DtxD = lax.dot_general(
                D, xD, (((0,), (0,)), ((), ())),
                preferred_element_type=jnp.float32)                    # (r, n+r)
            Dt_x = DtxD[:, :n]                                         # (r, n)
            DtD = DtxD[:, n:]                                          # (r, r)
            DtDC = jnp.dot(DtD, C, preferred_element_type=jnp.float32)  # (r, n)
            C_new = C * (Dt_x / (DtDC + EPS))

            # --- D update -------------------------------------------------
            # Fused: [x ; C] @ C.T -> [x C.T ; C C.T]  (contract over n).
            xC = jnp.concatenate([x, C], axis=0)                       # (dim+r, n)
            xCCt = lax.dot_general(
                xC, C, (((1,), (1,)), ((), ())),
                preferred_element_type=jnp.float32)                    # (dim+r, r)
            x_Ct = xCCt[:dim, :]                                       # (dim, r)
            CCt = xCCt[dim:, :]                                        # (r, r)
            # Re-associated: D @ (C C.T) instead of (D @ C) @ C.T.
            DCCt = jnp.dot(D, CCt, preferred_element_type=jnp.float32)  # (dim, r)
            D_new = D * (x_Ct / (DCCt + EPS))

            new_Cs.append(C_new)
            new_Ds.append(D_new)
        Cs, Ds = new_Cs, new_Ds

    for b in range(bb):
        o_ref[b] = jnp.dot(Ds[b], Cs[b], preferred_element_type=jnp.float32)


def nmf_forward(x, D, C, *, batches_per_step=None):
    """x: (B, dim, n) f32; D: (dim, r); C: (r, n). Returns (B, dim, n) f32."""
    B, dim, n = x.shape
    r = D.shape[1]

    if batches_per_step is None:
        # Interleave 2 independent chains per grid step when the batch allows;
        # for B >= 4 the grid still has >= 2 steps (feeds both v7x cores).
        bb = 2 if (B % 2 == 0) else 1
    else:
        bb = batches_per_step
    assert B % bb == 0, "batch must be divisible by batches_per_step"
    grid = (B // bb,)

    return pl.pallas_call(
        _nmf_kernel,
        out_shape=jax.ShapeDtypeStruct((B, dim, n), jnp.float32),
        grid_spec=pltpu.PrefetchScalarGridSpec(
            num_scalar_prefetch=0,
            grid=grid,
            in_specs=[
                pl.BlockSpec((bb, dim, n), lambda g: (g, 0, 0)),
                pl.BlockSpec((dim, r), lambda g: (0, 0)),
                pl.BlockSpec((r, n), lambda g: (0, 0)),
            ],
            out_specs=pl.BlockSpec((bb, dim, n), lambda g: (g, 0, 0)),
        ),
        compiler_params=pltpu.CompilerParams(
            dimension_semantics=("parallel",),
        ),
    )(x, D, C)


def nmf_reference(x, D, C):
    """Pure-JAX reference mirroring the PyTorch forward."""
    x = jnp.maximum(x, 0.0)
    B = x.shape[0]
    Db = jnp.broadcast_to(D[None], (B,) + D.shape)
    Cb = jnp.broadcast_to(C[None], (B,) + C.shape)

    def t(a):
        return jnp.swapaxes(a, 1, 2)

    for _ in range(K_ITERS):
        C_new = Cb * (t(Db) @ x / (t(Db) @ Db @ Cb + EPS))
        D_new = Db * (x @ t(Cb) / (Db @ Cb @ t(Cb) + EPS))
        Cb, Db = C_new, D_new
    return Db @ Cb


if __name__ == "__main__":
    # Small shapes consistent with the module: dim=64, ratio=8 -> r=8, n=128, batch=2.
    B, dim, n, ratio = 2, 64, 128, 8
    r = dim // ratio

    key = jax.random.PRNGKey(0)
    kx, kd, kc = jax.random.split(key, 3)
    x = jax.random.normal(kx, (B, dim, n), dtype=jnp.float32)
    # Parameters: uniform(0, 1), matching torch.zeros(...).uniform_(0, 1).
    D = jax.random.uniform(kd, (dim, r), dtype=jnp.float32)
    C = jax.random.uniform(kc, (r, n), dtype=jnp.float32)

    out = jax.block_until_ready(nmf_forward(x, D, C))

    ref = jax.block_until_ready(nmf_reference(x, D, C))
    assert out.shape == (B, dim, n)
    assert jnp.allclose(out, ref, rtol=1e-4, atol=1e-4), "mismatch vs reference"

    print("KERNEL_OK")
</pallas_src>

<mosaic_0001>
module attributes {stable_mosaic.version = 11 : i64} {
  func.func @_nmf_kernel(%arg0: i32, %arg1: memref<2x64x128xf32, #tpu.memory_space<vmem>>, %arg2: memref<64x8xf32, #tpu.memory_space<vmem>>, %arg3: memref<8x128xf32, #tpu.memory_space<vmem>>, %arg4: memref<2x64x128xf32, #tpu.memory_space<vmem>>) attributes {dimension_semantics = [#tpu.dimension_semantics<parallel>], iteration_bounds = array<i64: 1>, scalar_prefetch = 0 : i64, scratch_operands = 0 : i64, tpu.core_type = #tpu.core_type<tc>, window_params = [{transform_indices = @transform_0, window_bounds = array<i64: 2, 64, 128>}, {pipeline_mode = #tpu.pipeline_mode<synchronous>, transform_indices = @transform_1, window_bounds = array<i64: 64, 8>}, {pipeline_mode = #tpu.pipeline_mode<synchronous>, transform_indices = @transform_2, window_bounds = array<i64: 8, 128>}, {transform_indices = @transform_3, window_bounds = array<i64: 2, 64, 128>}]} {
    %c0 = arith.constant 0 : index
    %c0_0 = arith.constant 0 : index
    %0 = vector.load %arg2[%c0, %c0_0] : memref<64x8xf32, #tpu.memory_space<vmem>>, vector<64x8xf32>
    %c0_1 = arith.constant 0 : index
    %c0_2 = arith.constant 0 : index
    %1 = vector.load %arg3[%c0_1, %c0_2] : memref<8x128xf32, #tpu.memory_space<vmem>>, vector<8x128xf32>
    %c0_3 = arith.constant 0 : index
    %c0_4 = arith.constant 0 : index
    %c0_5 = arith.constant 0 : index
    %2 = vector.load %arg1[%c0_3, %c0_4, %c0_5] : memref<2x64x128xf32, #tpu.memory_space<vmem>>, vector<1x64x128xf32>
    %3 = vector.shape_cast %2 : vector<1x64x128xf32> to vector<64x128xf32>
    %cst = arith.constant 0.000000e+00 : f32
    %4 = vector.broadcast %cst : f32 to vector<64x128xf32>
    %5 = arith.maximumf %3, %4 : vector<64x128xf32>
    %c1 = arith.constant 1 : index
    %c0_6 = arith.constant 0 : index
    %c0_7 = arith.constant 0 : index
    %6 = vector.load %arg1[%c1, %c0_6, %c0_7] : memref<2x64x128xf32, #tpu.memory_space<vmem>>, vector<1x64x128xf32>
    %7 = vector.shape_cast %6 : vector<1x64x128xf32> to vector<64x128xf32>
    %cst_8 = arith.constant 0.000000e+00 : f32
    %8 = vector.broadcast %cst_8 : f32 to vector<64x128xf32>
    %9 = arith.maximumf %7, %8 : vector<64x128xf32>
    %10 = tpu.concatenate %5, %0 in 1 : vector<64x128xf32>, vector<64x8xf32> -> vector<64x136xf32>
    %cst_9 = arith.constant dense<0.000000e+00> : vector<8x136xf32>
    %11 = tpu.matmul %0, %10, %cst_9 {dimension_numbers = #tpu.dot_dimension_numbers<[0], [0], [1], [1], [0, 1, 1, 1], [], []>} : vector<64x8xf32>, vector<64x136xf32>, vector<8x136xf32> -> vector<8x136xf32>
    %12 = vector.extract_strided_slice %11 {offsets = [0, 0], sizes = [8, 128], strides = [1, 1]} : vector<8x136xf32> to vector<8x128xf32>
    %13 = vector.extract_strided_slice %11 {offsets = [0, 128], sizes = [8, 8], strides = [1, 1]} : vector<8x136xf32> to vector<8x8xf32>
    %cst_10 = arith.constant dense<0.000000e+00> : vector<8x128xf32>
    %14 = tpu.matmul %13, %1, %cst_10 {dimension_numbers = #tpu.dot_dimension_numbers<[1], [0], [0], [1], [0, 0, 1, 1], [], []>} : vector<8x8xf32>, vector<8x128xf32>, vector<8x128xf32> -> vector<8x128xf32>
    %cst_11 = arith.constant 2.000000e-08 : f32
    %15 = vector.broadcast %cst_11 : f32 to vector<8x128xf32>
    %16 = arith.addf %14, %15 : vector<8x128xf32>
    %17 = arith.divf %12, %16 : vector<8x128xf32>
    %18 = arith.mulf %1, %17 : vector<8x128xf32>
    %19 = tpu.concatenate %5, %1 in 0 : vector<64x128xf32>, vector<8x128xf32> -> vector<72x128xf32>
    %cst_12 = arith.constant dense<0.000000e+00> : vector<72x8xf32>
    %20 = tpu.matmul %19, %1, %cst_12 {dimension_numbers = #tpu.dot_dimension_numbers<[1], [1], [0], [0], [0, 0, 1, 0], [], []>} : vector<72x128xf32>, vector<8x128xf32>, vector<72x8xf32> -> vector<72x8xf32>
    %21 = vector.extract_strided_slice %20 {offsets = [0, 0], sizes = [64, 8], strides = [1, 1]} : vector<72x8xf32> to vector<64x8xf32>
    %22 = vector.extract_strided_slice %20 {offsets = [64, 0], sizes = [8, 8], strides = [1, 1]} : vector<72x8xf32> to vector<8x8xf32>
    %cst_13 = arith.constant dense<0.000000e+00> : vector<64x8xf32>
    %23 = tpu.matmul %0, %22, %cst_13 {dimension_numbers = #tpu.dot_dimension_numbers<[1], [0], [0], [1], [0, 0, 1, 1], [], []>} : vector<64x8xf32>, vector<8x8xf32>, vector<64x8xf32> -> vector<64x8xf32>
    %cst_14 = arith.constant 2.000000e-08 : f32
    %24 = vector.broadcast %cst_14 : f32 to vector<64x8xf32>
    %25 = arith.addf %23, %24 : vector<64x8xf32>
    %26 = arith.divf %21, %25 : vector<64x8xf32>
    %27 = arith.mulf %0, %26 : vector<64x8xf32>
    %28 = tpu.concatenate %9, %0 in 1 : vector<64x128xf32>, vector<64x8xf32> -> vector<64x136xf32>
    %cst_15 = arith.constant dense<0.000000e+00> : vector<8x136xf32>
    %29 = tpu.matmul %0, %28, %cst_15 {dimension_numbers = #tpu.dot_dimension_numbers<[0], [0], [1], [1], [0, 1, 1, 1], [], []>} : vector<64x8xf32>, vector<64x136xf32>, vector<8x136xf32> -> vector<8x136xf32>
    %30 = vector.extract_strided_slice %29 {offsets = [0, 0], sizes = [8, 128], strides = [1, 1]} : vector<8x136xf32> to vector<8x128xf32>
    %31 = vector.extract_strided_slice %29 {offsets = [0, 128], sizes = [8, 8], strides = [1, 1]} : vector<8x136xf32> to vector<8x8xf32>
    %cst_16 = arith.constant dense<0.000000e+00> : vector<8x128xf32>
    %32 = tpu.matmul %31, %1, %cst_16 {dimension_numbers = #tpu.dot_dimension_numbers<[1], [0], [0], [1], [0, 0, 1, 1], [], []>} : vector<8x8xf32>, vector<8x128xf32>, vector<8x128xf32> -> vector<8x128xf32>
    %cst_17 = arith.constant 2.000000e-08 : f32
    %33 = vector.broadcast %cst_17 : f32 to vector<8x128xf32>
    %34 = arith.addf %32, %33 : vector<8x128xf32>
    %35 = arith.divf %30, %34 : vector<8x128xf32>
    %36 = arith.mulf %1, %35 : vector<8x128xf32>
    %37 = tpu.concatenate %9, %1 in 0 : vector<64x128xf32>, vector<8x128xf32> -> vector<72x128xf32>
    %cst_18 = arith.constant dense<0.000000e+00> : vector<72x8xf32>
    %38 = tpu.matmul %37, %1, %cst_18 {dimension_numbers = #tpu.dot_dimension_numbers<[1], [1], [0], [0], [0, 0, 1, 0], [], []>} : vector<72x128xf32>, vector<8x128xf32>, vector<72x8xf32> -> vector<72x8xf32>
    %39 = vector.extract_strided_slice %38 {offsets = [0, 0], sizes = [64, 8], strides = [1, 1]} : vector<72x8xf32> to vector<64x8xf32>
    %40 = vector.extract_strided_slice %38 {offsets = [64, 0], sizes = [8, 8], strides = [1, 1]} : vector<72x8xf32> to vector<8x8xf32>
    %cst_19 = arith.constant dense<0.000000e+00> : vector<64x8xf32>
    %41 = tpu.matmul %0, %40, %cst_19 {dimension_numbers = #tpu.dot_dimension_numbers<[1], [0], [0], [1], [0, 0, 1, 1], [], []>} : vector<64x8xf32>, vector<8x8xf32>, vector<64x8xf32> -> vector<64x8xf32>
    %cst_20 = arith.constant 2.000000e-08 : f32
    %42 = vector.broadcast %cst_20 : f32 to vector<64x8xf32>
    %43 = arith.addf %41, %42 : vector<64x8xf32>
    %44 = arith.divf %39, %43 : vector<64x8xf32>
    %45 = arith.mulf %0, %44 : vector<64x8xf32>
    %46 = tpu.concatenate %5, %27 in 1 : vector<64x128xf32>, vector<64x8xf32> -> vector<64x136xf32>
    %cst_21 = arith.constant dense<0.000000e+00> : vector<8x136xf32>
    %47 = tpu.matmul %27, %46, %cst_21 {dimension_numbers = #tpu.dot_dimension_numbers<[0], [0], [1], [1], [0, 1, 1, 1], [], []>} : vector<64x8xf32>, vector<64x136xf32>, vector<8x136xf32> -> vector<8x136xf32>
    %48 = vector.extract_strided_slice %47 {offsets = [0, 0], sizes = [8, 128], strides = [1, 1]} : vector<8x136xf32> to vector<8x128xf32>
    %49 = vector.extract_strided_slice %47 {offsets = [0, 128], sizes = [8, 8], strides = [1, 1]} : vector<8x136xf32> to vector<8x8xf32>
    %cst_22 = arith.constant dense<0.000000e+00> : vector<8x128xf32>
    %50 = tpu.matmul %49, %18, %cst_22 {dimension_numbers = #tpu.dot_dimension_numbers<[1], [0], [0], [1], [0, 0, 1, 1], [], []>} : vector<8x8xf32>, vector<8x128xf32>, vector<8x128xf32> -> vector<8x128xf32>
    %cst_23 = arith.constant 2.000000e-08 : f32
    %51 = vector.broadcast %cst_23 : f32 to vector<8x128xf32>
    %52 = arith.addf %50, %51 : vector<8x128xf32>
    %53 = arith.divf %48, %52 : vector<8x128xf32>
    %54 = arith.mulf %18, %53 : vector<8x128xf32>
    %55 = tpu.concatenate %5, %18 in 0 : vector<64x128xf32>, vector<8x128xf32> -> vector<72x128xf32>
    %cst_24 = arith.constant dense<0.000000e+00> : vector<72x8xf32>
    %56 = tpu.matmul %55, %18, %cst_24 {dimension_numbers = #tpu.dot_dimension_numbers<[1], [1], [0], [0], [0, 0, 1, 0], [], []>} : vector<72x128xf32>, vector<8x128xf32>, vector<72x8xf32> -> vector<72x8xf32>
    %57 = vector.extract_strided_slice %56 {offsets = [0, 0], sizes = [64, 8], strides = [1, 1]} : vector<72x8xf32> to vector<64x8xf32>
    %58 = vector.extract_strided_slice %56 {offsets = [64, 0], sizes = [8, 8], strides = [1, 1]} : vector<72x8xf32> to vector<8x8xf32>
    %cst_25 = arith.constant dense<0.000000e+00> : vector<64x8xf32>
    %59 = tpu.matmul %27, %58, %cst_25 {dimension_numbers = #tpu.dot_dimension_numbers<[1], [0], [0], [1], [0, 0, 1, 1], [], []>} : vector<64x8xf32>, vector<8x8xf32>, vector<64x8xf32> -> vector<64x8xf32>
    %cst_26 = arith.constant 2.000000e-08 : f32
    %60 = vector.broadcast %cst_26 : f32 to vector<64x8xf32>
    %61 = arith.addf %59, %60 : vector<64x8xf32>
    %62 = arith.divf %57, %61 : vector<64x8xf32>
    %63 = arith.mulf %27, %62 : vector<64x8xf32>
    %64 = tpu.concatenate %9, %45 in 1 : vector<64x128xf32>, vector<64x8xf32> -> vector<64x136xf32>
    %cst_27 = arith.constant dense<0.000000e+00> : vector<8x136xf32>
    %65 = tpu.matmul %45, %64, %cst_27 {dimension_numbers = #tpu.dot_dimension_numbers<[0], [0], [1], [1], [0, 1, 1, 1], [], []>} : vector<64x8xf32>, vector<64x136xf32>, vector<8x136xf32> -> vector<8x136xf32>
    %66 = vector.extract_strided_slice %65 {offsets = [0, 0], sizes = [8, 128], strides = [1, 1]} : vector<8x136xf32> to vector<8x128xf32>
    %67 = vector.extract_strided_slice %65 {offsets = [0, 128], sizes = [8, 8], strides = [1, 1]} : vector<8x136xf32> to vector<8x8xf32>
    %cst_28 = arith.constant dense<0.000000e+00> : vector<8x128xf32>
    %68 = tpu.matmul %67, %36, %cst_28 {dimension_numbers = #tpu.dot_dimension_numbers<[1], [0], [0], [1], [0, 0, 1, 1], [], []>} : vector<8x8xf32>, vector<8x128xf32>, vector<8x128xf32> -> vector<8x128xf32>
    %cst_29 = arith.constant 2.000000e-08 : f32
    %69 = vector.broadcast %cst_29 : f32 to vector<8x128xf32>
    %70 = arith.addf %68, %69 : vector<8x128xf32>
    %71 = arith.divf %66, %70 : vector<8x128xf32>
    %72 = arith.mulf %36, %71 : vector<8x128xf32>
    %73 = tpu.concatenate %9, %36 in 0 : vector<64x128xf32>, vector<8x128xf32> -> vector<72x128xf32>
    %cst_30 = arith.constant dense<0.000000e+00> : vector<72x8xf32>
    %74 = tpu.matmul %73, %36, %cst_30 {dimension_numbers = #tpu.dot_dimension_numbers<[1], [1], [0], [0], [0, 0, 1, 0], [], []>} : vector<72x128xf32>, vector<8x128xf32>, vector<72x8xf32> -> vector<72x8xf32>
    %75 = vector.extract_strided_slice %74 {offsets = [0, 0], sizes = [64, 8], strides = [1, 1]} : vector<72x8xf32> to vector<64x8xf32>
    %76 = vector.extract_strided_slice %74 {offsets = [64, 0], sizes = [8, 8], strides = [1, 1]} : vector<72x8xf32> to vector<8x8xf32>
    %cst_31 = arith.constant dense<0.000000e+00> : vector<64x8xf32>
    %77 = tpu.matmul %45, %76, %cst_31 {dimension_numbers = #tpu.dot_dimension_numbers<[1], [0], [0], [1], [0, 0, 1, 1], [], []>} : vector<64x8xf32>, vector<8x8xf32>, vector<64x8xf32> -> vector<64x8xf32>
    %cst_32 = arith.constant 2.000000e-08 : f32
    %78 = vector.broadcast %cst_32 : f32 to vector<64x8xf32>
    %79 = arith.addf %77, %78 : vector<64x8xf32>
    %80 = arith.divf %75, %79 : vector<64x8xf32>
    %81 = arith.mulf %45, %80 : vector<64x8xf32>
    %82 = tpu.concatenate %5, %63 in 1 : vector<64x128xf32>, vector<64x8xf32> -> vector<64x136xf32>
    %cst_33 = arith.constant dense<0.000000e+00> : vector<8x136xf32>
    %83 = tpu.matmul %63, %82, %cst_33 {dimension_numbers = #tpu.dot_dimension_numbers<[0], [0], [1], [1], [0, 1, 1, 1], [], []>} : vector<64x8xf32>, vector<64x136xf32>, vector<8x136xf32> -> vector<8x136xf32>
    %84 = vector.extract_strided_slice %83 {offsets = [0, 0], sizes = [8, 128], strides = [1, 1]} : vector<8x136xf32> to vector<8x128xf32>
    %85 = vector.extract_strided_slice %83 {offsets = [0, 128], sizes = [8, 8], strides = [1, 1]} : vector<8x136xf32> to vector<8x8xf32>
    %cst_34 = arith.constant dense<0.000000e+00> : vector<8x128xf32>
    %86 = tpu.matmul %85, %54, %cst_34 {dimension_numbers = #tpu.dot_dimension_numbers<[1], [0], [0], [1], [0, 0, 1, 1], [], []>} : vector<8x8xf32>, vector<8x128xf32>, vector<8x128xf32> -> vector<8x128xf32>
    %cst_35 = arith.constant 2.000000e-08 : f32
    %87 = vector.broadcast %cst_35 : f32 to vector<8x128xf32>
    %88 = arith.addf %86, %87 : vector<8x128xf32>
    %89 = arith.divf %84, %88 : vector<8x128xf32>
    %90 = arith.mulf %54, %89 : vector<8x128xf32>
    %91 = tpu.concatenate %5, %54 in 0 : vector<64x128xf32>, vector<8x128xf32> -> vector<72x128xf32>
    %cst_36 = arith.constant dense<0.000000e+00> : vector<72x8xf32>
    %92 = tpu.matmul %91, %54, %cst_36 {dimension_numbers = #tpu.dot_dimension_numbers<[1], [1], [0], [0], [0, 0, 1, 0], [], []>} : vector<72x128xf32>, vector<8x128xf32>, vector<72x8xf32> -> vector<72x8xf32>
    %93 = vector.extract_strided_slice %92 {offsets = [0, 0], sizes = [64, 8], strides = [1, 1]} : vector<72x8xf32> to vector<64x8xf32>
    %94 = vector.extract_strided_slice %92 {offsets = [64, 0], sizes = [8, 8], strides = [1, 1]} : vector<72x8xf32> to vector<8x8xf32>
    %cst_37 = arith.constant dense<0.000000e+00> : vector<64x8xf32>
    %95 = tpu.matmul %63, %94, %cst_37 {dimension_numbers = #tpu.dot_dimension_numbers<[1], [0], [0], [1], [0, 0, 1, 1], [], []>} : vector<64x8xf32>, vector<8x8xf32>, vector<64x8xf32> -> vector<64x8xf32>
    %cst_38 = arith.constant 2.000000e-08 : f32
    %96 = vector.broadcast %cst_38 : f32 to vector<64x8xf32>
    %97 = arith.addf %95, %96 : vector<64x8xf32>
    %98 = arith.divf %93, %97 : vector<64x8xf32>
    %99 = arith.mulf %63, %98 : vector<64x8xf32>
    %100 = tpu.concatenate %9, %81 in 1 : vector<64x128xf32>, vector<64x8xf32> -> vector<64x136xf32>
    %cst_39 = arith.constant dense<0.000000e+00> : vector<8x136xf32>
    %101 = tpu.matmul %81, %100, %cst_39 {dimension_numbers = #tpu.dot_dimension_numbers<[0], [0], [1], [1], [0, 1, 1, 1], [], []>} : vector<64x8xf32>, vector<64x136xf32>, vector<8x136xf32> -> vector<8x136xf32>
    %102 = vector.extract_strided_slice %101 {offsets = [0, 0], sizes = [8, 128], strides = [1, 1]} : vector<8x136xf32> to vector<8x128xf32>
    %103 = vector.extract_strided_slice %101 {offsets = [0, 128], sizes = [8, 8], strides = [1, 1]} : vector<8x136xf32> to vector<8x8xf32>
    %cst_40 = arith.constant dense<0.000000e+00> : vector<8x128xf32>
    %104 = tpu.matmul %103, %72, %cst_40 {dimension_numbers = #tpu.dot_dimension_numbers<[1], [0], [0], [1], [0, 0, 1, 1], [], []>} : vector<8x8xf32>, vector<8x128xf32>, vector<8x128xf32> -> vector<8x128xf32>
    %cst_41 = arith.constant 2.000000e-08 : f32
    %105 = vector.broadcast %cst_41 : f32 to vector<8x128xf32>
    %106 = arith.addf %104, %105 : vector<8x128xf32>
    %107 = arith.divf %102, %106 : vector<8x128xf32>
    %108 = arith.mulf %72, %107 : vector<8x128xf32>
    %109 = tpu.concatenate %9, %72 in 0 : vector<64x128xf32>, vector<8x128xf32> -> vector<72x128xf32>
    %cst_42 = arith.constant dense<0.000000e+00> : vector<72x8xf32>
    %110 = tpu.matmul %109, %72, %cst_42 {dimension_numbers = #tpu.dot_dimension_numbers<[1], [1], [0], [0], [0, 0, 1, 0], [], []>} : vector<72x128xf32>, vector<8x128xf32>, vector<72x8xf32> -> vector<72x8xf32>
    %111 = vector.extract_strided_slice %110 {offsets = [0, 0], sizes = [64, 8], strides = [1, 1]} : vector<72x8xf32> to vector<64x8xf32>
    %112 = vector.extract_strided_slice %110 {offsets = [64, 0], sizes = [8, 8], strides = [1, 1]} : vector<72x8xf32> to vector<8x8xf32>
    %cst_43 = arith.constant dense<0.000000e+00> : vector<64x8xf32>
    %113 = tpu.matmul %81, %112, %cst_43 {dimension_numbers = #tpu.dot_dimension_numbers<[1], [0], [0], [1], [0, 0, 1, 1], [], []>} : vector<64x8xf32>, vector<8x8xf32>, vector<64x8xf32> -> vector<64x8xf32>
    %cst_44 = arith.constant 2.000000e-08 : f32
    %114 = vector.broadcast %cst_44 : f32 to vector<64x8xf32>
    %115 = arith.addf %113, %114 : vector<64x8xf32>
    %116 = arith.divf %111, %115 : vector<64x8xf32>
    %117 = arith.mulf %81, %116 : vector<64x8xf32>
    %118 = tpu.concatenate %5, %99 in 1 : vector<64x128xf32>, vector<64x8xf32> -> vector<64x136xf32>
    %cst_45 = arith.constant dense<0.000000e+00> : vector<8x136xf32>
    %119 = tpu.matmul %99, %118, %cst_45 {dimension_numbers = #tpu.dot_dimension_numbers<[0], [0], [1], [1], [0, 1, 1, 1], [], []>} : vector<64x8xf32>, vector<64x136xf32>, vector<8x136xf32> -> vector<8x136xf32>
    %120 = vector.extract_strided_slice %119 {offsets = [0, 0], sizes = [8, 128], strides = [1, 1]} : vector<8x136xf32> to vector<8x128xf32>
    %121 = vector.extract_strided_slice %119 {offsets = [0, 128], sizes = [8, 8], strides = [1, 1]} : vector<8x136xf32> to vector<8x8xf32>
    %cst_46 = arith.constant dense<0.000000e+00> : vector<8x128xf32>
    %122 = tpu.matmul %121, %90, %cst_46 {dimension_numbers = #tpu.dot_dimension_numbers<[1], [0], [0], [1], [0, 0, 1, 1], [], []>} : vector<8x8xf32>, vector<8x128xf32>, vector<8x128xf32> -> vector<8x128xf32>
    %cst_47 = arith.constant 2.000000e-08 : f32
    %123 = vector.broadcast %cst_47 : f32 to vector<8x128xf32>
    %124 = arith.addf %122, %123 : vector<8x128xf32>
    %125 = arith.divf %120, %124 : vector<8x128xf32>
    %126 = arith.mulf %90, %125 : vector<8x128xf32>
    %127 = tpu.concatenate %5, %90 in 0 : vector<64x128xf32>, vector<8x128xf32> -> vector<72x128xf32>
    %cst_48 = arith.constant dense<0.000000e+00> : vector<72x8xf32>
    %128 = tpu.matmul %127, %90, %cst_48 {dimension_numbers = #tpu.dot_dimension_numbers<[1], [1], [0], [0], [0, 0, 1, 0], [], []>} : vector<72x128xf32>, vector<8x128xf32>, vector<72x8xf32> -> vector<72x8xf32>
    %129 = vector.extract_strided_slice %128 {offsets = [0, 0], sizes = [64, 8], strides = [1, 1]} : vector<72x8xf32> to vector<64x8xf32>
    %130 = vector.extract_strided_slice %128 {offsets = [64, 0], sizes = [8, 8], strides = [1, 1]} : vector<72x8xf32> to vector<8x8xf32>
    %cst_49 = arith.constant dense<0.000000e+00> : vector<64x8xf32>
    %131 = tpu.matmul %99, %130, %cst_49 {dimension_numbers = #tpu.dot_dimension_numbers<[1], [0], [0], [1], [0, 0, 1, 1], [], []>} : vector<64x8xf32>, vector<8x8xf32>, vector<64x8xf32> -> vector<64x8xf32>
    %cst_50 = arith.constant 2.000000e-08 : f32
    %132 = vector.broadcast %cst_50 : f32 to vector<64x8xf32>
    %133 = arith.addf %131, %132 : vector<64x8xf32>
    %134 = arith.divf %129, %133 : vector<64x8xf32>
    %135 = arith.mulf %99, %134 : vector<64x8xf32>
    %136 = tpu.concatenate %9, %117 in 1 : vector<64x128xf32>, vector<64x8xf32> -> vector<64x136xf32>
    %cst_51 = arith.constant dense<0.000000e+00> : vector<8x136xf32>
    %137 = tpu.matmul %117, %136, %cst_51 {dimension_numbers = #tpu.dot_dimension_numbers<[0], [0], [1], [1], [0, 1, 1, 1], [], []>} : vector<64x8xf32>, vector<64x136xf32>, vector<8x136xf32> -> vector<8x136xf32>
    %138 = vector.extract_strided_slice %137 {offsets = [0, 0], sizes = [8, 128], strides = [1, 1]} : vector<8x136xf32> to vector<8x128xf32>
    %139 = vector.extract_strided_slice %137 {offsets = [0, 128], sizes = [8, 8], strides = [1, 1]} : vector<8x136xf32> to vector<8x8xf32>
    %cst_52 = arith.constant dense<0.000000e+00> : vector<8x128xf32>
    %140 = tpu.matmul %139, %108, %cst_52 {dimension_numbers = #tpu.dot_dimension_numbers<[1], [0], [0], [1], [0, 0, 1, 1], [], []>} : vector<8x8xf32>, vector<8x128xf32>, vector<8x128xf32> -> vector<8x128xf32>
    %cst_53 = arith.constant 2.000000e-08 : f32
    %141 = vector.broadcast %cst_53 : f32 to vector<8x128xf32>
    %142 = arith.addf %140, %141 : vector<8x128xf32>
    %143 = arith.divf %138, %142 : vector<8x128xf32>
    %144 = arith.mulf %108, %143 : vector<8x128xf32>
    %145 = tpu.concatenate %9, %108 in 0 : vector<64x128xf32>, vector<8x128xf32> -> vector<72x128xf32>
    %cst_54 = arith.constant dense<0.000000e+00> : vector<72x8xf32>
    %146 = tpu.matmul %145, %108, %cst_54 {dimension_numbers = #tpu.dot_dimension_numbers<[1], [1], [0], [0], [0, 0, 1, 0], [], []>} : vector<72x128xf32>, vector<8x128xf32>, vector<72x8xf32> -> vector<72x8xf32>
    %147 = vector.extract_strided_slice %146 {offsets = [0, 0], sizes = [64, 8], strides = [1, 1]} : vector<72x8xf32> to vector<64x8xf32>
    %148 = vector.extract_strided_slice %146 {offsets = [64, 0], sizes = [8, 8], strides = [1, 1]} : vector<72x8xf32> to vector<8x8xf32>
    %cst_55 = arith.constant dense<0.000000e+00> : vector<64x8xf32>
    %149 = tpu.matmul %117, %148, %cst_55 {dimension_numbers = #tpu.dot_dimension_numbers<[1], [0], [0], [1], [0, 0, 1, 1], [], []>} : vector<64x8xf32>, vector<8x8xf32>, vector<64x8xf32> -> vector<64x8xf32>
    %cst_56 = arith.constant 2.000000e-08 : f32
    %150 = vector.broadcast %cst_56 : f32 to vector<64x8xf32>
    %151 = arith.addf %149, %150 : vector<64x8xf32>
    %152 = arith.divf %147, %151 : vector<64x8xf32>
    %153 = arith.mulf %117, %152 : vector<64x8xf32>
    %154 = tpu.concatenate %5, %135 in 1 : vector<64x128xf32>, vector<64x8xf32> -> vector<64x136xf32>
    %cst_57 = arith.constant dense<0.000000e+00> : vector<8x136xf32>
    %155 = tpu.matmul %135, %154, %cst_57 {dimension_numbers = #tpu.dot_dimension_numbers<[0], [0], [1], [1], [0, 1, 1, 1], [], []>} : vector<64x8xf32>, vector<64x136xf32>, vector<8x136xf32> -> vector<8x136xf32>
    %156 = vector.extract_strided_slice %155 {offsets = [0, 0], sizes = [8, 128], strides = [1, 1]} : vector<8x136xf32> to vector<8x128xf32>
    %157 = vector.extract_strided_slice %155 {offsets = [0, 128], sizes = [8, 8], strides = [1, 1]} : vector<8x136xf32> to vector<8x8xf32>
    %cst_58 = arith.constant dense<0.000000e+00> : vector<8x128xf32>
    %158 = tpu.matmul %157, %126, %cst_58 {dimension_numbers = #tpu.dot_dimension_numbers<[1], [0], [0], [1], [0, 0, 1, 1], [], []>} : vector<8x8xf32>, vector<8x128xf32>, vector<8x128xf32> -> vector<8x128xf32>
    %cst_59 = arith.constant 2.000000e-08 : f32
    %159 = vector.broadcast %cst_59 : f32 to vector<8x128xf32>
    %160 = arith.addf %158, %159 : vector<8x128xf32>
    %161 = arith.divf %156, %160 : vector<8x128xf32>
    %162 = arith.mulf %126, %161 : vector<8x128xf32>
    %163 = tpu.concatenate %5, %126 in 0 : vector<64x128xf32>, vector<8x128xf32> -> vector<72x128xf32>
    %cst_60 = arith.constant dense<0.000000e+00> : vector<72x8xf32>
    %164 = tpu.matmul %163, %126, %cst_60 {dimension_numbers = #tpu.dot_dimension_numbers<[1], [1], [0], [0], [0, 0, 1, 0], [], []>} : vector<72x128xf32>, vector<8x128xf32>, vector<72x8xf32> -> vector<72x8xf32>
    %165 = vector.extract_strided_slice %164 {offsets = [0, 0], sizes = [64, 8], strides = [1, 1]} : vector<72x8xf32> to vector<64x8xf32>
    %166 = vector.extract_strided_slice %164 {offsets = [64, 0], sizes = [8, 8], strides = [1, 1]} : vector<72x8xf32> to vector<8x8xf32>
    %cst_61 = arith.constant dense<0.000000e+00> : vector<64x8xf32>
    %167 = tpu.matmul %135, %166, %cst_61 {dimension_numbers = #tpu.dot_dimension_numbers<[1], [0], [0], [1], [0, 0, 1, 1], [], []>} : vector<64x8xf32>, vector<8x8xf32>, vector<64x8xf32> -> vector<64x8xf32>
    %cst_62 = arith.constant 2.000000e-08 : f32
    %168 = vector.broadcast %cst_62 : f32 to vector<64x8xf32>
    %169 = arith.addf %167, %168 : vector<64x8xf32>
    %170 = arith.divf %165, %169 : vector<64x8xf32>
    %171 = arith.mulf %135, %170 : vector<64x8xf32>
    %172 = tpu.concatenate %9, %153 in 1 : vector<64x128xf32>, vector<64x8xf32> -> vector<64x136xf32>
    %cst_63 = arith.constant dense<0.000000e+00> : vector<8x136xf32>
    %173 = tpu.matmul %153, %172, %cst_63 {dimension_numbers = #tpu.dot_dimension_numbers<[0], [0], [1], [1], [0, 1, 1, 1], [], []>} : vector<64x8xf32>, vector<64x136xf32>, vector<8x136xf32> -> vector<8x136xf32>
    %174 = vector.extract_strided_slice %173 {offsets = [0, 0], sizes = [8, 128], strides = [1, 1]} : vector<8x136xf32> to vector<8x128xf32>
    %175 = vector.extract_strided_slice %173 {offsets = [0, 128], sizes = [8, 8], strides = [1, 1]} : vector<8x136xf32> to vector<8x8xf32>
    %cst_64 = arith.constant dense<0.000000e+00> : vector<8x128xf32>
    %176 = tpu.matmul %175, %144, %cst_64 {dimension_numbers = #tpu.dot_dimension_numbers<[1], [0], [0], [1], [0, 0, 1, 1], [], []>} : vector<8x8xf32>, vector<8x128xf32>, vector<8x128xf32> -> vector<8x128xf32>
    %cst_65 = arith.constant 2.000000e-08 : f32
    %177 = vector.broadcast %cst_65 : f32 to vector<8x128xf32>
    %178 = arith.addf %176, %177 : vector<8x128xf32>
    %179 = arith.divf %174, %178 : vector<8x128xf32>
    %180 = arith.mulf %144, %179 : vector<8x128xf32>
    %181 = tpu.concatenate %9, %144 in 0 : vector<64x128xf32>, vector<8x128xf32> -> vector<72x128xf32>
    %cst_66 = arith.constant dense<0.000000e+00> : vector<72x8xf32>
    %182 = tpu.matmul %181, %144, %cst_66 {dimension_numbers = #tpu.dot_dimension_numbers<[1], [1], [0], [0], [0, 0, 1, 0], [], []>} : vector<72x128xf32>, vector<8x128xf32>, vector<72x8xf32> -> vector<72x8xf32>
    %183 = vector.extract_strided_slice %182 {offsets = [0, 0], sizes = [64, 8], strides = [1, 1]} : vector<72x8xf32> to vector<64x8xf32>
    %184 = vector.extract_strided_slice %182 {offsets = [64, 0], sizes = [8, 8], strides = [1, 1]} : vector<72x8xf32> to vector<8x8xf32>
    %cst_67 = arith.constant dense<0.000000e+00> : vector<64x8xf32>
    %185 = tpu.matmul %153, %184, %cst_67 {dimension_numbers = #tpu.dot_dimension_numbers<[1], [0], [0], [1], [0, 0, 1, 1], [], []>} : vector<64x8xf32>, vector<8x8xf32>, vector<64x8xf32> -> vector<64x8xf32>
    %cst_68 = arith.constant 2.000000e-08 : f32
    %186 = vector.broadcast %cst_68 : f32 to vector<64x8xf32>
    %187 = arith.addf %185, %186 : vector<64x8xf32>
    %188 = arith.divf %183, %187 : vector<64x8xf32>
    %189 = arith.mulf %153, %188 : vector<64x8xf32>
    %190 = tpu.concatenate %5, %171 in 1 : vector<64x128xf32>, vector<64x8xf32> -> vector<64x136xf32>
    %cst_69 = arith.constant dense<0.000000e+00> : vector<8x136xf32>
    %191 = tpu.matmul %171, %190, %cst_69 {dimension_numbers = #tpu.dot_dimension_numbers<[0], [0], [1], [1], [0, 1, 1, 1], [], []>} : vector<64x8xf32>, vector<64x136xf32>, vector<8x136xf32> -> vector<8x136xf32>
    %192 = vector.extract_strided_slice %191 {offsets = [0, 0], sizes = [8, 128], strides = [1, 1]} : vector<8x136xf32> to vector<8x128xf32>
    %193 = vector.extract_strided_slice %191 {offsets = [0, 128], sizes = [8, 8], strides = [1, 1]} : vector<8x136xf32> to vector<8x8xf32>
    %cst_70 = arith.constant dense<0.000000e+00> : vector<8x128xf32>
    %194 = tpu.matmul %193, %162, %cst_70 {dimension_numbers = #tpu.dot_dimension_numbers<[1], [0], [0], [1], [0, 0, 1, 1], [], []>} : vector<8x8xf32>, vector<8x128xf32>, vector<8x128xf32> -> vector<8x128xf32>
    %cst_71 = arith.constant 2.000000e-08 : f32
    %195 = vector.broadcast %cst_71 : f32 to vector<8x128xf32>
    %196 = arith.addf %194, %195 : vector<8x128xf32>
    %197 = arith.divf %192, %196 : vector<8x128xf32>
    %198 = arith.mulf %162, %197 : vector<8x128xf32>
    %199 = tpu.concatenate %5, %162 in 0 : vector<64x128xf32>, vector<8x128xf32> -> vector<72x128xf32>
    %cst_72 = arith.constant dense<0.000000e+00> : vector<72x8xf32>
    %200 = tpu.matmul %199, %162, %cst_72 {dimension_numbers = #tpu.dot_dimension_numbers<[1], [1], [0], [0], [0, 0, 1, 0], [], []>} : vector<72x128xf32>, vector<8x128xf32>, vector<72x8xf32> -> vector<72x8xf32>
    %201 = vector.extract_strided_slice %200 {offsets = [0, 0], sizes = [64, 8], strides = [1, 1]} : vector<72x8xf32> to vector<64x8xf32>
    %202 = vector.extract_strided_slice %200 {offsets = [64, 0], sizes = [8, 8], strides = [1, 1]} : vector<72x8xf32> to vector<8x8xf32>
    %cst_73 = arith.constant dense<0.000000e+00> : vector<64x8xf32>
    %203 = tpu.matmul %171, %202, %cst_73 {dimension_numbers = #tpu.dot_dimension_numbers<[1], [0], [0], [1], [0, 0, 1, 1], [], []>} : vector<64x8xf32>, vector<8x8xf32>, vector<64x8xf32> -> vector<64x8xf32>
    %cst_74 = arith.constant 2.000000e-08 : f32
    %204 = vector.broadcast %cst_74 : f32 to vector<64x8xf32>
    %205 = arith.addf %203, %204 : vector<64x8xf32>
    %206 = arith.divf %201, %205 : vector<64x8xf32>
    %207 = arith.mulf %171, %206 : vector<64x8xf32>
    %208 = tpu.concatenate %9, %189 in 1 : vector<64x128xf32>, vector<64x8xf32> -> vector<64x136xf32>
    %cst_75 = arith.constant dense<0.000000e+00> : vector<8x136xf32>
    %209 = tpu.matmul %189, %208, %cst_75 {dimension_numbers = #tpu.dot_dimension_numbers<[0], [0], [1], [1], [0, 1, 1, 1], [], []>} : vector<64x8xf32>, vector<64x136xf32>, vector<8x136xf32> -> vector<8x136xf32>
    %210 = vector.extract_strided_slice %209 {offsets = [0, 0], sizes = [8, 128], strides = [1, 1]} : vector<8x136xf32> to vector<8x128xf32>
    %211 = vector.extract_strided_slice %209 {offsets = [0, 128], sizes = [8, 8], strides = [1, 1]} : vector<8x136xf32> to vector<8x8xf32>
    %cst_76 = arith.constant dense<0.000000e+00> : vector<8x128xf32>
    %212 = tpu.matmul %211, %180, %cst_76 {dimension_numbers = #tpu.dot_dimension_numbers<[1], [0], [0], [1], [0, 0, 1, 1], [], []>} : vector<8x8xf32>, vector<8x128xf32>, vector<8x128xf32> -> vector<8x128xf32>
    %cst_77 = arith.constant 2.000000e-08 : f32
    %213 = vector.broadcast %cst_77 : f32 to vector<8x128xf32>
    %214 = arith.addf %212, %213 : vector<8x128xf32>
    %215 = arith.divf %210, %214 : vector<8x128xf32>
    %216 = arith.mulf %180, %215 : vector<8x128xf32>
    %217 = tpu.concatenate %9, %180 in 0 : vector<64x128xf32>, vector<8x128xf32> -> vector<72x128xf32>
    %cst_78 = arith.constant dense<0.000000e+00> : vector<72x8xf32>
    %218 = tpu.matmul %217, %180, %cst_78 {dimension_numbers = #tpu.dot_dimension_numbers<[1], [1], [0], [0], [0, 0, 1, 0], [], []>} : vector<72x128xf32>, vector<8x128xf32>, vector<72x8xf32> -> vector<72x8xf32>
    %219 = vector.extract_strided_slice %218 {offsets = [0, 0], sizes = [64, 8], strides = [1, 1]} : vector<72x8xf32> to vector<64x8xf32>
    %220 = vector.extract_strided_slice %218 {offsets = [64, 0], sizes = [8, 8], strides = [1, 1]} : vector<72x8xf32> to vector<8x8xf32>
    %cst_79 = arith.constant dense<0.000000e+00> : vector<64x8xf32>
    %221 = tpu.matmul %189, %220, %cst_79 {dimension_numbers = #tpu.dot_dimension_numbers<[1], [0], [0], [1], [0, 0, 1, 1], [], []>} : vector<64x8xf32>, vector<8x8xf32>, vector<64x8xf32> -> vector<64x8xf32>
    %cst_80 = arith.constant 2.000000e-08 : f32
    %222 = vector.broadcast %cst_80 : f32 to vector<64x8xf32>
    %223 = arith.addf %221, %222 : vector<64x8xf32>
    %224 = arith.divf %219, %223 : vector<64x8xf32>
    %225 = arith.mulf %189, %224 : vector<64x8xf32>
    %cst_81 = arith.constant dense<0.000000e+00> : vector<64x128xf32>
    %226 = tpu.matmul %207, %198, %cst_81 {dimension_numbers = #tpu.dot_dimension_numbers<[1], [0], [0], [1], [0, 0, 1, 1], [], []>} : vector<64x8xf32>, vector<8x128xf32>, vector<64x128xf32> -> vector<64x128xf32>
    %c0_82 = arith.constant 0 : index
    %c0_83 = arith.constant 0 : index
    %c0_84 = arith.constant 0 : index
    %227 = vector.load %arg4[%c0_82, %c0_83, %c0_84] : memref<2x64x128xf32, #tpu.memory_space<vmem>>, vector<1x64x128xf32>
    %228 = vector.shape_cast %227 : vector<1x64x128xf32> to vector<64x128xf32>
    %229 = vector.shape_cast %226 : vector<64x128xf32> to vector<1x64x128xf32>
    tpu.vector_store %arg4[%c0_82, %c0_83, %c0_84], %229 {strides = array<i32>} : memref<2x64x128xf32, #tpu.memory_space<vmem>>, vector<1x64x128xf32>,
    %cst_85 = arith.constant dense<0.000000e+00> : vector<64x128xf32>
    %230 = tpu.matmul %225, %216, %cst_85 {dimension_numbers = #tpu.dot_dimension_numbers<[1], [0], [0], [1], [0, 0, 1, 1], [], []>} : vector<64x8xf32>, vector<8x128xf32>, vector<64x128xf32> -> vector<64x128xf32>
    %c1_86 = arith.constant 1 : index
    %c0_87 = arith.constant 0 : index
    %c0_88 = arith.constant 0 : index
    %231 = vector.load %arg4[%c1_86, %c0_87, %c0_88] : memref<2x64x128xf32, #tpu.memory_space<vmem>>, vector<1x64x128xf32>
    %232 = vector.shape_cast %231 : vector<1x64x128xf32> to vector<64x128xf32>
    %233 = vector.shape_cast %230 : vector<64x128xf32> to vector<1x64x128xf32>
    tpu.vector_store %arg4[%c1_86, %c0_87, %c0_88], %233 {strides = array<i32>} : memref<2x64x128xf32, #tpu.memory_space<vmem>>, vector<1x64x128xf32>,
    return
  }
  func.func @transform_0(%arg0: i32) -> (i32, i32, i32) {
    %c0_i32 = arith.constant 0 : i32
    %c0_i32_0 = arith.constant 0 : i32
    %c0_i32_1 = arith.constant 0 : i32
    return %arg0, %c0_i32, %c0_i32_0 : i32, i32, i32
  }
  func.func @transform_1(%arg0: i32) -> (i32, i32) {
    %c0_i32 = arith.constant 0 : i32
    %c0_i32_0 = arith.constant 0 : i32
    %c0_i32_1 = arith.constant 0 : i32
    return %c0_i32, %c0_i32_0 : i32, i32
  }
  func.func @transform_2(%arg0: i32) -> (i32, i32) {
    %c0_i32 = arith.constant 0 : i32
    %c0_i32_0 = arith.constant 0 : i32
    %c0_i32_1 = arith.constant 0 : i32
    return %c0_i32, %c0_i32_0 : i32, i32
  }
  func.func @transform_3(%arg0: i32) -> (i32, i32, i32) {
    %c0_i32 = arith.constant 0 : i32
    %c0_i32_0 = arith.constant 0 : i32
    %c0_i32_1 = arith.constant 0 : i32
    return %arg0, %c0_i32, %c0_i32_0 : i32, i32, i32
  }
}

</mosaic_0001>

<llo_original>
// kernel: tpu_custom_call.1
$region0: #{tpu_custom_call.1}
  #allocation0 [shape = 'u32[]', space=smem, size = 0x4, offset = 0x4, fixed_abs, tag = 'smem constant byte address 0x4 - core index']
  #allocation1 [shape = 'u32[72,128]{1,0:T(1,128)}', space=vmem, size = 0x9000, scoped, tag = 'internal scratch']
  %s0 = inlined_call_operand.hbm [shape: f32[2,64,128], index: 0, kind: input, shape index: {}]
  %s1 = inlined_call_operand.vmem [shape: f32[64,8], index: 1, kind: input, shape index: {}]
  %s2 = inlined_call_operand.vmem [shape: f32[8,128], index: 2, kind: input, shape index: {}]
  %s3 = inlined_call_operand.hbm [shape: f32[2,64,128], index: 3, kind: output, shape index: {}]
  %s4 = sld [smem:[#allocation0]]
  $region26: #{tpu_custom_call.1} parent=0
    _
  %s6 = ssub.s32 1, %s4
  %s7 = scalar_select 0, %s6, %s4
  $region1: #{tpu_custom_call.1} parent=0
    #allocation2 [shape = 'u8[65536]{0}', space=vmem, size = 0x10000, scoped, tag = 'input window, operand 0, single buffered']
    #allocation3 [shape = 's32[1]{0}', space=sflag, size = 0x4, scoped, tag = 'scoped memory for tpu_custom_call.1']
    #allocation4 [shape = 's32[1]{0}', space=sflag, size = 0x4, scoped, tag = 'scoped memory for tpu_custom_call.1']
    #allocation5 [shape = 'u8[65536]{0}', space=vmem, size = 0x10000, scoped, tag = 'output window, operand 0, single buffered']
    %8 = vsyncpa [#allocation3], 0
    %9 = vsyncpa [#allocation4], 0
    // Predicated region
    $region2: #{tpu_custom_call.1} parent=1 // pred_check
      _
    $region3: #{tpu_custom_call.1} parent=1 // pred_check_branch
      %11 = sbr.rel (0) target = $region5
    $region4: #{tpu_custom_call.1} parent=1 // pred_region
      %13 = vsyncadd [#allocation3], 0
      %s14 = sshll.u32 %s0, 4
      %s15 = int_to_ptr.hbm [resolvable:$true] %s14
      %s16 = sshll.u32 [#allocation2], 4
      %s17 = int_to_ptr.vmem [resolvable:$true] %s16
      %22 = dma.hbm_to_vmem [thread:$0]  %s15, 2048, %s17, [#allocation3], 128, 128, 8
    $region5: #{tpu_custom_call.1} parent=1 // pred_fallthru
      _
    // Predicated region
    $region6: #{tpu_custom_call.1} parent=1 // pred_check
      _
    $region7: #{tpu_custom_call.1} parent=1 // pred_check_branch
      %24 = sbr.rel (0) target = $region9
    $region8: #{tpu_custom_call.1} parent=1 // pred_region
      _
    $region9: #{tpu_custom_call.1} parent=1 // pred_fallthru
      _
    // Predicated region
    $region10: #{tpu_custom_call.1} parent=1 // pred_check
      _
    $region11: #{tpu_custom_call.1} parent=1 // pred_check_branch
      %26 = sbr.rel (0) target = $region13
    $region12: #{tpu_custom_call.1} parent=1 // pred_region
      _
    $region13: #{tpu_custom_call.1} parent=1 // pred_fallthru
      _
    // Predicated region
    $region14: #{tpu_custom_call.1} parent=1 // pred_check
      _
    $region15: #{tpu_custom_call.1} parent=1 // pred_check_branch
      %28 = sbr.rel (0) target = $region17
    $region16: #{tpu_custom_call.1} parent=1 // pred_region
      %30 = dma.done [#allocation3], 2048
    $region17: #{tpu_custom_call.1} parent=1 // pred_fallthru
      _
    %v31 = vld [vmem:[%s1] sm:$0xff]
    %v32 = vld [vmem:[%s1 + $0x8] sm:$0xff]
    %v33 = vld [vmem:[%s1 + $0x10] sm:$0xff]
    %v34 = vld [vmem:[%s1 + $0x18] sm:$0xff]
    %v35 = vld [vmem:[%s1 + $0x20] sm:$0xff]
    %v36 = vld [vmem:[%s1 + $0x28] sm:$0xff]
    %v37 = vld [vmem:[%s1 + $0x30] sm:$0xff]
    %v38 = vld [vmem:[%s1 + $0x38] sm:$0xff]
    %v39 = vld [vmem:[%s2] sm:$0xff]
    %v40 = vld [vmem:[#allocation2] sm:$0xff]
    %v41 = vld [vmem:[#allocation2 + $0x8] sm:$0xff]
    %v42 = vld [vmem:[#allocation2 + $0x10] sm:$0xff]
    %v43 = vld [vmem:[#allocation2 + $0x18] sm:$0xff]
    %v44 = vld [vmem:[#allocation2 + $0x20] sm:$0xff]
    %v45 = vld [vmem:[#allocation2 + $0x28] sm:$0xff]
    %v46 = vld [vmem:[#allocation2 + $0x30] sm:$0xff]
    %v47 = vld [vmem:[#allocation2 + $0x38] sm:$0xff]
    %v48 = vmax.f32 %v40, 0.0
    %v49 = vmax.f32 %v41, 0.0
    %v50 = vmax.f32 %v42, 0.0
    %v51 = vmax.f32 %v43, 0.0
    %v52 = vmax.f32 %v44, 0.0
    %v53 = vmax.f32 %v45, 0.0
    %v54 = vmax.f32 %v46, 0.0
    %v55 = vmax.f32 %v47, 0.0
    %s56 = scalar_lea.vmem [#allocation2], 64
    %v57 = vld [vmem:[%s56] sm:$0xff]
    %v58 = vld [vmem:[%s56 + $0x8] sm:$0xff]
    %v59 = vld [vmem:[%s56 + $0x10] sm:$0xff]
    %v60 = vld [vmem:[%s56 + $0x18] sm:$0xff]
    %v61 = vld [vmem:[%s56 + $0x20] sm:$0xff]
    %v62 = vld [vmem:[%s56 + $0x28] sm:$0xff]
    %v63 = vld [vmem:[%s56 + $0x30] sm:$0xff]
    %v64 = vld [vmem:[%s56 + $0x38] sm:$0xff]
    %v65 = vmax.f32 %v57, 0.0
    %v66 = vmax.f32 %v58, 0.0
    %v67 = vmax.f32 %v59, 0.0
    %v68 = vmax.f32 %v60, 0.0
    %v69 = vmax.f32 %v61, 0.0
    %v70 = vmax.f32 %v62, 0.0
    %v71 = vmax.f32 %v63, 0.0
    %v72 = vmax.f32 %v64, 0.0
    %73 = vxpose.xlu0.b32.start [1/16] %v31, 128
    %74 = vxpose.xlu0.b32.cont [2/16] %v32, 128
    %75 = vxpose.xlu0.b32.cont [3/16] %v33, 128
    %76 = vxpose.xlu0.b32.cont [4/16] %v34, 128
    %77 = vxpose.xlu0.b32.cont [5/16] %v35, 128
    %78 = vxpose.xlu0.b32.cont [6/16] %v36, 128
    %79 = vxpose.xlu0.b32.cont [7/16] %v37, 128
    %80 = vxpose.xlu0.b32.cont [8/16] %v38, 128
    %81 = vxpose.xlu0.b32.cont [9/16] 0.0, 128
    %82 = vxpose.xlu0.b32.cont [10/16] 0.0, 128
    %83 = vxpose.xlu0.b32.cont [11/16] 0.0, 128
    %84 = vxpose.xlu0.b32.cont [12/16] 0.0, 128
    %85 = vxpose.xlu0.b32.cont [13/16] 0.0, 128
    %86 = vxpose.xlu0.b32.cont [14/16] 0.0, 128
    %87 = vxpose.xlu0.b32.cont [15/16] 0.0, 128
    %88 = vxpose.xlu0.b32.end [16/16] 0.0, 128
    %v89 = vpop.trf.xlu0
    %v90 = vpop.trf.xlu0
    %v91 = vpop.trf.xlu0
    %v92 = vpop.trf.xlu0
    %v93 = vpop.trf.xlu0
    %v94 = vpop.trf.xlu0
    %v95 = vpop.trf.xlu0
    %v96 = vpop.trf.xlu0
    %v97 = vpop.trf.xlu0
    %v98 = vpop.trf.xlu0
    %v99 = vpop.trf.xlu0
    %v100 = vpop.trf.xlu0
    %v101 = vpop.trf.xlu0
    %v102 = vpop.trf.xlu0
    %v103 = vpop.trf.xlu0
    %v104 = vpop.trf.xlu0
    %vm105 = vcmask 523264
    %v107 = vsel %vm105, %v89, 0
    %109 = vmatpush.msra.mxu0 0.0
    %110 = vmatpush.msra.mxu0 0.0
    %111 = vmatpush.msra.mxu0 0.0
    %112 = vmatpush.msra.mxu0 0.0
    %113 = vmatpush.msra.mxu0 0.0
    %114 = vmatpush.msra.mxu0 0.0
    %115 = vmatpush.msra.mxu0 0.0
    %116 = vmatpush.msra.mxu0 0.0
    %117 = vmatpush.msra.mxu0 %v55
    %118 = vmatpush.msra.mxu0 %v54
    %119 = vmatpush.msra.mxu0 %v53
    %120 = vmatpush.msra.mxu0 %v52
    %121 = vmatpush.msra.mxu0 %v51
    %122 = vmatpush.msra.mxu0 %v50
    %123 = vmatpush.msra.mxu0 %v49
    %124 = vmatpush.msra.mxu0 %v48
    %125 = vmatmul.f32.gmra.mxu0 %v107
    %v126 = vpop.f32.mrf.mxu0
    %v127 = vadd.f32 0.0, %v126
    %128 = vdwg.mxu0
    %129 = vmatpush.msra.mxu0 0.0
    %130 = vmatpush.msra.mxu0 0.0
    %131 = vmatpush.msra.mxu0 0.0
    %132 = vmatpush.msra.mxu0 0.0
    %133 = vmatpush.msra.mxu0 0.0
    %134 = vmatpush.msra.mxu0 0.0
    %135 = vmatpush.msra.mxu0 0.0
    %136 = vmatpush.msra.mxu0 0.0
    %137 = vmatpush.msra.mxu0 %v38
    %138 = vmatpush.msra.mxu0 %v37
    %139 = vmatpush.msra.mxu0 %v36
    %140 = vmatpush.msra.mxu0 %v35
    %141 = vmatpush.msra.mxu0 %v34
    %142 = vmatpush.msra.mxu0 %v33
    %143 = vmatpush.msra.mxu0 %v32
    %144 = vmatpush.msra.mxu0 %v31
    %145 = vmatmul.f32.gmra.mxu0 %v107
    %v146 = vpop.f32.mrf.mxu0
    %v147 = vadd.f32 0.0, %v146
    %148 = vdwg.mxu0
    %vm149 = vcmask 64512
    %v151 = vsel %vm149, %v147, 0
    %153 = vmatpush.msra.mxu0 0.0
    %154 = vmatpush.msra.mxu0 0.0
    %155 = vmatpush.msra.mxu0 0.0
    %156 = vmatpush.msra.mxu0 0.0
    %157 = vmatpush.msra.mxu0 0.0
    %158 = vmatpush.msra.mxu0 0.0
    %159 = vmatpush.msra.mxu0 0.0
    %160 = vmatpush.msra.mxu0 0.0
    %161 = vmatpush.msra.mxu0 0.0
    %162 = vmatpush.msra.mxu0 0.0
    %163 = vmatpush.msra.mxu0 0.0
    %164 = vmatpush.msra.mxu0 0.0
    %165 = vmatpush.msra.mxu0 0.0
    %166 = vmatpush.msra.mxu0 0.0
    %167 = vmatpush.msra.mxu0 0.0
    %168 = vmatpush.msra.mxu0 %v39
    %169 = vmatmul.f32.gmra.mxu0 %v151
    %v170 = vpop.f32.mrf.mxu0
    %v171 = vadd.f32 2e-08, %v170
    %172 = vdwg.mxu0
    %v173 = vrcp.pop %v171
    %v174 = vmul.f32 %v171, %v173
    %v175 = vsub.f32 1.0, %v174
    %v176 = vmul.f32 %v173, %v175
    %v177 = vadd.f32 %v173, %v176
    %vm178 = vweird.f32 %v171
    %vm179 = vweird.f32 %v173
    %vm180 = vmor %vm178, %vm179
    %v181 = vsel %vm180, %v173, %v177
    %v182 = vand.u32 2147483647, %v171
    %vm183 = vcmp.eq.f32.partialorder %v182, 8.507059e+37
    %v184 = vand.u32 %v171, 2147483648
    %v185 = vor.u32 1.1754944e-38, %v184
    %v186 = vsel %vm183, %v185, %v181
    %v187 = vmul.f32 %v127, %v186
    %v188 = vmul.f32 %v39, %v187
    %189 = vmatpush.xpose.msra.mxu0 0.0
    %190 = vmatpush.xpose.msra.mxu0 0.0
    %191 = vmatpush.xpose.msra.mxu0 0.0
    %192 = vmatpush.xpose.msra.mxu0 0.0
    %193 = vmatpush.xpose.msra.mxu0 0.0
    %194 = vmatpush.xpose.msra.mxu0 0.0
    %195 = vmatpush.xpose.msra.mxu0 0.0
    %196 = vmatpush.xpose.msra.mxu0 0.0
    %197 = vmatpush.xpose.msra.mxu0 0.0
    %198 = vmatpush.xpose.msra.mxu0 0.0
    %199 = vmatpush.xpose.msra.mxu0 0.0
    %200 = vmatpush.xpose.msra.mxu0 0.0
    %201 = vmatpush.xpose.msra.mxu0 0.0
    %202 = vmatpush.xpose.msra.mxu0 0.0
    %203 = vmatpush.xpose.msra.mxu0 0.0
    %204 = vmatpush.xpose.msra.mxu0 %v39
    %205 = vmatmul.f32.gmra.mxu0 %v48
    %v206 = vpop.f32.mrf.mxu0
    %v207 = vadd.f32 0.0, %v206
    %208 = vmatmul.f32.gmra.mxu0 %v49
    %v209 = vpop.f32.mrf.mxu0
    %v210 = vadd.f32 0.0, %v209
    %211 = vmatmul.f32.gmra.mxu0 %v50
    %v212 = vpop.f32.mrf.mxu0
    %v213 = vadd.f32 0.0, %v212
    %214 = vmatmul.f32.gmra.mxu0 %v51
    %v215 = vpop.f32.mrf.mxu0
    %v216 = vadd.f32 0.0, %v215
    %217 = vmatmul.f32.gmra.mxu0 %v52
    %v218 = vpop.f32.mrf.mxu0
    %v219 = vadd.f32 0.0, %v218
    %220 = vmatmul.f32.gmra.mxu0 %v53
    %v221 = vpop.f32.mrf.mxu0
    %v222 = vadd.f32 0.0, %v221
    %223 = vmatmul.f32.gmra.mxu0 %v54
    %v224 = vpop.f32.mrf.mxu0
    %v225 = vadd.f32 0.0, %v224
    %226 = vmatmul.f32.gmra.mxu0 %v55
    %v227 = vpop.f32.mrf.mxu0
    %v228 = vadd.f32 0.0, %v227
    %229 = vmatmul.f32.gmra.mxu0 %v39
    %v230 = vpop.f32.mrf.mxu0
    %v231 = vadd.f32 0.0, %v230
    %232 = vdwg.mxu0
    %v234 = vsel %vm149, %v31, 0
    %v237 = vsel %vm149, %v32, 0
    %v240 = vsel %vm149, %v33, 0
    %v243 = vsel %vm149, %v34, 0
    %v246 = vsel %vm149, %v35, 0
    %v249 = vsel %vm149, %v36, 0
    %v252 = vsel %vm149, %v37, 0
    %v255 = vsel %vm149, %v38, 0
    %257 = vmatpush.msra.mxu0 0.0
    %258 = vmatpush.msra.mxu0 0.0
    %259 = vmatpush.msra.mxu0 0.0
    %260 = vmatpush.msra.mxu0 0.0
    %261 = vmatpush.msra.mxu0 0.0
    %262 = vmatpush.msra.mxu0 0.0
    %263 = vmatpush.msra.mxu0 0.0
    %264 = vmatpush.msra.mxu0 0.0
    %265 = vmatpush.msra.mxu0 0.0
    %266 = vmatpush.msra.mxu0 0.0
    %267 = vmatpush.msra.mxu0 0.0
    %268 = vmatpush.msra.mxu0 0.0
    %269 = vmatpush.msra.mxu0 0.0
    %270 = vmatpush.msra.mxu0 0.0
    %271 = vmatpush.msra.mxu0 0.0
    %272 = vmatpush.msra.mxu0 %v231
    %273 = vmatmul.f32.gmra.mxu0 %v234
    %v274 = vpop.f32.mrf.mxu0
    %v275 = vadd.f32 2e-08, %v274
    %276 = vmatmul.f32.gmra.mxu0 %v237
    %v277 = vpop.f32.mrf.mxu0
    %v278 = vadd.f32 2e-08, %v277
    %279 = vmatmul.f32.gmra.mxu0 %v240
    %v280 = vpop.f32.mrf.mxu0
    %v281 = vadd.f32 2e-08, %v280
    %282 = vmatmul.f32.gmra.mxu0 %v243
    %v283 = vpop.f32.mrf.mxu0
    %v284 = vadd.f32 2e-08, %v283
    %285 = vmatmul.f32.gmra.mxu0 %v246
    %v286 = vpop.f32.mrf.mxu0
    %v287 = vadd.f32 2e-08, %v286
    %288 = vmatmul.f32.gmra.mxu0 %v249
    %v289 = vpop.f32.mrf.mxu0
    %v290 = vadd.f32 2e-08, %v289
    %291 = vmatmul.f32.gmra.mxu0 %v252
    %v292 = vpop.f32.mrf.mxu0
    %v293 = vadd.f32 2e-08, %v292
    %294 = vmatmul.f32.gmra.mxu0 %v255
    %v295 = vpop.f32.mrf.mxu0
    %v296 = vadd.f32 2e-08, %v295
    %297 = vdwg.mxu0
    %v298 = vrcp.pop %v275
    %v299 = vmul.f32 %v275, %v298
    %v300 = vsub.f32 1.0, %v299
    %v301 = vmul.f32 %v298, %v300
    %v302 = vadd.f32 %v298, %v301
    %vm303 = vweird.f32 %v275
    %vm304 = vweird.f32 %v298
    %vm305 = vmor %vm303, %vm304
    %v306 = vsel %vm305, %v298, %v302
    %v307 = vand.u32 2147483647, %v275
    %vm308 = vcmp.eq.f32.partialorder %v307, 8.507059e+37
    %v309 = vand.u32 %v275, 2147483648
    %v310 = vor.u32 1.1754944e-38, %v309
    %v311 = vsel %vm308, %v310, %v306
    %v312 = vmul.f32 %v207, %v311
    %v313 = vrcp.pop %v278
    %v314 = vmul.f32 %v278, %v313
    %v315 = vsub.f32 1.0, %v314
    %v316 = vmul.f32 %v313, %v315
    %v317 = vadd.f32 %v313, %v316
    %vm318 = vweird.f32 %v278
    %vm319 = vweird.f32 %v313
    %vm320 = vmor %vm318, %vm319
    %v321 = vsel %vm320, %v313, %v317
    %v322 = vand.u32 2147483647, %v278
    %vm323 = vcmp.eq.f32.partialorder %v322, 8.507059e+37
    %v324 = vand.u32 %v278, 2147483648
    %v325 = vor.u32 1.1754944e-38, %v324
    %v326 = vsel %vm323, %v325, %v321
    %v327 = vmul.f32 %v210, %v326
    %v328 = vrcp.pop %v281
    %v329 = vmul.f32 %v281, %v328
    %v330 = vsub.f32 1.0, %v329
    %v331 = vmul.f32 %v328, %v330
    %v332 = vadd.f32 %v328, %v331
    %vm333 = vweird.f32 %v281
    %vm334 = vweird.f32 %v328
    %vm335 = vmor %vm333, %vm334
    %v336 = vsel %vm335, %v328, %v332
    %v337 = vand.u32 2147483647, %v281
    %vm338 = vcmp.eq.f32.partialorder %v337, 8.507059e+37
    %v339 = vand.u32 %v281, 2147483648
    %v340 = vor.u32 1.1754944e-38, %v339
    %v341 = vsel %vm338, %v340, %v336
    %v342 = vmul.f32 %v213, %v341
    %v343 = vrcp.pop %v284
    %v344 = vmul.f32 %v284, %v343
    %v345 = vsub.f32 1.0, %v344
    %v346 = vmul.f32 %v343, %v345
    %v347 = vadd.f32 %v343, %v346
    %vm348 = vweird.f32 %v284
    %vm349 = vweird.f32 %v343
    %vm350 = vmor %vm348, %vm349
    %v351 = vsel %vm350, %v343, %v347
    %v352 = vand.u32 2147483647, %v284
    %vm353 = vcmp.eq.f32.partialorder %v352, 8.507059e+37
    %v354 = vand.u32 %v284, 2147483648
    %v355 = vor.u32 1.1754944e-38, %v354
    %v356 = vsel %vm353, %v355, %v351
    %v357 = vmul.f32 %v216, %v356
    %v358 = vrcp.pop %v287
    %v359 = vmul.f32 %v287, %v358
    %v360 = vsub.f32 1.0, %v359
    %v361 = vmul.f32 %v358, %v360
    %v362 = vadd.f32 %v358, %v361
    %vm363 = vweird.f32 %v287
    %vm364 = vweird.f32 %v358
    %vm365 = vmor %vm363, %vm364
    %v366 = vsel %vm365, %v358, %v362
    %v367 = vand.u32 2147483647, %v287
    %vm368 = vcmp.eq.f32.partialorder %v367, 8.507059e+37
    %v369 = vand.u32 %v287, 2147483648
    %v370 = vor.u32 1.1754944e-38, %v369
    %v371 = vsel %vm368, %v370, %v366
    %v372 = vmul.f32 %v219, %v371
    %v373 = vrcp.pop %v290
    %v374 = vmul.f32 %v290, %v373
    %v375 = vsub.f32 1.0, %v374
    %v376 = vmul.f32 %v373, %v375
    %v377 = vadd.f32 %v373, %v376
    %vm378 = vweird.f32 %v290
    %vm379 = vweird.f32 %v373
    %vm380 = vmor %vm378, %vm379
    %v381 = vsel %vm380, %v373, %v377
    %v382 = vand.u32 2147483647, %v290
    %vm383 = vcmp.eq.f32.partialorder %v382, 8.507059e+37
    %v384 = vand.u32 %v290, 2147483648
    %v385 = vor.u32 1.1754944e-38, %v384
    %v386 = vsel %vm383, %v385, %v381
    %v387 = vmul.f32 %v222, %v386
    %v388 = vrcp.pop %v293
    %v389 = vmul.f32 %v293, %v388
    %v390 = vsub.f32 1.0, %v389
    %v391 = vmul.f32 %v388, %v390
    %v392 = vadd.f32 %v388, %v391
    %vm393 = vweird.f32 %v293
    %vm394 = vweird.f32 %v388
    %vm395 = vmor %vm393, %vm394
    %v396 = vsel %vm395, %v388, %v392
    %v397 = vand.u32 2147483647, %v293
    %vm398 = vcmp.eq.f32.partialorder %v397, 8.507059e+37
    %v399 = vand.u32 %v293, 2147483648
    %v400 = vor.u32 1.1754944e-38, %v399
    %v401 = vsel %vm398, %v400, %v396
    %v402 = vmul.f32 %v225, %v401
    %v403 = vrcp.pop %v296
    %v404 = vmul.f32 %v296, %v403
    %v405 = vsub.f32 1.0, %v404
    %v406 = vmul.f32 %v403, %v405
    %v407 = vadd.f32 %v403, %v406
    %vm408 = vweird.f32 %v296
    %vm409 = vweird.f32 %v403
    %vm410 = vmor %vm408, %vm409
    %v411 = vsel %vm410, %v403, %v407
    %v412 = vand.u32 2147483647, %v296
    %vm413 = vcmp.eq.f32.partialorder %v412, 8.507059e+37
    %v414 = vand.u32 %v296, 2147483648
    %v415 = vor.u32 1.1754944e-38, %v414
    %v416 = vsel %vm413, %v415, %v411
    %v417 = vmul.f32 %v228, %v416
    %v418 = vmul.f32 %v31, %v312
    %v419 = vmul.f32 %v32, %v327
    %v420 = vmul.f32 %v33, %v342
    %v421 = vmul.f32 %v34, %v357
    %v422 = vmul.f32 %v35, %v372
    %v423 = vmul.f32 %v36, %v387
    %v424 = vmul.f32 %v37, %v402
    %v425 = vmul.f32 %v38, %v417
    %426 = vmatpush.msra.mxu0 0.0
    %427 = vmatpush.msra.mxu0 0.0
    %428 = vmatpush.msra.mxu0 0.0
    %429 = vmatpush.msra.mxu0 0.0
    %430 = vmatpush.msra.mxu0 0.0
    %431 = vmatpush.msra.mxu0 0.0
    %432 = vmatpush.msra.mxu0 0.0
    %433 = vmatpush.msra.mxu0 0.0
    %434 = vmatpush.msra.mxu0 %v72
    %435 = vmatpush.msra.mxu0 %v71
    %436 = vmatpush.msra.mxu0 %v70
    %437 = vmatpush.msra.mxu0 %v69
    %438 = vmatpush.msra.mxu0 %v68
    %439 = vmatpush.msra.mxu0 %v67
    %440 = vmatpush.msra.mxu0 %v66
    %441 = vmatpush.msra.mxu0 %v65
    %442 = vmatmul.f32.gmra.mxu0 %v107
    %v443 = vpop.f32.mrf.mxu0
    %v444 = vadd.f32 0.0, %v443
    %445 = vdwg.mxu0
    %v446 = vmul.f32 %v444, %v186
    %v447 = vmul.f32 %v39, %v446
    %448 = vmatpush.xpose.msra.mxu0 0.0
    %449 = vmatpush.xpose.msra.mxu0 0.0
    %450 = vmatpush.xpose.msra.mxu0 0.0
    %451 = vmatpush.xpose.msra.mxu0 0.0
    %452 = vmatpush.xpose.msra.mxu0 0.0
    %453 = vmatpush.xpose.msra.mxu0 0.0
    %454 = vmatpush.xpose.msra.mxu0 0.0
    %455 = vmatpush.xpose.msra.mxu0 0.0
    %456 = vmatpush.xpose.msra.mxu0 0.0
    %457 = vmatpush.xpose.msra.mxu0 0.0
    %458 = vmatpush.xpose.msra.mxu0 0.0
    %459 = vmatpush.xpose.msra.mxu0 0.0
    %460 = vmatpush.xpose.msra.mxu0 0.0
    %461 = vmatpush.xpose.msra.mxu0 0.0
    %462 = vmatpush.xpose.msra.mxu0 0.0
    %463 = vmatpush.xpose.msra.mxu0 %v39
    %464 = vmatmul.f32.gmra.mxu0 %v65
    %v465 = vpop.f32.mrf.mxu0
    %v466 = vadd.f32 0.0, %v465
    %467 = vmatmul.f32.gmra.mxu0 %v66
    %v468 = vpop.f32.mrf.mxu0
    %v469 = vadd.f32 0.0, %v468
    %470 = vmatmul.f32.gmra.mxu0 %v67
    %v471 = vpop.f32.mrf.mxu0
    %v472 = vadd.f32 0.0, %v471
    %473 = vmatmul.f32.gmra.mxu0 %v68
    %v474 = vpop.f32.mrf.mxu0
    %v475 = vadd.f32 0.0, %v474
    %476 = vmatmul.f32.gmra.mxu0 %v69
    %v477 = vpop.f32.mrf.mxu0
    %v478 = vadd.f32 0.0, %v477
    %479 = vmatmul.f32.gmra.mxu0 %v70
    %v480 = vpop.f32.mrf.mxu0
    %v481 = vadd.f32 0.0, %v480
    %482 = vmatmul.f32.gmra.mxu0 %v71
    %v483 = vpop.f32.mrf.mxu0
    %v484 = vadd.f32 0.0, %v483
    %485 = vmatmul.f32.gmra.mxu0 %v72
    %v486 = vpop.f32.mrf.mxu0
    %v487 = vadd.f32 0.0, %v486
    %488 = vmatmul.f32.gmra.mxu0 %v39
    %v489 = vpop.f32.mrf.mxu0
    %v490 = vadd.f32 0.0, %v489
    %491 = vdwg.mxu0
    %492 = vmatpush.msra.mxu0 0.0
    %493 = vmatpush.msra.mxu0 0.0
    %494 = vmatpush.msra.mxu0 0.0
    %495 = vmatpush.msra.mxu0 0.0
    %496 = vmatpush.msra.mxu0 0.0
    %497 = vmatpush.msra.mxu0 0.0
    %498 = vmatpush.msra.mxu0 0.0
    %499 = vmatpush.msra.mxu0 0.0
    %500 = vmatpush.msra.mxu0 0.0
    %501 = vmatpush.msra.mxu0 0.0
    %502 = vmatpush.msra.mxu0 0.0
    %503 = vmatpush.msra.mxu0 0.0
    %504 = vmatpush.msra.mxu0 0.0
    %505 = vmatpush.msra.mxu0 0.0
    %506 = vmatpush.msra.mxu0 0.0
    %507 = vmatpush.msra.mxu0 %v490
    %508 = vmatmul.f32.gmra.mxu0 %v234
    %v509 = vpop.f32.mrf.mxu0
    %v510 = vadd.f32 2e-08, %v509
    %511 = vmatmul.f32.gmra.mxu0 %v237
    %v512 = vpop.f32.mrf.mxu0
    %v513 = vadd.f32 2e-08, %v512
    %514 = vmatmul.f32.gmra.mxu0 %v240
    %v515 = vpop.f32.mrf.mxu0
    %v516 = vadd.f32 2e-08, %v515
    %517 = vmatmul.f32.gmra.mxu0 %v243
    %v518 = vpop.f32.mrf.mxu0
    %v519 = vadd.f32 2e-08, %v518
    %520 = vmatmul.f32.gmra.mxu0 %v246
    %v521 = vpop.f32.mrf.mxu0
    %v522 = vadd.f32 2e-08, %v521
    %523 = vmatmul.f32.gmra.mxu0 %v249
    %v524 = vpop.f32.mrf.mxu0
    %v525 = vadd.f32 2e-08, %v524
    %526 = vmatmul.f32.gmra.mxu0 %v252
    %v527 = vpop.f32.mrf.mxu0
    %v528 = vadd.f32 2e-08, %v527
    %529 = vmatmul.f32.gmra.mxu0 %v255
    %v530 = vpop.f32.mrf.mxu0
    %v531 = vadd.f32 2e-08, %v530
    %532 = vdwg.mxu0
    %v533 = vrcp.pop %v510
    %v534 = vmul.f32 %v510, %v533
    %v535 = vsub.f32 1.0, %v534
    %v536 = vmul.f32 %v533, %v535
    %v537 = vadd.f32 %v533, %v536
    %vm538 = vweird.f32 %v510
    %vm539 = vweird.f32 %v533
    %vm540 = vmor %vm538, %vm539
    %v541 = vsel %vm540, %v533, %v537
    %v542 = vand.u32 2147483647, %v510
    %vm543 = vcmp.eq.f32.partialorder %v542, 8.507059e+37
    %v544 = vand.u32 %v510, 2147483648
    %v545 = vor.u32 1.1754944e-38, %v544
    %v546 = vsel %vm543, %v545, %v541
    %v547 = vmul.f32 %v466, %v546
    %v548 = vrcp.pop %v513
    %v549 = vmul.f32 %v513, %v548
    %v550 = vsub.f32 1.0, %v549
    %v551 = vmul.f32 %v548, %v550
    %v552 = vadd.f32 %v548, %v551
    %vm553 = vweird.f32 %v513
    %vm554 = vweird.f32 %v548
    %vm555 = vmor %vm553, %vm554
    %v556 = vsel %vm555, %v548, %v552
    %v557 = vand.u32 2147483647, %v513
    %vm558 = vcmp.eq.f32.partialorder %v557, 8.507059e+37
    %v559 = vand.u32 %v513, 2147483648
    %v560 = vor.u32 1.1754944e-38, %v559
    %v561 = vsel %vm558, %v560, %v556
    %v562 = vmul.f32 %v469, %v561
    %v563 = vrcp.pop %v516
    %v564 = vmul.f32 %v516, %v563
    %v565 = vsub.f32 1.0, %v564
    %v566 = vmul.f32 %v563, %v565
    %v567 = vadd.f32 %v563, %v566
    %vm568 = vweird.f32 %v516
    %vm569 = vweird.f32 %v563
    %vm570 = vmor %vm568, %vm569
    %v571 = vsel %vm570, %v563, %v567
    %v572 = vand.u32 2147483647, %v516
    %vm573 = vcmp.eq.f32.partialorder %v572, 8.507059e+37
    %v574 = vand.u32 %v516, 2147483648
    %v575 = vor.u32 1.1754944e-38, %v574
    %v576 = vsel %vm573, %v575, %v571
    %v577 = vmul.f32 %v472, %v576
    %v578 = vrcp.pop %v519
    %v579 = vmul.f32 %v519, %v578
    %v580 = vsub.f32 1.0, %v579
    %v581 = vmul.f32 %v578, %v580
    %v582 = vadd.f32 %v578, %v581
    %vm583 = vweird.f32 %v519
    %vm584 = vweird.f32 %v578
    %vm585 = vmor %vm583, %vm584
    %v586 = vsel %vm585, %v578, %v582
    %v587 = vand.u32 2147483647, %v519
    %vm588 = vcmp.eq.f32.partialorder %v587, 8.507059e+37
    %v589 = vand.u32 %v519, 2147483648
    %v590 = vor.u32 1.1754944e-38, %v589
    %v591 = vsel %vm588, %v590, %v586
    %v592 = vmul.f32 %v475, %v591
    %v593 = vrcp.pop %v522
    %v594 = vmul.f32 %v522, %v593
    %v595 = vsub.f32 1.0, %v594
    %v596 = vmul.f32 %v593, %v595
    %v597 = vadd.f32 %v593, %v596
    %vm598 = vweird.f32 %v522
    %vm599 = vweird.f32 %v593
    %vm600 = vmor %vm598, %vm599
    %v601 = vsel %vm600, %v593, %v597
    %v602 = vand.u32 2147483647, %v522
    %vm603 = vcmp.eq.f32.partialorder %v602, 8.507059e+37
    %v604 = vand.u32 %v522, 2147483648
    %v605 = vor.u32 1.1754944e-38, %v604
    %v606 = vsel %vm603, %v605, %v601
    %v607 = vmul.f32 %v478, %v606
    %v608 = vrcp.pop %v525
    %v609 = vmul.f32 %v525, %v608
    %v610 = vsub.f32 1.0, %v609
    %v611 = vmul.f32 %v608, %v610
    %v612 = vadd.f32 %v608, %v611
    %vm613 = vweird.f32 %v525
    %vm614 = vweird.f32 %v608
    %vm615 = vmor %vm613, %vm614
    %v616 = vsel %vm615, %v608, %v612
    %v617 = vand.u32 2147483647, %v525
    %vm618 = vcmp.eq.f32.partialorder %v617, 8.507059e+37
    %v619 = vand.u32 %v525, 2147483648
    %v620 = vor.u32 1.1754944e-38, %v619
    %v621 = vsel %vm618, %v620, %v616
    %v622 = vmul.f32 %v481, %v621
    %v623 = vrcp.pop %v528
    %v624 = vmul.f32 %v528, %v623
    %v625 = vsub.f32 1.0, %v624
    %v626 = vmul.f32 %v623, %v625
    %v627 = vadd.f32 %v623, %v626
    %vm628 = vweird.f32 %v528
    %vm629 = vweird.f32 %v623
    %vm630 = vmor %vm628, %vm629
    %v631 = vsel %vm630, %v623, %v627
    %v632 = vand.u32 2147483647, %v528
    %vm633 = vcmp.eq.f32.partialorder %v632, 8.507059e+37
    %v634 = vand.u32 %v528, 2147483648
    %v635 = vor.u32 1.1754944e-38, %v634
    %v636 = vsel %vm633, %v635, %v631
    %v637 = vmul.f32 %v484, %v636
    %v638 = vrcp.pop %v531
    %v639 = vmul.f32 %v531, %v638
    %v640 = vsub.f32 1.0, %v639
    %v641 = vmul.f32 %v638, %v640
    %v642 = vadd.f32 %v638, %v641
    %vm643 = vweird.f32 %v531
    %vm644 = vweird.f32 %v638
    %vm645 = vmor %vm643, %vm644
    %v646 = vsel %vm645, %v638, %v642
    %v647 = vand.u32 2147483647, %v531
    %vm648 = vcmp.eq.f32.partialorder %v647, 8.507059e+37
    %v649 = vand.u32 %v531, 2147483648
    %v650 = vor.u32 1.1754944e-38, %v649
    %v651 = vsel %vm648, %v650, %v646
    %v652 = vmul.f32 %v487, %v651
    %v653 = vmul.f32 %v31, %v547
    %v654 = vmul.f32 %v32, %v562
    %v655 = vmul.f32 %v33, %v577
    %v656 = vmul.f32 %v34, %v592
    %v657 = vmul.f32 %v35, %v607
    %v658 = vmul.f32 %v36, %v622
    %v659 = vmul.f32 %v37, %v637
    %v660 = vmul.f32 %v38, %v652
    %661 = vxpose.xlu0.b32.start [1/16] %v418, 128
    %662 = vxpose.xlu0.b32.cont [2/16] %v419, 128
    %663 = vxpose.xlu0.b32.cont [3/16] %v420, 128
    %664 = vxpose.xlu0.b32.cont [4/16] %v421, 128
    %665 = vxpose.xlu0.b32.cont [5/16] %v422, 128
    %666 = vxpose.xlu0.b32.cont [6/16] %v423, 128
    %667 = vxpose.xlu0.b32.cont [7/16] %v424, 128
    %668 = vxpose.xlu0.b32.cont [8/16] %v425, 128
    %669 = vxpose.xlu0.b32.cont [9/16] 0.0, 128
    %670 = vxpose.xlu0.b32.cont [10/16] 0.0, 128
    %671 = vxpose.xlu0.b32.cont [11/16] 0.0, 128
    %672 = vxpose.xlu0.b32.cont [12/16] 0.0, 128
    %673 = vxpose.xlu0.b32.cont [13/16] 0.0, 128
    %674 = vxpose.xlu0.b32.cont [14/16] 0.0, 128
    %675 = vxpose.xlu0.b32.cont [15/16] 0.0, 128
    %676 = vxpose.xlu0.b32.end [16/16] 0.0, 128
    %v677 = vpop.trf.xlu0
    %v678 = vpop.trf.xlu0
    %v679 = vpop.trf.xlu0
    %v680 = vpop.trf.xlu0
    %v681 = vpop.trf.xlu0
    %v682 = vpop.trf.xlu0
    %v683 = vpop.trf.xlu0
    %v684 = vpop.trf.xlu0
    %v685 = vpop.trf.xlu0
    %v686 = vpop.trf.xlu0
    %v687 = vpop.trf.xlu0
    %v688 = vpop.trf.xlu0
    %v689 = vpop.trf.xlu0
    %v690 = vpop.trf.xlu0
    %v691 = vpop.trf.xlu0
    %v692 = vpop.trf.xlu0
    %v694 = vsel %vm105, %v677, 0
    %696 = vmatpush.msra.mxu0 0.0
    %697 = vmatpush.msra.mxu0 0.0
    %698 = vmatpush.msra.mxu0 0.0
    %699 = vmatpush.msra.mxu0 0.0
    %700 = vmatpush.msra.mxu0 0.0
    %701 = vmatpush.msra.mxu0 0.0
    %702 = vmatpush.msra.mxu0 0.0
    %703 = vmatpush.msra.mxu0 0.0
    %704 = vmatpush.msra.mxu0 %v55
    %705 = vmatpush.msra.mxu0 %v54
    %706 = vmatpush.msra.mxu0 %v53
    %707 = vmatpush.msra.mxu0 %v52
    %708 = vmatpush.msra.mxu0 %v51
    %709 = vmatpush.msra.mxu0 %v50
    %710 = vmatpush.msra.mxu0 %v49
    %711 = vmatpush.msra.mxu0 %v48
    %712 = vmatmul.f32.gmra.mxu0 %v694
    %v713 = vpop.f32.mrf.mxu0
    %v714 = vadd.f32 0.0, %v713
    %715 = vdwg.mxu0
    %716 = vmatpush.msra.mxu0 0.0
    %717 = vmatpush.msra.mxu0 0.0
    %718 = vmatpush.msra.mxu0 0.0
    %719 = vmatpush.msra.mxu0 0.0
    %720 = vmatpush.msra.mxu0 0.0
    %721 = vmatpush.msra.mxu0 0.0
    %722 = vmatpush.msra.mxu0 0.0
    %723 = vmatpush.msra.mxu0 0.0
    %724 = vmatpush.msra.mxu0 %v425
    %725 = vmatpush.msra.mxu0 %v424
    %726 = vmatpush.msra.mxu0 %v423
    %727 = vmatpush.msra.mxu0 %v422
    %728 = vmatpush.msra.mxu0 %v421
    %729 = vmatpush.msra.mxu0 %v420
    %730 = vmatpush.msra.mxu0 %v419
    %731 = vmatpush.msra.mxu0 %v418
    %732 = vmatmul.f32.gmra.mxu0 %v694
    %v733 = vpop.f32.mrf.mxu0
    %v734 = vadd.f32 0.0, %v733
    %735 = vdwg.mxu0
    %v737 = vsel %vm149, %v734, 0
    %739 = vmatpush.msra.mxu0 0.0
    %740 = vmatpush.msra.mxu0 0.0
    %741 = vmatpush.msra.mxu0 0.0
    %742 = vmatpush.msra.mxu0 0.0
    %743 = vmatpush.msra.mxu0 0.0
    %744 = vmatpush.msra.mxu0 0.0
    %745 = vmatpush.msra.mxu0 0.0
    %746 = vmatpush.msra.mxu0 0.0
    %747 = vmatpush.msra.mxu0 0.0
    %748 = vmatpush.msra.mxu0 0.0
    %749 = vmatpush.msra.mxu0 0.0
    %750 = vmatpush.msra.mxu0 0.0
    %751 = vmatpush.msra.mxu0 0.0
    %752 = vmatpush.msra.mxu0 0.0
    %753 = vmatpush.msra.mxu0 0.0
    %754 = vmatpush.msra.mxu0 %v188
    %755 = vmatmul.f32.gmra.mxu0 %v737
    %v756 = vpop.f32.mrf.mxu0
    %v757 = vadd.f32 2e-08, %v756
    %758 = vdwg.mxu0
    %v759 = vrcp.pop %v757
    %v760 = vmul.f32 %v757, %v759
    %v761 = vsub.f32 1.0, %v760
    %v762 = vmul.f32 %v759, %v761
    %v763 = vadd.f32 %v759, %v762
    %vm764 = vweird.f32 %v757
    %vm765 = vweird.f32 %v759
    %vm766 = vmor %vm764, %vm765
    %v767 = vsel %vm766, %v759, %v763
    %v768 = vand.u32 2147483647, %v757
    %vm769 = vcmp.eq.f32.partialorder %v768, 8.507059e+37
    %v770 = vand.u32 %v757, 2147483648
    %v771 = vor.u32 1.1754944e-38, %v770
    %v772 = vsel %vm769, %v771, %v767
    %v773 = vmul.f32 %v714, %v772
    %v774 = vmul.f32 %v188, %v773
    %775 = vmatpush.xpose.msra.mxu0 0.0
    %776 = vmatpush.xpose.msra.mxu0 0.0
    %777 = vmatpush.xpose.msra.mxu0 0.0
    %778 = vmatpush.xpose.msra.mxu0 0.0
    %779 = vmatpush.xpose.msra.mxu0 0.0
    %780 = vmatpush.xpose.msra.mxu0 0.0
    %781 = vmatpush.xpose.msra.mxu0 0.0
    %782 = vmatpush.xpose.msra.mxu0 0.0
    %783 = vmatpush.xpose.msra.mxu0 0.0
    %784 = vmatpush.xpose.msra.mxu0 0.0
    %785 = vmatpush.xpose.msra.mxu0 0.0
    %786 = vmatpush.xpose.msra.mxu0 0.0
    %787 = vmatpush.xpose.msra.mxu0 0.0
    %788 = vmatpush.xpose.msra.mxu0 0.0
    %789 = vmatpush.xpose.msra.mxu0 0.0
    %790 = vmatpush.xpose.msra.mxu0 %v188
    %791 = vmatmul.f32.gmra.mxu0 %v48
    %v792 = vpop.f32.mrf.mxu0
    %v793 = vadd.f32 0.0, %v792
    %794 = vmatmul.f32.gmra.mxu0 %v49
    %v795 = vpop.f32.mrf.mxu0
    %v796 = vadd.f32 0.0, %v795
    %797 = vmatmul.f32.gmra.mxu0 %v50
    %v798 = vpop.f32.mrf.mxu0
    %v799 = vadd.f32 0.0, %v798
    %800 = vmatmul.f32.gmra.mxu0 %v51
    %v801 = vpop.f32.mrf.mxu0
    %v802 = vadd.f32 0.0, %v801
    %803 = vmatmul.f32.gmra.mxu0 %v52
    %v804 = vpop.f32.mrf.mxu0
    %v805 = vadd.f32 0.0, %v804
    %806 = vmatmul.f32.gmra.mxu0 %v53
    %v807 = vpop.f32.mrf.mxu0
    %v808 = vadd.f32 0.0, %v807
    %809 = vmatmul.f32.gmra.mxu0 %v54
    %v810 = vpop.f32.mrf.mxu0
    %v811 = vadd.f32 0.0, %v810
    %812 = vmatmul.f32.gmra.mxu0 %v55
    %v813 = vpop.f32.mrf.mxu0
    %v814 = vadd.f32 0.0, %v813
    %815 = vmatmul.f32.gmra.mxu0 %v188
    %v816 = vpop.f32.mrf.mxu0
    %v817 = vadd.f32 0.0, %v816
    %818 = vdwg.mxu0
    %v820 = vsel %vm149, %v418, 0
    %v823 = vsel %vm149, %v419, 0
    %v826 = vsel %vm149, %v420, 0
    %v829 = vsel %vm149, %v421, 0
    %v832 = vsel %vm149, %v422, 0
    %v835 = vsel %vm149, %v423, 0
    %v838 = vsel %vm149, %v424, 0
    %v841 = vsel %vm149, %v425, 0
    %843 = vmatpush.msra.mxu0 0.0
    %844 = vmatpush.msra.mxu0 0.0
    %845 = vmatpush.msra.mxu0 0.0
    %846 = vmatpush.msra.mxu0 0.0
    %847 = vmatpush.msra.mxu0 0.0
    %848 = vmatpush.msra.mxu0 0.0
    %849 = vmatpush.msra.mxu0 0.0
    %850 = vmatpush.msra.mxu0 0.0
    %851 = vmatpush.msra.mxu0 0.0
    %852 = vmatpush.msra.mxu0 0.0
    %853 = vmatpush.msra.mxu0 0.0
    %854 = vmatpush.msra.mxu0 0.0
    %855 = vmatpush.msra.mxu0 0.0
    %856 = vmatpush.msra.mxu0 0.0
    %857 = vmatpush.msra.mxu0 0.0
    %858 = vmatpush.msra.mxu0 %v817
    %859 = vmatmul.f32.gmra.mxu0 %v820
    %v860 = vpop.f32.mrf.mxu0
    %v861 = vadd.f32 2e-08, %v860
    %862 = vmatmul.f32.gmra.mxu0 %v823
    %v863 = vpop.f32.mrf.mxu0
    %v864 = vadd.f32 2e-08, %v863
    %865 = vmatmul.f32.gmra.mxu0 %v826
    %v866 = vpop.f32.mrf.mxu0
    %v867 = vadd.f32 2e-08, %v866
    %868 = vmatmul.f32.gmra.mxu0 %v829
    %v869 = vpop.f32.mrf.mxu0
    %v870 = vadd.f32 2e-08, %v869
    %871 = vmatmul.f32.gmra.mxu0 %v832
    %v872 = vpop.f32.mrf.mxu0
    %v873 = vadd.f32 2e-08, %v872
    %874 = vmatmul.f32.gmra.mxu0 %v835
    %v875 = vpop.f32.mrf.mxu0
    %v876 = vadd.f32 2e-08, %v875
    %877 = vmatmul.f32.gmra.mxu0 %v838
    %v878 = vpop.f32.mrf.mxu0
    %v879 = vadd.f32 2e-08, %v878
    %880 = vmatmul.f32.gmra.mxu0 %v841
    %v881 = vpop.f32.mrf.mxu0
    %v882 = vadd.f32 2e-08, %v881
    %883 = vdwg.mxu0
    %v884 = vrcp.pop %v861
    %v885 = vmul.f32 %v861, %v884
    %v886 = vsub.f32 1.0, %v885
    %v887 = vmul.f32 %v884, %v886
    %v888 = vadd.f32 %v884, %v887
    %vm889 = vweird.f32 %v861
    %vm890 = vweird.f32 %v884
    %vm891 = vmor %vm889, %vm890
    %v892 = vsel %vm891, %v884, %v888
    %v893 = vand.u32 2147483647, %v861
    %vm894 = vcmp.eq.f32.partialorder %v893, 8.507059e+37
    %v895 = vand.u32 %v861, 2147483648
    %v896 = vor.u32 1.1754944e-38, %v895
    %v897 = vsel %vm894, %v896, %v892
    %v898 = vmul.f32 %v793, %v897
    %v899 = vrcp.pop %v864
    %v900 = vmul.f32 %v864, %v899
    %v901 = vsub.f32 1.0, %v900
    %v902 = vmul.f32 %v899, %v901
    %v903 = vadd.f32 %v899, %v902
    %vm904 = vweird.f32 %v864
    %vm905 = vweird.f32 %v899
    %vm906 = vmor %vm904, %vm905
    %v907 = vsel %vm906, %v899, %v903
    %v908 = vand.u32 2147483647, %v864
    %vm909 = vcmp.eq.f32.partialorder %v908, 8.507059e+37
    %v910 = vand.u32 %v864, 2147483648
    %v911 = vor.u32 1.1754944e-38, %v910
    %v912 = vsel %vm909, %v911, %v907
    %v913 = vmul.f32 %v796, %v912
    %v914 = vrcp.pop %v867
    %v915 = vmul.f32 %v867, %v914
    %v916 = vsub.f32 1.0, %v915
    %v917 = vmul.f32 %v914, %v916
    %v918 = vadd.f32 %v914, %v917
    %vm919 = vweird.f32 %v867
    %vm920 = vweird.f32 %v914
    %vm921 = vmor %vm919, %vm920
    %v922 = vsel %vm921, %v914, %v918
    %v923 = vand.u32 2147483647, %v867
    %vm924 = vcmp.eq.f32.partialorder %v923, 8.507059e+37
    %v925 = vand.u32 %v867, 2147483648
    %v926 = vor.u32 1.1754944e-38, %v925
    %v927 = vsel %vm924, %v926, %v922
    %v928 = vmul.f32 %v799, %v927
    %v929 = vrcp.pop %v870
    %v930 = vmul.f32 %v870, %v929
    %v931 = vsub.f32 1.0, %v930
    %v932 = vmul.f32 %v929, %v931
    %v933 = vadd.f32 %v929, %v932
    %vm934 = vweird.f32 %v870
    %vm935 = vweird.f32 %v929
    %vm936 = vmor %vm934, %vm935
    %v937 = vsel %vm936, %v929, %v933
    %v938 = vand.u32 2147483647, %v870
    %vm939 = vcmp.eq.f32.partialorder %v938, 8.507059e+37
    %v940 = vand.u32 %v870, 2147483648
    %v941 = vor.u32 1.1754944e-38, %v940
    %v942 = vsel %vm939, %v941, %v937
    %v943 = vmul.f32 %v802, %v942
    %v944 = vrcp.pop %v873
    %v945 = vmul.f32 %v873, %v944
    %v946 = vsub.f32 1.0, %v945
    %v947 = vmul.f32 %v944, %v946
    %v948 = vadd.f32 %v944, %v947
    %vm949 = vweird.f32 %v873
    %vm950 = vweird.f32 %v944
    %vm951 = vmor %vm949, %vm950
    %v952 = vsel %vm951, %v944, %v948
    %v953 = vand.u32 2147483647, %v873
    %vm954 = vcmp.eq.f32.partialorder %v953, 8.507059e+37
    %v955 = vand.u32 %v873, 2147483648
    %v956 = vor.u32 1.1754944e-38, %v955
    %v957 = vsel %vm954, %v956, %v952
    %v958 = vmul.f32 %v805, %v957
    %v959 = vrcp.pop %v876
    %v960 = vmul.f32 %v876, %v959
    %v961 = vsub.f32 1.0, %v960
    %v962 = vmul.f32 %v959, %v961
    %v963 = vadd.f32 %v959, %v962
    %vm964 = vweird.f32 %v876
    %vm965 = vweird.f32 %v959
    %vm966 = vmor %vm964, %vm965
    %v967 = vsel %vm966, %v959, %v963
    %v968 = vand.u32 2147483647, %v876
    %vm969 = vcmp.eq.f32.partialorder %v968, 8.507059e+37
    %v970 = vand.u32 %v876, 2147483648
    %v971 = vor.u32 1.1754944e-38, %v970
    %v972 = vsel %vm969, %v971, %v967
    %v973 = vmul.f32 %v808, %v972
    %v974 = vrcp.pop %v879
    %v975 = vmul.f32 %v879, %v974
    %v976 = vsub.f32 1.0, %v975
    %v977 = vmul.f32 %v974, %v976
    %v978 = vadd.f32 %v974, %v977
    %vm979 = vweird.f32 %v879
    %vm980 = vweird.f32 %v974
    %vm981 = vmor %vm979, %vm980
    %v982 = vsel %vm981, %v974, %v978
    %v983 = vand.u32 2147483647, %v879
    %vm984 = vcmp.eq.f32.partialorder %v983, 8.507059e+37
    %v985 = vand.u32 %v879, 2147483648
    %v986 = vor.u32 1.1754944e-38, %v985
    %v987 = vsel %vm984, %v986, %v982
    %v988 = vmul.f32 %v811, %v987
    %v989 = vrcp.pop %v882
    %v990 = vmul.f32 %v882, %v989
    %v991 = vsub.f32 1.0, %v990
    %v992 = vmul.f32 %v989, %v991
    %v993 = vadd.f32 %v989, %v992
    %vm994 = vweird.f32 %v882
    %vm995 = vweird.f32 %v989
    %vm996 = vmor %vm994, %vm995
    %v997 = vsel %vm996, %v989, %v993
    %v998 = vand.u32 2147483647, %v882
    %vm999 = vcmp.eq.f32.partialorder %v998, 8.507059e+37
    %v1000 = vand.u32 %v882, 2147483648
    %v1001 = vor.u32 1.1754944e-38, %v1000
    %v1002 = vsel %vm999, %v1001, %v997
    %v1003 = vmul.f32 %v814, %v1002
    %v1004 = vmul.f32 %v418, %v898
    %v1005 = vmul.f32 %v419, %v913
    %v1006 = vmul.f32 %v420, %v928
    %v1007 = vmul.f32 %v421, %v943
    %v1008 = vmul.f32 %v422, %v958
    %v1009 = vmul.f32 %v423, %v973
    %v1010 = vmul.f32 %v424, %v988
    %v1011 = vmul.f32 %v425, %v1003
    %1012 = vxpose.xlu0.b32.start [1/16] %v653, 128
    %1013 = vxpose.xlu0.b32.cont [2/16] %v654, 128
    %1014 = vxpose.xlu0.b32.cont [3/16] %v655, 128
    %1015 = vxpose.xlu0.b32.cont [4/16] %v656, 128
    %1016 = vxpose.xlu0.b32.cont [5/16] %v657, 128
    %1017 = vxpose.xlu0.b32.cont [6/16] %v658, 128
    %1018 = vxpose.xlu0.b32.cont [7/16] %v659, 128
    %1019 = vxpose.xlu0.b32.cont [8/16] %v660, 128
    %1020 = vxpose.xlu0.b32.cont [9/16] 0.0, 128
    %1021 = vxpose.xlu0.b32.cont [10/16] 0.0, 128
    %1022 = vxpose.xlu0.b32.cont [11/16] 0.0, 128
    %1023 = vxpose.xlu0.b32.cont [12/16] 0.0, 128
    %1024 = vxpose.xlu0.b32.cont [13/16] 0.0, 128
    %1025 = vxpose.xlu0.b32.cont [14/16] 0.0, 128
    %1026 = vxpose.xlu0.b32.cont [15/16] 0.0, 128
    %1027 = vxpose.xlu0.b32.end [16/16] 0.0, 128
    %v1028 = vpop.trf.xlu0
    %v1029 = vpop.trf.xlu0
    %v1030 = vpop.trf.xlu0
    %v1031 = vpop.trf.xlu0
    %v1032 = vpop.trf.xlu0
    %v1033 = vpop.trf.xlu0
    %v1034 = vpop.trf.xlu0
    %v1035 = vpop.trf.xlu0
    %v1036 = vpop.trf.xlu0
    %v1037 = vpop.trf.xlu0
    %v1038 = vpop.trf.xlu0
    %v1039 = vpop.trf.xlu0
    %v1040 = vpop.trf.xlu0
    %v1041 = vpop.trf.xlu0
    %v1042 = vpop.trf.xlu0
    %v1043 = vpop.trf.xlu0
    %v1045 = vsel %vm105, %v1028, 0
    %1047 = vmatpush.msra.mxu0 0.0
    %1048 = vmatpush.msra.mxu0 0.0
    %1049 = vmatpush.msra.mxu0 0.0
    %1050 = vmatpush.msra.mxu0 0.0
    %1051 = vmatpush.msra.mxu0 0.0
    %1052 = vmatpush.msra.mxu0 0.0
    %1053 = vmatpush.msra.mxu0 0.0
    %1054 = vmatpush.msra.mxu0 0.0
    %1055 = vmatpush.msra.mxu0 %v72
    %1056 = vmatpush.msra.mxu0 %v71
    %1057 = vmatpush.msra.mxu0 %v70
    %1058 = vmatpush.msra.mxu0 %v69
    %1059 = vmatpush.msra.mxu0 %v68
    %1060 = vmatpush.msra.mxu0 %v67
    %1061 = vmatpush.msra.mxu0 %v66
    %1062 = vmatpush.msra.mxu0 %v65
    %1063 = vmatmul.f32.gmra.mxu0 %v1045
    %v1064 = vpop.f32.mrf.mxu0
    %v1065 = vadd.f32 0.0, %v1064
    %1066 = vdwg.mxu0
    %1067 = vmatpush.msra.mxu0 0.0
    %1068 = vmatpush.msra.mxu0 0.0
    %1069 = vmatpush.msra.mxu0 0.0
    %1070 = vmatpush.msra.mxu0 0.0
    %1071 = vmatpush.msra.mxu0 0.0
    %1072 = vmatpush.msra.mxu0 0.0
    %1073 = vmatpush.msra.mxu0 0.0
    %1074 = vmatpush.msra.mxu0 0.0
    %1075 = vmatpush.msra.mxu0 %v660
    %1076 = vmatpush.msra.mxu0 %v659
    %1077 = vmatpush.msra.mxu0 %v658
    %1078 = vmatpush.msra.mxu0 %v657
    %1079 = vmatpush.msra.mxu0 %v656
    %1080 = vmatpush.msra.mxu0 %v655
    %1081 = vmatpush.msra.mxu0 %v654
    %1082 = vmatpush.msra.mxu0 %v653
    %1083 = vmatmul.f32.gmra.mxu0 %v1045
    %v1084 = vpop.f32.mrf.mxu0
    %v1085 = vadd.f32 0.0, %v1084
    %1086 = vdwg.mxu0
    %v1088 = vsel %vm149, %v1085, 0
    %1090 = vmatpush.msra.mxu0 0.0
    %1091 = vmatpush.msra.mxu0 0.0
    %1092 = vmatpush.msra.mxu0 0.0
    %1093 = vmatpush.msra.mxu0 0.0
    %1094 = vmatpush.msra.mxu0 0.0
    %1095 = vmatpush.msra.mxu0 0.0
    %1096 = vmatpush.msra.mxu0 0.0
    %1097 = vmatpush.msra.mxu0 0.0
    %1098 = vmatpush.msra.mxu0 0.0
    %1099 = vmatpush.msra.mxu0 0.0
    %1100 = vmatpush.msra.mxu0 0.0
    %1101 = vmatpush.msra.mxu0 0.0
    %1102 = vmatpush.msra.mxu0 0.0
    %1103 = vmatpush.msra.mxu0 0.0
    %1104 = vmatpush.msra.mxu0 0.0
    %1105 = vmatpush.msra.mxu0 %v447
    %1106 = vmatmul.f32.gmra.mxu0 %v1088
    %v1107 = vpop.f32.mrf.mxu0
    %v1108 = vadd.f32 2e-08, %v1107
    %1109 = vdwg.mxu0
    %v1110 = vrcp.pop %v1108
    %v1111 = vmul.f32 %v1108, %v1110
    %v1112 = vsub.f32 1.0, %v1111
    %v1113 = vmul.f32 %v1110, %v1112
    %v1114 = vadd.f32 %v1110, %v1113
    %vm1115 = vweird.f32 %v1108
    %vm1116 = vweird.f32 %v1110
    %vm1117 = vmor %vm1115, %vm1116
    %v1118 = vsel %vm1117, %v1110, %v1114
    %v1119 = vand.u32 2147483647, %v1108
    %vm1120 = vcmp.eq.f32.partialorder %v1119, 8.507059e+37
    %v1121 = vand.u32 %v1108, 2147483648
    %v1122 = vor.u32 1.1754944e-38, %v1121
    %v1123 = vsel %vm1120, %v1122, %v1118
    %v1124 = vmul.f32 %v1065, %v1123
    %v1125 = vmul.f32 %v447, %v1124
    %1126 = vmatpush.xpose.msra.mxu0 0.0
    %1127 = vmatpush.xpose.msra.mxu0 0.0
    %1128 = vmatpush.xpose.msra.mxu0 0.0
    %1129 = vmatpush.xpose.msra.mxu0 0.0
    %1130 = vmatpush.xpose.msra.mxu0 0.0
    %1131 = vmatpush.xpose.msra.mxu0 0.0
    %1132 = vmatpush.xpose.msra.mxu0 0.0
    %1133 = vmatpush.xpose.msra.mxu0 0.0
    %1134 = vmatpush.xpose.msra.mxu0 0.0
    %1135 = vmatpush.xpose.msra.mxu0 0.0
    %1136 = vmatpush.xpose.msra.mxu0 0.0
    %1137 = vmatpush.xpose.msra.mxu0 0.0
    %1138 = vmatpush.xpose.msra.mxu0 0.0
    %1139 = vmatpush.xpose.msra.mxu0 0.0
    %1140 = vmatpush.xpose.msra.mxu0 0.0
    %1141 = vmatpush.xpose.msra.mxu0 %v447
    %1142 = vmatmul.f32.gmra.mxu0 %v65
    %v1143 = vpop.f32.mrf.mxu0
    %v1144 = vadd.f32 0.0, %v1143
    %1145 = vmatmul.f32.gmra.mxu0 %v66
    %v1146 = vpop.f32.mrf.mxu0
    %v1147 = vadd.f32 0.0, %v1146
    %1148 = vmatmul.f32.gmra.mxu0 %v67
    %v1149 = vpop.f32.mrf.mxu0
    %v1150 = vadd.f32 0.0, %v1149
    %1151 = vmatmul.f32.gmra.mxu0 %v68
    %v1152 = vpop.f32.mrf.mxu0
    %v1153 = vadd.f32 0.0, %v1152
    %1154 = vmatmul.f32.gmra.mxu0 %v69
    %v1155 = vpop.f32.mrf.mxu0
    %v1156 = vadd.f32 0.0, %v1155
    %1157 = vmatmul.f32.gmra.mxu0 %v70
    %v1158 = vpop.f32.mrf.mxu0
    %v1159 = vadd.f32 0.0, %v1158
    %1160 = vmatmul.f32.gmra.mxu0 %v71
    %v1161 = vpop.f32.mrf.mxu0
    %v1162 = vadd.f32 0.0, %v1161
    %1163 = vmatmul.f32.gmra.mxu0 %v72
    %v1164 = vpop.f32.mrf.mxu0
    %v1165 = vadd.f32 0.0, %v1164
    %1166 = vmatmul.f32.gmra.mxu0 %v447
    %v1167 = vpop.f32.mrf.mxu0
    %v1168 = vadd.f32 0.0, %v1167
    %1169 = vdwg.mxu0
    %v1171 = vsel %vm149, %v653, 0
    %v1174 = vsel %vm149, %v654, 0
    %v1177 = vsel %vm149, %v655, 0
    %v1180 = vsel %vm149, %v656, 0
    %v1183 = vsel %vm149, %v657, 0
    %v1186 = vsel %vm149, %v658, 0
    %v1189 = vsel %vm149, %v659, 0
    %v1192 = vsel %vm149, %v660, 0
    %1194 = vmatpush.msra.mxu0 0.0
    %1195 = vmatpush.msra.mxu0 0.0
    %1196 = vmatpush.msra.mxu0 0.0
    %1197 = vmatpush.msra.mxu0 0.0
    %1198 = vmatpush.msra.mxu0 0.0
    %1199 = vmatpush.msra.mxu0 0.0
    %1200 = vmatpush.msra.mxu0 0.0
    %1201 = vmatpush.msra.mxu0 0.0
    %1202 = vmatpush.msra.mxu0 0.0
    %1203 = vmatpush.msra.mxu0 0.0
    %1204 = vmatpush.msra.mxu0 0.0
    %1205 = vmatpush.msra.mxu0 0.0
    %1206 = vmatpush.msra.mxu0 0.0
    %1207 = vmatpush.msra.mxu0 0.0
    %1208 = vmatpush.msra.mxu0 0.0
    %1209 = vmatpush.msra.mxu0 %v1168
    %1210 = vmatmul.f32.gmra.mxu0 %v1171
    %v1211 = vpop.f32.mrf.mxu0
    %v1212 = vadd.f32 2e-08, %v1211
    %1213 = vmatmul.f32.gmra.mxu0 %v1174
    %v1214 = vpop.f32.mrf.mxu0
    %v1215 = vadd.f32 2e-08, %v1214
    %1216 = vmatmul.f32.gmra.mxu0 %v1177
    %v1217 = vpop.f32.mrf.mxu0
    %v1218 = vadd.f32 2e-08, %v1217
    %1219 = vmatmul.f32.gmra.mxu0 %v1180
    %v1220 = vpop.f32.mrf.mxu0
    %v1221 = vadd.f32 2e-08, %v1220
    %1222 = vmatmul.f32.gmra.mxu0 %v1183
    %v1223 = vpop.f32.mrf.mxu0
    %v1224 = vadd.f32 2e-08, %v1223
    %1225 = vmatmul.f32.gmra.mxu0 %v1186
    %v1226 = vpop.f32.mrf.mxu0
    %v1227 = vadd.f32 2e-08, %v1226
    %1228 = vmatmul.f32.gmra.mxu0 %v1189
    %v1229 = vpop.f32.mrf.mxu0
    %v1230 = vadd.f32 2e-08, %v1229
    %1231 = vmatmul.f32.gmra.mxu0 %v1192
    %v1232 = vpop.f32.mrf.mxu0
    %v1233 = vadd.f32 2e-08, %v1232
    %1234 = vdwg.mxu0
    %v1235 = vrcp.pop %v1212
    %v1236 = vmul.f32 %v1212, %v1235
    %v1237 = vsub.f32 1.0, %v1236
    %v1238 = vmul.f32 %v1235, %v1237
    %v1239 = vadd.f32 %v1235, %v1238
    %vm1240 = vweird.f32 %v1212
    %vm1241 = vweird.f32 %v1235
    %vm1242 = vmor %vm1240, %vm1241
    %v1243 = vsel %vm1242, %v1235, %v1239
    %v1244 = vand.u32 2147483647, %v1212
    %vm1245 = vcmp.eq.f32.partialorder %v1244, 8.507059e+37
    %v1246 = vand.u32 %v1212, 2147483648
    %v1247 = vor.u32 1.1754944e-38, %v1246
    %v1248 = vsel %vm1245, %v1247, %v1243
    %v1249 = vmul.f32 %v1144, %v1248
    %v1250 = vrcp.pop %v1215
    %v1251 = vmul.f32 %v1215, %v1250
    %v1252 = vsub.f32 1.0, %v1251
    %v1253 = vmul.f32 %v1250, %v1252
    %v1254 = vadd.f32 %v1250, %v1253
    %vm1255 = vweird.f32 %v1215
    %vm1256 = vweird.f32 %v1250
    %vm1257 = vmor %vm1255, %vm1256
    %v1258 = vsel %vm1257, %v1250, %v1254
    %v1259 = vand.u32 2147483647, %v1215
    %vm1260 = vcmp.eq.f32.partialorder %v1259, 8.507059e+37
    %v1261 = vand.u32 %v1215, 2147483648
    %v1262 = vor.u32 1.1754944e-38, %v1261
    %v1263 = vsel %vm1260, %v1262, %v1258
    %v1264 = vmul.f32 %v1147, %v1263
    %v1265 = vrcp.pop %v1218
    %v1266 = vmul.f32 %v1218, %v1265
    %v1267 = vsub.f32 1.0, %v1266
    %v1268 = vmul.f32 %v1265, %v1267
    %v1269 = vadd.f32 %v1265, %v1268
    %vm1270 = vweird.f32 %v1218
    %vm1271 = vweird.f32 %v1265
    %vm1272 = vmor %vm1270, %vm1271
    %v1273 = vsel %vm1272, %v1265, %v1269
    %v1274 = vand.u32 2147483647, %v1218
    %vm1275 = vcmp.eq.f32.partialorder %v1274, 8.507059e+37
    %v1276 = vand.u32 %v1218, 2147483648
    %v1277 = vor.u32 1.1754944e-38, %v1276
    %v1278 = vsel %vm1275, %v1277, %v1273
    %v1279 = vmul.f32 %v1150, %v1278
    %v1280 = vrcp.pop %v1221
    %v1281 = vmul.f32 %v1221, %v1280
    %v1282 = vsub.f32 1.0, %v1281
    %v1283 = vmul.f32 %v1280, %v1282
    %v1284 = vadd.f32 %v1280, %v1283
    %vm1285 = vweird.f32 %v1221
    %vm1286 = vweird.f32 %v1280
    %vm1287 = vmor %vm1285, %vm1286
    %v1288 = vsel %vm1287, %v1280, %v1284
    %v1289 = vand.u32 2147483647, %v1221
    %vm1290 = vcmp.eq.f32.partialorder %v1289, 8.507059e+37
    %v1291 = vand.u32 %v1221, 2147483648
    %v1292 = vor.u32 1.1754944e-38, %v1291
    %v1293 = vsel %vm1290, %v1292, %v1288
    %v1294 = vmul.f32 %v1153, %v1293
    %v1295 = vrcp.pop %v1224
    %v1296 = vmul.f32 %v1224, %v1295
    %v1297 = vsub.f32 1.0, %v1296
    %v1298 = vmul.f32 %v1295, %v1297
    %v1299 = vadd.f32 %v1295, %v1298
    %vm1300 = vweird.f32 %v1224
    %vm1301 = vweird.f32 %v1295
    %vm1302 = vmor %vm1300, %vm1301
    %v1303 = vsel %vm1302, %v1295, %v1299
    %v1304 = vand.u32 2147483647, %v1224
    %vm1305 = vcmp.eq.f32.partialorder %v1304, 8.507059e+37
    %v1306 = vand.u32 %v1224, 2147483648
    %v1307 = vor.u32 1.1754944e-38, %v1306
    %v1308 = vsel %vm1305, %v1307, %v1303
    %v1309 = vmul.f32 %v1156, %v1308
    %v1310 = vrcp.pop %v1227
    %v1311 = vmul.f32 %v1227, %v1310
    %v1312 = vsub.f32 1.0, %v1311
    %v1313 = vmul.f32 %v1310, %v1312
    %v1314 = vadd.f32 %v1310, %v1313
    %vm1315 = vweird.f32 %v1227
    %vm1316 = vweird.f32 %v1310
    %vm1317 = vmor %vm1315, %vm1316
    %v1318 = vsel %vm1317, %v1310, %v1314
    %v1319 = vand.u32 2147483647, %v1227
    %vm1320 = vcmp.eq.f32.partialorder %v1319, 8.507059e+37
    %v1321 = vand.u32 %v1227, 2147483648
    %v1322 = vor.u32 1.1754944e-38, %v1321
    %v1323 = vsel %vm1320, %v1322, %v1318
    %v1324 = vmul.f32 %v1159, %v1323
    %v1325 = vrcp.pop %v1230
    %v1326 = vmul.f32 %v1230, %v1325
    %v1327 = vsub.f32 1.0, %v1326
    %v1328 = vmul.f32 %v1325, %v1327
    %v1329 = vadd.f32 %v1325, %v1328
    %vm1330 = vweird.f32 %v1230
    %vm1331 = vweird.f32 %v1325
    %vm1332 = vmor %vm1330, %vm1331
    %v1333 = vsel %vm1332, %v1325, %v1329
    %v1334 = vand.u32 2147483647, %v1230
    %vm1335 = vcmp.eq.f32.partialorder %v1334, 8.507059e+37
    %v1336 = vand.u32 %v1230, 2147483648
    %v1337 = vor.u32 1.1754944e-38, %v1336
    %v1338 = vsel %vm1335, %v1337, %v1333
    %v1339 = vmul.f32 %v1162, %v1338
    %v1340 = vrcp.pop %v1233
    %v1341 = vmul.f32 %v1233, %v1340
    %v1342 = vsub.f32 1.0, %v1341
    %v1343 = vmul.f32 %v1340, %v1342
    %v1344 = vadd.f32 %v1340, %v1343
    %vm1345 = vweird.f32 %v1233
    %vm1346 = vweird.f32 %v1340
    %vm1347 = vmor %vm1345, %vm1346
    %v1348 = vsel %vm1347, %v1340, %v1344
    %v1349 = vand.u32 2147483647, %v1233
    %vm1350 = vcmp.eq.f32.partialorder %v1349, 8.507059e+37
    %v1351 = vand.u32 %v1233, 2147483648
    %v1352 = vor.u32 1.1754944e-38, %v1351
    %v1353 = vsel %vm1350, %v1352, %v1348
    %v1354 = vmul.f32 %v1165, %v1353
    %v1355 = vmul.f32 %v653, %v1249
    %v1356 = vmul.f32 %v654, %v1264
    %v1357 = vmul.f32 %v655, %v1279
    %v1358 = vmul.f32 %v656, %v1294
    %v1359 = vmul.f32 %v657, %v1309
    %v1360 = vmul.f32 %v658, %v1324
    %v1361 = vmul.f32 %v659, %v1339
    %v1362 = vmul.f32 %v660, %v1354
    %1363 = vxpose.xlu0.b32.start [1/16] %v1004, 128
    %1364 = vxpose.xlu0.b32.cont [2/16] %v1005, 128
    %1365 = vxpose.xlu0.b32.cont [3/16] %v1006, 128
    %1366 = vxpose.xlu0.b32.cont [4/16] %v1007, 128
    %1367 = vxpose.xlu0.b32.cont [5/16] %v1008, 128
    %1368 = vxpose.xlu0.b32.cont [6/16] %v1009, 128
    %1369 = vxpose.xlu0.b32.cont [7/16] %v1010, 128
    %1370 = vxpose.xlu0.b32.cont [8/16] %v1011, 128
    %1371 = vxpose.xlu0.b32.cont [9/16] 0.0, 128
    %1372 = vxpose.xlu0.b32.cont [10/16] 0.0, 128
    %1373 = vxpose.xlu0.b32.cont [11/16] 0.0, 128
    %1374 = vxpose.xlu0.b32.cont [12/16] 0.0, 128
    %1375 = vxpose.xlu0.b32.cont [13/16] 0.0, 128
    %1376 = vxpose.xlu0.b32.cont [14/16] 0.0, 128
    %1377 = vxpose.xlu0.b32.cont [15/16] 0.0, 128
    %1378 = vxpose.xlu0.b32.end [16/16] 0.0, 128
    %v1379 = vpop.trf.xlu0
    %v1380 = vpop.trf.xlu0
    %v1381 = vpop.trf.xlu0
    %v1382 = vpop.trf.xlu0
    %v1383 = vpop.trf.xlu0
    %v1384 = vpop.trf.xlu0
    %v1385 = vpop.trf.xlu0
    %v1386 = vpop.trf.xlu0
    %v1387 = vpop.trf.xlu0
    %v1388 = vpop.trf.xlu0
    %v1389 = vpop.trf.xlu0
    %v1390 = vpop.trf.xlu0
    %v1391 = vpop.trf.xlu0
    %v1392 = vpop.trf.xlu0
    %v1393 = vpop.trf.xlu0
    %v1394 = vpop.trf.xlu0
    %v1396 = vsel %vm105, %v1379, 0
    %1398 = vmatpush.msra.mxu0 0.0
    %1399 = vmatpush.msra.mxu0 0.0
    %1400 = vmatpush.msra.mxu0 0.0
    %1401 = vmatpush.msra.mxu0 0.0
    %1402 = vmatpush.msra.mxu0 0.0
    %1403 = vmatpush.msra.mxu0 0.0
    %1404 = vmatpush.msra.mxu0 0.0
    %1405 = vmatpush.msra.mxu0 0.0
    %1406 = vmatpush.msra.mxu0 %v55
    %1407 = vmatpush.msra.mxu0 %v54
    %1408 = vmatpush.msra.mxu0 %v53
    %1409 = vmatpush.msra.mxu0 %v52
    %1410 = vmatpush.msra.mxu0 %v51
    %1411 = vmatpush.msra.mxu0 %v50
    %1412 = vmatpush.msra.mxu0 %v49
    %1413 = vmatpush.msra.mxu0 %v48
    %1414 = vmatmul.f32.gmra.mxu0 %v1396
    %v1415 = vpop.f32.mrf.mxu0
    %v1416 = vadd.f32 0.0, %v1415
    %1417 = vdwg.mxu0
    %1418 = vmatpush.msra.mxu0 0.0
    %1419 = vmatpush.msra.mxu0 0.0
    %1420 = vmatpush.msra.mxu0 0.0
    %1421 = vmatpush.msra.mxu0 0.0
    %1422 = vmatpush.msra.mxu0 0.0
    %1423 = vmatpush.msra.mxu0 0.0
    %1424 = vmatpush.msra.mxu0 0.0
    %1425 = vmatpush.msra.mxu0 0.0
    %1426 = vmatpush.msra.mxu0 %v1011
    %1427 = vmatpush.msra.mxu0 %v1010
    %1428 = vmatpush.msra.mxu0 %v1009
    %1429 = vmatpush.msra.mxu0 %v1008
    %1430 = vmatpush.msra.mxu0 %v1007
    %1431 = vmatpush.msra.mxu0 %v1006
    %1432 = vmatpush.msra.mxu0 %v1005
    %1433 = vmatpush.msra.mxu0 %v1004
    %1434 = vmatmul.f32.gmra.mxu0 %v1396
    %v1435 = vpop.f32.mrf.mxu0
    %v1436 = vadd.f32 0.0, %v1435
    %1437 = vdwg.mxu0
    %v1439 = vsel %vm149, %v1436, 0
    %1441 = vmatpush.msra.mxu0 0.0
    %1442 = vmatpush.msra.mxu0 0.0
    %1443 = vmatpush.msra.mxu0 0.0
    %1444 = vmatpush.msra.mxu0 0.0
    %1445 = vmatpush.msra.mxu0 0.0
    %1446 = vmatpush.msra.mxu0 0.0
    %1447 = vmatpush.msra.mxu0 0.0
    %1448 = vmatpush.msra.mxu0 0.0
    %1449 = vmatpush.msra.mxu0 0.0
    %1450 = vmatpush.msra.mxu0 0.0
    %1451 = vmatpush.msra.mxu0 0.0
    %1452 = vmatpush.msra.mxu0 0.0
    %1453 = vmatpush.msra.mxu0 0.0
    %1454 = vmatpush.msra.mxu0 0.0
    %1455 = vmatpush.msra.mxu0 0.0
    %1456 = vmatpush.msra.mxu0 %v774
    %1457 = vmatmul.f32.gmra.mxu0 %v1439
    %v1458 = vpop.f32.mrf.mxu0
    %v1459 = vadd.f32 2e-08, %v1458
    %1460 = vdwg.mxu0
    %v1461 = vrcp.pop %v1459
    %v1462 = vmul.f32 %v1459, %v1461
    %v1463 = vsub.f32 1.0, %v1462
    %v1464 = vmul.f32 %v1461, %v1463
    %v1465 = vadd.f32 %v1461, %v1464
    %vm1466 = vweird.f32 %v1459
    %vm1467 = vweird.f32 %v1461
    %vm1468 = vmor %vm1466, %vm1467
    %v1469 = vsel %vm1468, %v1461, %v1465
    %v1470 = vand.u32 2147483647, %v1459
    %vm1471 = vcmp.eq.f32.partialorder %v1470, 8.507059e+37
    %v1472 = vand.u32 %v1459, 2147483648
    %v1473 = vor.u32 1.1754944e-38, %v1472
    %v1474 = vsel %vm1471, %v1473, %v1469
    %v1475 = vmul.f32 %v1416, %v1474
    %v1476 = vmul.f32 %v774, %v1475
    %1477 = vmatpush.xpose.msra.mxu0 0.0
    %1478 = vmatpush.xpose.msra.mxu0 0.0
    %1479 = vmatpush.xpose.msra.mxu0 0.0
    %1480 = vmatpush.xpose.msra.mxu0 0.0
    %1481 = vmatpush.xpose.msra.mxu0 0.0
    %1482 = vmatpush.xpose.msra.mxu0 0.0
    %1483 = vmatpush.xpose.msra.mxu0 0.0
    %1484 = vmatpush.xpose.msra.mxu0 0.0
    %1485 = vmatpush.xpose.msra.mxu0 0.0
    %1486 = vmatpush.xpose.msra.mxu0 0.0
    %1487 = vmatpush.xpose.msra.mxu0 0.0
    %1488 = vmatpush.xpose.msra.mxu0 0.0
    %1489 = vmatpush.xpose.msra.mxu0 0.0
    %1490 = vmatpush.xpose.msra.mxu0 0.0
    %1491 = vmatpush.xpose.msra.mxu0 0.0
    %1492 = vmatpush.xpose.msra.mxu0 %v774
    %1493 = vmatmul.f32.gmra.mxu0 %v48
    %v1494 = vpop.f32.mrf.mxu0
    %v1495 = vadd.f32 0.0, %v1494
    %1496 = vmatmul.f32.gmra.mxu0 %v49
    %v1497 = vpop.f32.mrf.mxu0
    %v1498 = vadd.f32 0.0, %v1497
    %1499 = vmatmul.f32.gmra.mxu0 %v50
    %v1500 = vpop.f32.mrf.mxu0
    %v1501 = vadd.f32 0.0, %v1500
    %1502 = vmatmul.f32.gmra.mxu0 %v51
    %v1503 = vpop.f32.mrf.mxu0
    %v1504 = vadd.f32 0.0, %v1503
    %1505 = vmatmul.f32.gmra.mxu0 %v52
    %v1506 = vpop.f32.mrf.mxu0
    %v1507 = vadd.f32 0.0, %v1506
    %1508 = vmatmul.f32.gmra.mxu0 %v53
    %v1509 = vpop.f32.mrf.mxu0
    %v1510 = vadd.f32 0.0, %v1509
    %1511 = vmatmul.f32.gmra.mxu0 %v54
    %v1512 = vpop.f32.mrf.mxu0
    %v1513 = vadd.f32 0.0, %v1512
    %1514 = vmatmul.f32.gmra.mxu0 %v55
    %v1515 = vpop.f32.mrf.mxu0
    %v1516 = vadd.f32 0.0, %v1515
    %1517 = vmatmul.f32.gmra.mxu0 %v774
    %v1518 = vpop.f32.mrf.mxu0
    %v1519 = vadd.f32 0.0, %v1518
    %1520 = vdwg.mxu0
    %v1522 = vsel %vm149, %v1004, 0
    %v1525 = vsel %vm149, %v1005, 0
    %v1528 = vsel %vm149, %v1006, 0
    %v1531 = vsel %vm149, %v1007, 0
    %v1534 = vsel %vm149, %v1008, 0
    %v1537 = vsel %vm149, %v1009, 0
    %v1540 = vsel %vm149, %v1010, 0
    %v1543 = vsel %vm149, %v1011, 0
    %1545 = vmatpush.msra.mxu0 0.0
    %1546 = vmatpush.msra.mxu0 0.0
    %1547 = vmatpush.msra.mxu0 0.0
    %1548 = vmatpush.msra.mxu0 0.0
    %1549 = vmatpush.msra.mxu0 0.0
    %1550 = vmatpush.msra.mxu0 0.0
    %1551 = vmatpush.msra.mxu0 0.0
    %1552 = vmatpush.msra.mxu0 0.0
    %1553 = vmatpush.msra.mxu0 0.0
    %1554 = vmatpush.msra.mxu0 0.0
    %1555 = vmatpush.msra.mxu0 0.0
    %1556 = vmatpush.msra.mxu0 0.0
    %1557 = vmatpush.msra.mxu0 0.0
    %1558 = vmatpush.msra.mxu0 0.0
    %1559 = vmatpush.msra.mxu0 0.0
    %1560 = vmatpush.msra.mxu0 %v1519
    %1561 = vmatmul.f32.gmra.mxu0 %v1522
    %v1562 = vpop.f32.mrf.mxu0
    %v1563 = vadd.f32 2e-08, %v1562
    %1564 = vmatmul.f32.gmra.mxu0 %v1525
    %v1565 = vpop.f32.mrf.mxu0
    %v1566 = vadd.f32 2e-08, %v1565
    %1567 = vmatmul.f32.gmra.mxu0 %v1528
    %v1568 = vpop.f32.mrf.mxu0
    %v1569 = vadd.f32 2e-08, %v1568
    %1570 = vmatmul.f32.gmra.mxu0 %v1531
    %v1571 = vpop.f32.mrf.mxu0
    %v1572 = vadd.f32 2e-08, %v1571
    %1573 = vmatmul.f32.gmra.mxu0 %v1534
    %v1574 = vpop.f32.mrf.mxu0
    %v1575 = vadd.f32 2e-08, %v1574
    %1576 = vmatmul.f32.gmra.mxu0 %v1537
    %v1577 = vpop.f32.mrf.mxu0
    %v1578 = vadd.f32 2e-08, %v1577
    %1579 = vmatmul.f32.gmra.mxu0 %v1540
    %v1580 = vpop.f32.mrf.mxu0
    %v1581 = vadd.f32 2e-08, %v1580
    %1582 = vmatmul.f32.gmra.mxu0 %v1543
    %v1583 = vpop.f32.mrf.mxu0
    %v1584 = vadd.f32 2e-08, %v1583
    %1585 = vdwg.mxu0
    %v1586 = vrcp.pop %v1563
    %v1587 = vmul.f32 %v1563, %v1586
    %v1588 = vsub.f32 1.0, %v1587
    %v1589 = vmul.f32 %v1586, %v1588
    %v1590 = vadd.f32 %v1586, %v1589
    %vm1591 = vweird.f32 %v1563
    %vm1592 = vweird.f32 %v1586
    %vm1593 = vmor %vm1591, %vm1592
    %v1594 = vsel %vm1593, %v1586, %v1590
    %v1595 = vand.u32 2147483647, %v1563
    %vm1596 = vcmp.eq.f32.partialorder %v1595, 8.507059e+37
    %v1597 = vand.u32 %v1563, 2147483648
    %v1598 = vor.u32 1.1754944e-38, %v1597
    %v1599 = vsel %vm1596, %v1598, %v1594
    %v1600 = vmul.f32 %v1495, %v1599
    %v1601 = vrcp.pop %v1566
    %v1602 = vmul.f32 %v1566, %v1601
    %v1603 = vsub.f32 1.0, %v1602
    %v1604 = vmul.f32 %v1601, %v1603
    %v1605 = vadd.f32 %v1601, %v1604
    %vm1606 = vweird.f32 %v1566
    %vm1607 = vweird.f32 %v1601
    %vm1608 = vmor %vm1606, %vm1607
    %v1609 = vsel %vm1608, %v1601, %v1605
    %v1610 = vand.u32 2147483647, %v1566
    %vm1611 = vcmp.eq.f32.partialorder %v1610, 8.507059e+37
    %v1612 = vand.u32 %v1566, 2147483648
    %v1613 = vor.u32 1.1754944e-38, %v1612
    %v1614 = vsel %vm1611, %v1613, %v1609
    %v1615 = vmul.f32 %v1498, %v1614
    %v1616 = vrcp.pop %v1569
    %v1617 = vmul.f32 %v1569, %v1616
    %v1618 = vsub.f32 1.0, %v1617
    %v1619 = vmul.f32 %v1616, %v1618
    %v1620 = vadd.f32 %v1616, %v1619
    %vm1621 = vweird.f32 %v1569
    %vm1622 = vweird.f32 %v1616
    %vm1623 = vmor %vm1621, %vm1622
    %v1624 = vsel %vm1623, %v1616, %v1620
    %v1625 = vand.u32 2147483647, %v1569
    %vm1626 = vcmp.eq.f32.partialorder %v1625, 8.507059e+37
    %v1627 = vand.u32 %v1569, 2147483648
    %v1628 = vor.u32 1.1754944e-38, %v1627
    %v1629 = vsel %vm1626, %v1628, %v1624
    %v1630 = vmul.f32 %v1501, %v1629
    %v1631 = vrcp.pop %v1572
    %v1632 = vmul.f32 %v1572, %v1631
    %v1633 = vsub.f32 1.0, %v1632
    %v1634 = vmul.f32 %v1631, %v1633
    %v1635 = vadd.f32 %v1631, %v1634
    %vm1636 = vweird.f32 %v1572
    %vm1637 = vweird.f32 %v1631
    %vm1638 = vmor %vm1636, %vm1637
    %v1639 = vsel %vm1638, %v1631, %v1635
    %v1640 = vand.u32 2147483647, %v1572
    %vm1641 = vcmp.eq.f32.partialorder %v1640, 8.507059e+37
    %v1642 = vand.u32 %v1572, 2147483648
    %v1643 = vor.u32 1.1754944e-38, %v1642
    %v1644 = vsel %vm1641, %v1643, %v1639
    %v1645 = vmul.f32 %v1504, %v1644
    %v1646 = vrcp.pop %v1575
    %v1647 = vmul.f32 %v1575, %v1646
    %v1648 = vsub.f32 1.0, %v1647
    %v1649 = vmul.f32 %v1646, %v1648
    %v1650 = vadd.f32 %v1646, %v1649
    %vm1651 = vweird.f32 %v1575
    %vm1652 = vweird.f32 %v1646
    %vm1653 = vmor %vm1651, %vm1652
    %v1654 = vsel %vm1653, %v1646, %v1650
    %v1655 = vand.u32 2147483647, %v1575
    %vm1656 = vcmp.eq.f32.partialorder %v1655, 8.507059e+37
    %v1657 = vand.u32 %v1575, 2147483648
    %v1658 = vor.u32 1.1754944e-38, %v1657
    %v1659 = vsel %vm1656, %v1658, %v1654
    %v1660 = vmul.f32 %v1507, %v1659
    %v1661 = vrcp.pop %v1578
    %v1662 = vmul.f32 %v1578, %v1661
    %v1663 = vsub.f32 1.0, %v1662
    %v1664 = vmul.f32 %v1661, %v1663
    %v1665 = vadd.f32 %v1661, %v1664
    %vm1666 = vweird.f32 %v1578
    %vm1667 = vweird.f32 %v1661
    %vm1668 = vmor %vm1666, %vm1667
    %v1669 = vsel %vm1668, %v1661, %v1665
    %v1670 = vand.u32 2147483647, %v1578
    %vm1671 = vcmp.eq.f32.partialorder %v1670, 8.507059e+37
    %v1672 = vand.u32 %v1578, 2147483648
    %v1673 = vor.u32 1.1754944e-38, %v1672
    %v1674 = vsel %vm1671, %v1673, %v1669
    %v1675 = vmul.f32 %v1510, %v1674
    %v1676 = vrcp.pop %v1581
    %v1677 = vmul.f32 %v1581, %v1676
    %v1678 = vsub.f32 1.0, %v1677
    %v1679 = vmul.f32 %v1676, %v1678
    %v1680 = vadd.f32 %v1676, %v1679
    %vm1681 = vweird.f32 %v1581
    %vm1682 = vweird.f32 %v1676
    %vm1683 = vmor %vm1681, %vm1682
    %v1684 = vsel %vm1683, %v1676, %v1680
    %v1685 = vand.u32 2147483647, %v1581
    %vm1686 = vcmp.eq.f32.partialorder %v1685, 8.507059e+37
    %v1687 = vand.u32 %v1581, 2147483648
    %v1688 = vor.u32 1.1754944e-38, %v1687
    %v1689 = vsel %vm1686, %v1688, %v1684
    %v1690 = vmul.f32 %v1513, %v1689
    %v1691 = vrcp.pop %v1584
    %v1692 = vmul.f32 %v1584, %v1691
    %v1693 = vsub.f32 1.0, %v1692
    %v1694 = vmul.f32 %v1691, %v1693
    %v1695 = vadd.f32 %v1691, %v1694
    %vm1696 = vweird.f32 %v1584
    %vm1697 = vweird.f32 %v1691
    %vm1698 = vmor %vm1696, %vm1697
    %v1699 = vsel %vm1698, %v1691, %v1695
    %v1700 = vand.u32 2147483647, %v1584
    %vm1701 = vcmp.eq.f32.partialorder %v1700, 8.507059e+37
    %v1702 = vand.u32 %v1584, 2147483648
    %v1703 = vor.u32 1.1754944e-38, %v1702
    %v1704 = vsel %vm1701, %v1703, %v1699
    %v1705 = vmul.f32 %v1516, %v1704
    %v1706 = vmul.f32 %v1004, %v1600
    %v1707 = vmul.f32 %v1005, %v1615
    %v1708 = vmul.f32 %v1006, %v1630
    %v1709 = vmul.f32 %v1007, %v1645
    %v1710 = vmul.f32 %v1008, %v1660
    %v1711 = vmul.f32 %v1009, %v1675
    %v1712 = vmul.f32 %v1010, %v1690
    %v1713 = vmul.f32 %v1011, %v1705
    %1714 = vxpose.xlu0.b32.start [1/16] %v1355, 128
    %1715 = vxpose.xlu0.b32.cont [2/16] %v1356, 128
    %1716 = vxpose.xlu0.b32.cont [3/16] %v1357, 128
    %1717 = vxpose.xlu0.b32.cont [4/16] %v1358, 128
    %1718 = vxpose.xlu0.b32.cont [5/16] %v1359, 128
    %1719 = vxpose.xlu0.b32.cont [6/16] %v1360, 128
    %1720 = vxpose.xlu0.b32.cont [7/16] %v1361, 128
    %1721 = vxpose.xlu0.b32.cont [8/16] %v1362, 128
    %1722 = vxpose.xlu0.b32.cont [9/16] 0.0, 128
    %1723 = vxpose.xlu0.b32.cont [10/16] 0.0, 128
    %1724 = vxpose.xlu0.b32.cont [11/16] 0.0, 128
    %1725 = vxpose.xlu0.b32.cont [12/16] 0.0, 128
    %1726 = vxpose.xlu0.b32.cont [13/16] 0.0, 128
    %1727 = vxpose.xlu0.b32.cont [14/16] 0.0, 128
    %1728 = vxpose.xlu0.b32.cont [15/16] 0.0, 128
    %1729 = vxpose.xlu0.b32.end [16/16] 0.0, 128
    %v1730 = vpop.trf.xlu0
    %v1731 = vpop.trf.xlu0
    %v1732 = vpop.trf.xlu0
    %v1733 = vpop.trf.xlu0
    %v1734 = vpop.trf.xlu0
    %v1735 = vpop.trf.xlu0
    %v1736 = vpop.trf.xlu0
    %v1737 = vpop.trf.xlu0
    %v1738 = vpop.trf.xlu0
    %v1739 = vpop.trf.xlu0
    %v1740 = vpop.trf.xlu0
    %v1741 = vpop.trf.xlu0
    %v1742 = vpop.trf.xlu0
    %v1743 = vpop.trf.xlu0
    %v1744 = vpop.trf.xlu0
    %v1745 = vpop.trf.xlu0
    %v1747 = vsel %vm105, %v1730, 0
    %1749 = vmatpush.msra.mxu0 0.0
    %1750 = vmatpush.msra.mxu0 0.0
    %1751 = vmatpush.msra.mxu0 0.0
    %1752 = vmatpush.msra.mxu0 0.0
    %1753 = vmatpush.msra.mxu0 0.0
    %1754 = vmatpush.msra.mxu0 0.0
    %1755 = vmatpush.msra.mxu0 0.0
    %1756 = vmatpush.msra.mxu0 0.0
    %1757 = vmatpush.msra.mxu0 %v72
    %1758 = vmatpush.msra.mxu0 %v71
    %1759 = vmatpush.msra.mxu0 %v70
    %1760 = vmatpush.msra.mxu0 %v69
    %1761 = vmatpush.msra.mxu0 %v68
    %1762 = vmatpush.msra.mxu0 %v67
    %1763 = vmatpush.msra.mxu0 %v66
    %1764 = vmatpush.msra.mxu0 %v65
    %1765 = vmatmul.f32.gmra.mxu0 %v1747
    %v1766 = vpop.f32.mrf.mxu0
    %v1767 = vadd.f32 0.0, %v1766
    %1768 = vdwg.mxu0
    %1769 = vmatpush.msra.mxu0 0.0
    %1770 = vmatpush.msra.mxu0 0.0
    %1771 = vmatpush.msra.mxu0 0.0
    %1772 = vmatpush.msra.mxu0 0.0
    %1773 = vmatpush.msra.mxu0 0.0
    %1774 = vmatpush.msra.mxu0 0.0
    %1775 = vmatpush.msra.mxu0 0.0
    %1776 = vmatpush.msra.mxu0 0.0
    %1777 = vmatpush.msra.mxu0 %v1362
    %1778 = vmatpush.msra.mxu0 %v1361
    %1779 = vmatpush.msra.mxu0 %v1360
    %1780 = vmatpush.msra.mxu0 %v1359
    %1781 = vmatpush.msra.mxu0 %v1358
    %1782 = vmatpush.msra.mxu0 %v1357
    %1783 = vmatpush.msra.mxu0 %v1356
    %1784 = vmatpush.msra.mxu0 %v1355
    %1785 = vmatmul.f32.gmra.mxu0 %v1747
    %v1786 = vpop.f32.mrf.mxu0
    %v1787 = vadd.f32 0.0, %v1786
    %1788 = vdwg.mxu0
    %v1790 = vsel %vm149, %v1787, 0
    %1792 = vmatpush.msra.mxu0 0.0
    %1793 = vmatpush.msra.mxu0 0.0
    %1794 = vmatpush.msra.mxu0 0.0
    %1795 = vmatpush.msra.mxu0 0.0
    %1796 = vmatpush.msra.mxu0 0.0
    %1797 = vmatpush.msra.mxu0 0.0
    %1798 = vmatpush.msra.mxu0 0.0
    %1799 = vmatpush.msra.mxu0 0.0
    %1800 = vmatpush.msra.mxu0 0.0
    %1801 = vmatpush.msra.mxu0 0.0
    %1802 = vmatpush.msra.mxu0 0.0
    %1803 = vmatpush.msra.mxu0 0.0
    %1804 = vmatpush.msra.mxu0 0.0
    %1805 = vmatpush.msra.mxu0 0.0
    %1806 = vmatpush.msra.mxu0 0.0
    %1807 = vmatpush.msra.mxu0 %v1125
    %1808 = vmatmul.f32.gmra.mxu0 %v1790
    %v1809 = vpop.f32.mrf.mxu0
    %v1810 = vadd.f32 2e-08, %v1809
    %1811 = vdwg.mxu0
    %v1812 = vrcp.pop %v1810
    %v1813 = vmul.f32 %v1810, %v1812
    %v1814 = vsub.f32 1.0, %v1813
    %v1815 = vmul.f32 %v1812, %v1814
    %v1816 = vadd.f32 %v1812, %v1815
    %vm1817 = vweird.f32 %v1810
    %vm1818 = vweird.f32 %v1812
    %vm1819 = vmor %vm1817, %vm1818
    %v1820 = vsel %vm1819, %v1812, %v1816
    %v1821 = vand.u32 2147483647, %v1810
    %vm1822 = vcmp.eq.f32.partialorder %v1821, 8.507059e+37
    %v1823 = vand.u32 %v1810, 2147483648
    %v1824 = vor.u32 1.1754944e-38, %v1823
    %v1825 = vsel %vm1822, %v1824, %v1820
    %v1826 = vmul.f32 %v1767, %v1825
    %v1827 = vmul.f32 %v1125, %v1826
    %1828 = vmatpush.xpose.msra.mxu0 0.0
    %1829 = vmatpush.xpose.msra.mxu0 0.0
    %1830 = vmatpush.xpose.msra.mxu0 0.0
    %1831 = vmatpush.xpose.msra.mxu0 0.0
    %1832 = vmatpush.xpose.msra.mxu0 0.0
    %1833 = vmatpush.xpose.msra.mxu0 0.0
    %1834 = vmatpush.xpose.msra.mxu0 0.0
    %1835 = vmatpush.xpose.msra.mxu0 0.0
    %1836 = vmatpush.xpose.msra.mxu0 0.0
    %1837 = vmatpush.xpose.msra.mxu0 0.0
    %1838 = vmatpush.xpose.msra.mxu0 0.0
    %1839 = vmatpush.xpose.msra.mxu0 0.0
    %1840 = vmatpush.xpose.msra.mxu0 0.0
    %1841 = vmatpush.xpose.msra.mxu0 0.0
    %1842 = vmatpush.xpose.msra.mxu0 0.0
    %1843 = vmatpush.xpose.msra.mxu0 %v1125
    %1844 = vmatmul.f32.gmra.mxu0 %v65
    %v1845 = vpop.f32.mrf.mxu0
    %v1846 = vadd.f32 0.0, %v1845
    %1847 = vmatmul.f32.gmra.mxu0 %v66
    %v1848 = vpop.f32.mrf.mxu0
    %v1849 = vadd.f32 0.0, %v1848
    %1850 = vmatmul.f32.gmra.mxu0 %v67
    %v1851 = vpop.f32.mrf.mxu0
    %v1852 = vadd.f32 0.0, %v1851
    %1853 = vmatmul.f32.gmra.mxu0 %v68
    %v1854 = vpop.f32.mrf.mxu0
    %v1855 = vadd.f32 0.0, %v1854
    %1856 = vmatmul.f32.gmra.mxu0 %v69
    %v1857 = vpop.f32.mrf.mxu0
    %v1858 = vadd.f32 0.0, %v1857
    %1859 = vmatmul.f32.gmra.mxu0 %v70
    %v1860 = vpop.f32.mrf.mxu0
    %v1861 = vadd.f32 0.0, %v1860
    %1862 = vmatmul.f32.gmra.mxu0 %v71
    %v1863 = vpop.f32.mrf.mxu0
    %v1864 = vadd.f32 0.0, %v1863
    %1865 = vmatmul.f32.gmra.mxu0 %v72
    %v1866 = vpop.f32.mrf.mxu0
    %v1867 = vadd.f32 0.0, %v1866
    %1868 = vmatmul.f32.gmra.mxu0 %v1125
    %v1869 = vpop.f32.mrf.mxu0
    %v1870 = vadd.f32 0.0, %v1869
    %1871 = vdwg.mxu0
    %v1873 = vsel %vm149, %v1355, 0
    %v1876 = vsel %vm149, %v1356, 0
    %v1879 = vsel %vm149, %v1357, 0
    %v1882 = vsel %vm149, %v1358, 0
    %v1885 = vsel %vm149, %v1359, 0
    %v1888 = vsel %vm149, %v1360, 0
    %v1891 = vsel %vm149, %v1361, 0
    %v1894 = vsel %vm149, %v1362, 0
    %1896 = vmatpush.msra.mxu0 0.0
    %1897 = vmatpush.msra.mxu0 0.0
    %1898 = vmatpush.msra.mxu0 0.0
    %1899 = vmatpush.msra.mxu0 0.0
    %1900 = vmatpush.msra.mxu0 0.0
    %1901 = vmatpush.msra.mxu0 0.0
    %1902 = vmatpush.msra.mxu0 0.0
    %1903 = vmatpush.msra.mxu0 0.0
    %1904 = vmatpush.msra.mxu0 0.0
    %1905 = vmatpush.msra.mxu0 0.0
    %1906 = vmatpush.msra.mxu0 0.0
    %1907 = vmatpush.msra.mxu0 0.0
    %1908 = vmatpush.msra.mxu0 0.0
    %1909 = vmatpush.msra.mxu0 0.0
    %1910 = vmatpush.msra.mxu0 0.0
    %1911 = vmatpush.msra.mxu0 %v1870
    %1912 = vmatmul.f32.gmra.mxu0 %v1873
    %v1913 = vpop.f32.mrf.mxu0
    %v1914 = vadd.f32 2e-08, %v1913
    %1915 = vmatmul.f32.gmra.mxu0 %v1876
    %v1916 = vpop.f32.mrf.mxu0
    %v1917 = vadd.f32 2e-08, %v1916
    %1918 = vmatmul.f32.gmra.mxu0 %v1879
    %v1919 = vpop.f32.mrf.mxu0
    %v1920 = vadd.f32 2e-08, %v1919
    %1921 = vmatmul.f32.gmra.mxu0 %v1882
    %v1922 = vpop.f32.mrf.mxu0
    %v1923 = vadd.f32 2e-08, %v1922
    %1924 = vmatmul.f32.gmra.mxu0 %v1885
    %v1925 = vpop.f32.mrf.mxu0
    %v1926 = vadd.f32 2e-08, %v1925
    %1927 = vmatmul.f32.gmra.mxu0 %v1888
    %v1928 = vpop.f32.mrf.mxu0
    %v1929 = vadd.f32 2e-08, %v1928
    %1930 = vmatmul.f32.gmra.mxu0 %v1891
    %v1931 = vpop.f32.mrf.mxu0
    %v1932 = vadd.f32 2e-08, %v1931
    %1933 = vmatmul.f32.gmra.mxu0 %v1894
    %v1934 = vpop.f32.mrf.mxu0
    %v1935 = vadd.f32 2e-08, %v1934
    %1936 = vdwg.mxu0
    %v1937 = vrcp.pop %v1914
    %v1938 = vmul.f32 %v1914, %v1937
    %v1939 = vsub.f32 1.0, %v1938
    %v1940 = vmul.f32 %v1937, %v1939
    %v1941 = vadd.f32 %v1937, %v1940
    %vm1942 = vweird.f32 %v1914
    %vm1943 = vweird.f32 %v1937
    %vm1944 = vmor %vm1942, %vm1943
    %v1945 = vsel %vm1944, %v1937, %v1941
    %v1946 = vand.u32 2147483647, %v1914
    %vm1947 = vcmp.eq.f32.partialorder %v1946, 8.507059e+37
    %v1948 = vand.u32 %v1914, 2147483648
    %v1949 = vor.u32 1.1754944e-38, %v1948
    %v1950 = vsel %vm1947, %v1949, %v1945
    %v1951 = vmul.f32 %v1846, %v1950
    %v1952 = vrcp.pop %v1917
    %v1953 = vmul.f32 %v1917, %v1952
    %v1954 = vsub.f32 1.0, %v1953
    %v1955 = vmul.f32 %v1952, %v1954
    %v1956 = vadd.f32 %v1952, %v1955
    %vm1957 = vweird.f32 %v1917
    %vm1958 = vweird.f32 %v1952
    %vm1959 = vmor %vm1957, %vm1958
    %v1960 = vsel %vm1959, %v1952, %v1956
    %v1961 = vand.u32 2147483647, %v1917
    %vm1962 = vcmp.eq.f32.partialorder %v1961, 8.507059e+37
    %v1963 = vand.u32 %v1917, 2147483648
    %v1964 = vor.u32 1.1754944e-38, %v1963
    %v1965 = vsel %vm1962, %v1964, %v1960
    %v1966 = vmul.f32 %v1849, %v1965
    %v1967 = vrcp.pop %v1920
    %v1968 = vmul.f32 %v1920, %v1967
    %v1969 = vsub.f32 1.0, %v1968
    %v1970 = vmul.f32 %v1967, %v1969
    %v1971 = vadd.f32 %v1967, %v1970
    %vm1972 = vweird.f32 %v1920
    %vm1973 = vweird.f32 %v1967
    %vm1974 = vmor %vm1972, %vm1973
    %v1975 = vsel %vm1974, %v1967, %v1971
    %v1976 = vand.u32 2147483647, %v1920
    %vm1977 = vcmp.eq.f32.partialorder %v1976, 8.507059e+37
    %v1978 = vand.u32 %v1920, 2147483648
    %v1979 = vor.u32 1.1754944e-38, %v1978
    %v1980 = vsel %vm1977, %v1979, %v1975
    %v1981 = vmul.f32 %v1852, %v1980
    %v1982 = vrcp.pop %v1923
    %v1983 = vmul.f32 %v1923, %v1982
    %v1984 = vsub.f32 1.0, %v1983
    %v1985 = vmul.f32 %v1982, %v1984
    %v1986 = vadd.f32 %v1982, %v1985
    %vm1987 = vweird.f32 %v1923
    %vm1988 = vweird.f32 %v1982
    %vm1989 = vmor %vm1987, %vm1988
    %v1990 = vsel %vm1989, %v1982, %v1986
    %v1991 = vand.u32 2147483647, %v1923
    %vm1992 = vcmp.eq.f32.partialorder %v1991, 8.507059e+37
    %v1993 = vand.u32 %v1923, 2147483648
    %v1994 = vor.u32 1.1754944e-38, %v1993
    %v1995 = vsel %vm1992, %v1994, %v1990
    %v1996 = vmul.f32 %v1855, %v1995
    %v1997 = vrcp.pop %v1926
    %v1998 = vmul.f32 %v1926, %v1997
    %v1999 = vsub.f32 1.0, %v1998
    %v2000 = vmul.f32 %v1997, %v1999
    %v2001 = vadd.f32 %v1997, %v2000
    %vm2002 = vweird.f32 %v1926
    %vm2003 = vweird.f32 %v1997
    %vm2004 = vmor %vm2002, %vm2003
    %v2005 = vsel %vm2004, %v1997, %v2001
    %v2006 = vand.u32 2147483647, %v1926
    %vm2007 = vcmp.eq.f32.partialorder %v2006, 8.507059e+37
    %v2008 = vand.u32 %v1926, 2147483648
    %v2009 = vor.u32 1.1754944e-38, %v2008
    %v2010 = vsel %vm2007, %v2009, %v2005
    %v2011 = vmul.f32 %v1858, %v2010
    %v2012 = vrcp.pop %v1929
    %v2013 = vmul.f32 %v1929, %v2012
    %v2014 = vsub.f32 1.0, %v2013
    %v2015 = vmul.f32 %v2012, %v2014
    %v2016 = vadd.f32 %v2012, %v2015
    %vm2017 = vweird.f32 %v1929
    %vm2018 = vweird.f32 %v2012
    %vm2019 = vmor %vm2017, %vm2018
    %v2020 = vsel %vm2019, %v2012, %v2016
    %v2021 = vand.u32 2147483647, %v1929
    %vm2022 = vcmp.eq.f32.partialorder %v2021, 8.507059e+37
    %v2023 = vand.u32 %v1929, 2147483648
    %v2024 = vor.u32 1.1754944e-38, %v2023
    %v2025 = vsel %vm2022, %v2024, %v2020
    %v2026 = vmul.f32 %v1861, %v2025
    %v2027 = vrcp.pop %v1932
    %v2028 = vmul.f32 %v1932, %v2027
    %v2029 = vsub.f32 1.0, %v2028
    %v2030 = vmul.f32 %v2027, %v2029
    %v2031 = vadd.f32 %v2027, %v2030
    %vm2032 = vweird.f32 %v1932
    %vm2033 = vweird.f32 %v2027
    %vm2034 = vmor %vm2032, %vm2033
    %v2035 = vsel %vm2034, %v2027, %v2031
    %v2036 = vand.u32 2147483647, %v1932
    %vm2037 = vcmp.eq.f32.partialorder %v2036, 8.507059e+37
    %v2038 = vand.u32 %v1932, 2147483648
    %v2039 = vor.u32 1.1754944e-38, %v2038
    %v2040 = vsel %vm2037, %v2039, %v2035
    %v2041 = vmul.f32 %v1864, %v2040
    %v2042 = vrcp.pop %v1935
    %v2043 = vmul.f32 %v1935, %v2042
    %v2044 = vsub.f32 1.0, %v2043
    %v2045 = vmul.f32 %v2042, %v2044
    %v2046 = vadd.f32 %v2042, %v2045
    %vm2047 = vweird.f32 %v1935
    %vm2048 = vweird.f32 %v2042
    %vm2049 = vmor %vm2047, %vm2048
    %v2050 = vsel %vm2049, %v2042, %v2046
    %v2051 = vand.u32 2147483647, %v1935
    %vm2052 = vcmp.eq.f32.partialorder %v2051, 8.507059e+37
    %v2053 = vand.u32 %v1935, 2147483648
    %v2054 = vor.u32 1.1754944e-38, %v2053
    %v2055 = vsel %vm2052, %v2054, %v2050
    %v2056 = vmul.f32 %v1867, %v2055
    %v2057 = vmul.f32 %v1355, %v1951
    %v2058 = vmul.f32 %v1356, %v1966
    %v2059 = vmul.f32 %v1357, %v1981
    %v2060 = vmul.f32 %v1358, %v1996
    %v2061 = vmul.f32 %v1359, %v2011
    %v2062 = vmul.f32 %v1360, %v2026
    %v2063 = vmul.f32 %v1361, %v2041
    %v2064 = vmul.f32 %v1362, %v2056
    %2065 = vxpose.xlu0.b32.start [1/16] %v1706, 128
    %2066 = vxpose.xlu0.b32.cont [2/16] %v1707, 128
    %2067 = vxpose.xlu0.b32.cont [3/16] %v1708, 128
    %2068 = vxpose.xlu0.b32.cont [4/16] %v1709, 128
    %2069 = vxpose.xlu0.b32.cont [5/16] %v1710, 128
    %2070 = vxpose.xlu0.b32.cont [6/16] %v1711, 128
    %2071 = vxpose.xlu0.b32.cont [7/16] %v1712, 128
    %2072 = vxpose.xlu0.b32.cont [8/16] %v1713, 128
    %2073 = vxpose.xlu0.b32.cont [9/16] 0.0, 128
    %2074 = vxpose.xlu0.b32.cont [10/16] 0.0, 128
    %2075 = vxpose.xlu0.b32.cont [11/16] 0.0, 128
    %2076 = vxpose.xlu0.b32.cont [12/16] 0.0, 128
    %2077 = vxpose.xlu0.b32.cont [13/16] 0.0, 128
    %2078 = vxpose.xlu0.b32.cont [14/16] 0.0, 128
    %2079 = vxpose.xlu0.b32.cont [15/16] 0.0, 128
    %2080 = vxpose.xlu0.b32.end [16/16] 0.0, 128
    %v2081 = vpop.trf.xlu0
    %v2082 = vpop.trf.xlu0
    %v2083 = vpop.trf.xlu0
    %v2084 = vpop.trf.xlu0
    %v2085 = vpop.trf.xlu0
    %v2086 = vpop.trf.xlu0
    %v2087 = vpop.trf.xlu0
    %v2088 = vpop.trf.xlu0
    %v2089 = vpop.trf.xlu0
    %v2090 = vpop.trf.xlu0
    %v2091 = vpop.trf.xlu0
    %v2092 = vpop.trf.xlu0
    %v2093 = vpop.trf.xlu0
    %v2094 = vpop.trf.xlu0
    %v2095 = vpop.trf.xlu0
    %v2096 = vpop.trf.xlu0
    %v2098 = vsel %vm105, %v2081, 0
    %2100 = vmatpush.msra.mxu0 0.0
    %2101 = vmatpush.msra.mxu0 0.0
    %2102 = vmatpush.msra.mxu0 0.0
    %2103 = vmatpush.msra.mxu0 0.0
    %2104 = vmatpush.msra.mxu0 0.0
    %2105 = vmatpush.msra.mxu0 0.0
    %2106 = vmatpush.msra.mxu0 0.0
    %2107 = vmatpush.msra.mxu0 0.0
    %2108 = vmatpush.msra.mxu0 %v55
    %2109 = vmatpush.msra.mxu0 %v54
    %2110 = vmatpush.msra.mxu0 %v53
    %2111 = vmatpush.msra.mxu0 %v52
    %2112 = vmatpush.msra.mxu0 %v51
    %2113 = vmatpush.msra.mxu0 %v50
    %2114 = vmatpush.msra.mxu0 %v49
    %2115 = vmatpush.msra.mxu0 %v48
    %2116 = vmatmul.f32.gmra.mxu0 %v2098
    %v2117 = vpop.f32.mrf.mxu0
    %v2118 = vadd.f32 0.0, %v2117
    %2119 = vdwg.mxu0
    %2120 = vmatpush.msra.mxu0 0.0
    %2121 = vmatpush.msra.mxu0 0.0
    %2122 = vmatpush.msra.mxu0 0.0
    %2123 = vmatpush.msra.mxu0 0.0
    %2124 = vmatpush.msra.mxu0 0.0
    %2125 = vmatpush.msra.mxu0 0.0
    %2126 = vmatpush.msra.mxu0 0.0
    %2127 = vmatpush.msra.mxu0 0.0
    %2128 = vmatpush.msra.mxu0 %v1713
    %2129 = vmatpush.msra.mxu0 %v1712
    %2130 = vmatpush.msra.mxu0 %v1711
    %2131 = vmatpush.msra.mxu0 %v1710
    %2132 = vmatpush.msra.mxu0 %v1709
    %2133 = vmatpush.msra.mxu0 %v1708
    %2134 = vmatpush.msra.mxu0 %v1707
    %2135 = vmatpush.msra.mxu0 %v1706
    %2136 = vmatmul.f32.gmra.mxu0 %v2098
    %v2137 = vpop.f32.mrf.mxu0
    %v2138 = vadd.f32 0.0, %v2137
    %2139 = vdwg.mxu0
    %v2141 = vsel %vm149, %v2138, 0
    %2143 = vmatpush.msra.mxu0 0.0
    %2144 = vmatpush.msra.mxu0 0.0
    %2145 = vmatpush.msra.mxu0 0.0
    %2146 = vmatpush.msra.mxu0 0.0
    %2147 = vmatpush.msra.mxu0 0.0
    %2148 = vmatpush.msra.mxu0 0.0
    %2149 = vmatpush.msra.mxu0 0.0
    %2150 = vmatpush.msra.mxu0 0.0
    %2151 = vmatpush.msra.mxu0 0.0
    %2152 = vmatpush.msra.mxu0 0.0
    %2153 = vmatpush.msra.mxu0 0.0
    %2154 = vmatpush.msra.mxu0 0.0
    %2155 = vmatpush.msra.mxu0 0.0
    %2156 = vmatpush.msra.mxu0 0.0
    %2157 = vmatpush.msra.mxu0 0.0
    %2158 = vmatpush.msra.mxu0 %v1476
    %2159 = vmatmul.f32.gmra.mxu0 %v2141
    %v2160 = vpop.f32.mrf.mxu0
    %v2161 = vadd.f32 2e-08, %v2160
    %2162 = vdwg.mxu0
    %v2163 = vrcp.pop %v2161
    %v2164 = vmul.f32 %v2161, %v2163
    %v2165 = vsub.f32 1.0, %v2164
    %v2166 = vmul.f32 %v2163, %v2165
    %v2167 = vadd.f32 %v2163, %v2166
    %vm2168 = vweird.f32 %v2161
    %vm2169 = vweird.f32 %v2163
    %vm2170 = vmor %vm2168, %vm2169
    %v2171 = vsel %vm2170, %v2163, %v2167
    %v2172 = vand.u32 2147483647, %v2161
    %vm2173 = vcmp.eq.f32.partialorder %v2172, 8.507059e+37
    %v2174 = vand.u32 %v2161, 2147483648
    %v2175 = vor.u32 1.1754944e-38, %v2174
    %v2176 = vsel %vm2173, %v2175, %v2171
    %v2177 = vmul.f32 %v2118, %v2176
    %v2178 = vmul.f32 %v1476, %v2177
    %2179 = vmatpush.xpose.msra.mxu0 0.0
    %2180 = vmatpush.xpose.msra.mxu0 0.0
    %2181 = vmatpush.xpose.msra.mxu0 0.0
    %2182 = vmatpush.xpose.msra.mxu0 0.0
    %2183 = vmatpush.xpose.msra.mxu0 0.0
    %2184 = vmatpush.xpose.msra.mxu0 0.0
    %2185 = vmatpush.xpose.msra.mxu0 0.0
    %2186 = vmatpush.xpose.msra.mxu0 0.0
    %2187 = vmatpush.xpose.msra.mxu0 0.0
    %2188 = vmatpush.xpose.msra.mxu0 0.0
    %2189 = vmatpush.xpose.msra.mxu0 0.0
    %2190 = vmatpush.xpose.msra.mxu0 0.0
    %2191 = vmatpush.xpose.msra.mxu0 0.0
    %2192 = vmatpush.xpose.msra.mxu0 0.0
    %2193 = vmatpush.xpose.msra.mxu0 0.0
    %2194 = vmatpush.xpose.msra.mxu0 %v1476
    %2195 = vmatmul.f32.gmra.mxu0 %v48
    %v2196 = vpop.f32.mrf.mxu0
    %v2197 = vadd.f32 0.0, %v2196
    %2198 = vmatmul.f32.gmra.mxu0 %v49
    %v2199 = vpop.f32.mrf.mxu0
    %v2200 = vadd.f32 0.0, %v2199
    %2201 = vmatmul.f32.gmra.mxu0 %v50
    %v2202 = vpop.f32.mrf.mxu0
    %v2203 = vadd.f32 0.0, %v2202
    %2204 = vmatmul.f32.gmra.mxu0 %v51
    %v2205 = vpop.f32.mrf.mxu0
    %v2206 = vadd.f32 0.0, %v2205
    %2207 = vmatmul.f32.gmra.mxu0 %v52
    %v2208 = vpop.f32.mrf.mxu0
    %v2209 = vadd.f32 0.0, %v2208
    %2210 = vmatmul.f32.gmra.mxu0 %v53
    %v2211 = vpop.f32.mrf.mxu0
    %v2212 = vadd.f32 0.0, %v2211
    %2213 = vmatmul.f32.gmra.mxu0 %v54
    %v2214 = vpop.f32.mrf.mxu0
    %v2215 = vadd.f32 0.0, %v2214
    %2216 = vmatmul.f32.gmra.mxu0 %v55
    %v2217 = vpop.f32.mrf.mxu0
    %v2218 = vadd.f32 0.0, %v2217
    %2219 = vmatmul.f32.gmra.mxu0 %v1476
    %v2220 = vpop.f32.mrf.mxu0
    %v2221 = vadd.f32 0.0, %v2220
    %2222 = vdwg.mxu0
    %v2224 = vsel %vm149, %v1706, 0
    %v2227 = vsel %vm149, %v1707, 0
    %v2230 = vsel %vm149, %v1708, 0
    %v2233 = vsel %vm149, %v1709, 0
    %v2236 = vsel %vm149, %v1710, 0
    %v2239 = vsel %vm149, %v1711, 0
    %v2242 = vsel %vm149, %v1712, 0
    %v2245 = vsel %vm149, %v1713, 0
    %2247 = vmatpush.msra.mxu0 0.0
    %2248 = vmatpush.msra.mxu0 0.0
    %2249 = vmatpush.msra.mxu0 0.0
    %2250 = vmatpush.msra.mxu0 0.0
    %2251 = vmatpush.msra.mxu0 0.0
    %2252 = vmatpush.msra.mxu0 0.0
    %2253 = vmatpush.msra.mxu0 0.0
    %2254 = vmatpush.msra.mxu0 0.0
    %2255 = vmatpush.msra.mxu0 0.0
    %2256 = vmatpush.msra.mxu0 0.0
    %2257 = vmatpush.msra.mxu0 0.0
    %2258 = vmatpush.msra.mxu0 0.0
    %2259 = vmatpush.msra.mxu0 0.0
    %2260 = vmatpush.msra.mxu0 0.0
    %2261 = vmatpush.msra.mxu0 0.0
    %2262 = vmatpush.msra.mxu0 %v2221
    %2263 = vmatmul.f32.gmra.mxu0 %v2224
    %v2264 = vpop.f32.mrf.mxu0
    %v2265 = vadd.f32 2e-08, %v2264
    %2266 = vmatmul.f32.gmra.mxu0 %v2227
    %v2267 = vpop.f32.mrf.mxu0
    %v2268 = vadd.f32 2e-08, %v2267
    %2269 = vmatmul.f32.gmra.mxu0 %v2230
    %v2270 = vpop.f32.mrf.mxu0
    %v2271 = vadd.f32 2e-08, %v2270
    %2272 = vmatmul.f32.gmra.mxu0 %v2233
    %v2273 = vpop.f32.mrf.mxu0
    %v2274 = vadd.f32 2e-08, %v2273
    %2275 = vmatmul.f32.gmra.mxu0 %v2236
    %v2276 = vpop.f32.mrf.mxu0
    %v2277 = vadd.f32 2e-08, %v2276
    %2278 = vmatmul.f32.gmra.mxu0 %v2239
    %v2279 = vpop.f32.mrf.mxu0
    %v2280 = vadd.f32 2e-08, %v2279
    %2281 = vmatmul.f32.gmra.mxu0 %v2242
    %v2282 = vpop.f32.mrf.mxu0
    %v2283 = vadd.f32 2e-08, %v2282
    %2284 = vmatmul.f32.gmra.mxu0 %v2245
    %v2285 = vpop.f32.mrf.mxu0
    %v2286 = vadd.f32 2e-08, %v2285
    %2287 = vdwg.mxu0
    %v2288 = vrcp.pop %v2265
    %v2289 = vmul.f32 %v2265, %v2288
    %v2290 = vsub.f32 1.0, %v2289
    %v2291 = vmul.f32 %v2288, %v2290
    %v2292 = vadd.f32 %v2288, %v2291
    %vm2293 = vweird.f32 %v2265
    %vm2294 = vweird.f32 %v2288
    %vm2295 = vmor %vm2293, %vm2294
    %v2296 = vsel %vm2295, %v2288, %v2292
    %v2297 = vand.u32 2147483647, %v2265
    %vm2298 = vcmp.eq.f32.partialorder %v2297, 8.507059e+37
    %v2299 = vand.u32 %v2265, 2147483648
    %v2300 = vor.u32 1.1754944e-38, %v2299
    %v2301 = vsel %vm2298, %v2300, %v2296
    %v2302 = vmul.f32 %v2197, %v2301
    %v2303 = vrcp.pop %v2268
    %v2304 = vmul.f32 %v2268, %v2303
    %v2305 = vsub.f32 1.0, %v2304
    %v2306 = vmul.f32 %v2303, %v2305
    %v2307 = vadd.f32 %v2303, %v2306
    %vm2308 = vweird.f32 %v2268
    %vm2309 = vweird.f32 %v2303
    %vm2310 = vmor %vm2308, %vm2309
    %v2311 = vsel %vm2310, %v2303, %v2307
    %v2312 = vand.u32 2147483647, %v2268
    %vm2313 = vcmp.eq.f32.partialorder %v2312, 8.507059e+37
    %v2314 = vand.u32 %v2268, 2147483648
    %v2315 = vor.u32 1.1754944e-38, %v2314
    %v2316 = vsel %vm2313, %v2315, %v2311
    %v2317 = vmul.f32 %v2200, %v2316
    %v2318 = vrcp.pop %v2271
    %v2319 = vmul.f32 %v2271, %v2318
    %v2320 = vsub.f32 1.0, %v2319
    %v2321 = vmul.f32 %v2318, %v2320
    %v2322 = vadd.f32 %v2318, %v2321
    %vm2323 = vweird.f32 %v2271
    %vm2324 = vweird.f32 %v2318
    %vm2325 = vmor %vm2323, %vm2324
    %v2326 = vsel %vm2325, %v2318, %v2322
    %v2327 = vand.u32 2147483647, %v2271
    %vm2328 = vcmp.eq.f32.partialorder %v2327, 8.507059e+37
    %v2329 = vand.u32 %v2271, 2147483648
    %v2330 = vor.u32 1.1754944e-38, %v2329
    %v2331 = vsel %vm2328, %v2330, %v2326
    %v2332 = vmul.f32 %v2203, %v2331
    %v2333 = vrcp.pop %v2274
    %v2334 = vmul.f32 %v2274, %v2333
    %v2335 = vsub.f32 1.0, %v2334
    %v2336 = vmul.f32 %v2333, %v2335
    %v2337 = vadd.f32 %v2333, %v2336
    %vm2338 = vweird.f32 %v2274
    %vm2339 = vweird.f32 %v2333
    %vm2340 = vmor %vm2338, %vm2339
    %v2341 = vsel %vm2340, %v2333, %v2337
    %v2342 = vand.u32 2147483647, %v2274
    %vm2343 = vcmp.eq.f32.partialorder %v2342, 8.507059e+37
    %v2344 = vand.u32 %v2274, 2147483648
    %v2345 = vor.u32 1.1754944e-38, %v2344
    %v2346 = vsel %vm2343, %v2345, %v2341
    %v2347 = vmul.f32 %v2206, %v2346
    %v2348 = vrcp.pop %v2277
    %v2349 = vmul.f32 %v2277, %v2348
    %v2350 = vsub.f32 1.0, %v2349
    %v2351 = vmul.f32 %v2348, %v2350
    %v2352 = vadd.f32 %v2348, %v2351
    %vm2353 = vweird.f32 %v2277
    %vm2354 = vweird.f32 %v2348
    %vm2355 = vmor %vm2353, %vm2354
    %v2356 = vsel %vm2355, %v2348, %v2352
    %v2357 = vand.u32 2147483647, %v2277
    %vm2358 = vcmp.eq.f32.partialorder %v2357, 8.507059e+37
    %v2359 = vand.u32 %v2277, 2147483648
    %v2360 = vor.u32 1.1754944e-38, %v2359
    %v2361 = vsel %vm2358, %v2360, %v2356
    %v2362 = vmul.f32 %v2209, %v2361
    %v2363 = vrcp.pop %v2280
    %v2364 = vmul.f32 %v2280, %v2363
    %v2365 = vsub.f32 1.0, %v2364
    %v2366 = vmul.f32 %v2363, %v2365
    %v2367 = vadd.f32 %v2363, %v2366
    %vm2368 = vweird.f32 %v2280
    %vm2369 = vweird.f32 %v2363
    %vm2370 = vmor %vm2368, %vm2369
    %v2371 = vsel %vm2370, %v2363, %v2367
    %v2372 = vand.u32 2147483647, %v2280
    %vm2373 = vcmp.eq.f32.partialorder %v2372, 8.507059e+37
    %v2374 = vand.u32 %v2280, 2147483648
    %v2375 = vor.u32 1.1754944e-38, %v2374
    %v2376 = vsel %vm2373, %v2375, %v2371
    %v2377 = vmul.f32 %v2212, %v2376
    %v2378 = vrcp.pop %v2283
    %v2379 = vmul.f32 %v2283, %v2378
    %v2380 = vsub.f32 1.0, %v2379
    %v2381 = vmul.f32 %v2378, %v2380
    %v2382 = vadd.f32 %v2378, %v2381
    %vm2383 = vweird.f32 %v2283
    %vm2384 = vweird.f32 %v2378
    %vm2385 = vmor %vm2383, %vm2384
    %v2386 = vsel %vm2385, %v2378, %v2382
    %v2387 = vand.u32 2147483647, %v2283
    %vm2388 = vcmp.eq.f32.partialorder %v2387, 8.507059e+37
    %v2389 = vand.u32 %v2283, 2147483648
    %v2390 = vor.u32 1.1754944e-38, %v2389
    %v2391 = vsel %vm2388, %v2390, %v2386
    %v2392 = vmul.f32 %v2215, %v2391
    %v2393 = vrcp.pop %v2286
    %v2394 = vmul.f32 %v2286, %v2393
    %v2395 = vsub.f32 1.0, %v2394
    %v2396 = vmul.f32 %v2393, %v2395
    %v2397 = vadd.f32 %v2393, %v2396
    %vm2398 = vweird.f32 %v2286
    %vm2399 = vweird.f32 %v2393
    %vm2400 = vmor %vm2398, %vm2399
    %v2401 = vsel %vm2400, %v2393, %v2397
    %v2402 = vand.u32 2147483647, %v2286
    %vm2403 = vcmp.eq.f32.partialorder %v2402, 8.507059e+37
    %v2404 = vand.u32 %v2286, 2147483648
    %v2405 = vor.u32 1.1754944e-38, %v2404
    %v2406 = vsel %vm2403, %v2405, %v2401
    %v2407 = vmul.f32 %v2218, %v2406
    %v2408 = vmul.f32 %v1706, %v2302
    %v2409 = vmul.f32 %v1707, %v2317
    %v2410 = vmul.f32 %v1708, %v2332
    %v2411 = vmul.f32 %v1709, %v2347
    %v2412 = vmul.f32 %v1710, %v2362
    %v2413 = vmul.f32 %v1711, %v2377
    %v2414 = vmul.f32 %v1712, %v2392
    %v2415 = vmul.f32 %v1713, %v2407
    %2416 = vxpose.xlu0.b32.start [1/16] %v2057, 128
    %2417 = vxpose.xlu0.b32.cont [2/16] %v2058, 128
    %2418 = vxpose.xlu0.b32.cont [3/16] %v2059, 128
    %2419 = vxpose.xlu0.b32.cont [4/16] %v2060, 128
    %2420 = vxpose.xlu0.b32.cont [5/16] %v2061, 128
    %2421 = vxpose.xlu0.b32.cont [6/16] %v2062, 128
    %2422 = vxpose.xlu0.b32.cont [7/16] %v2063, 128
    %2423 = vxpose.xlu0.b32.cont [8/16] %v2064, 128
    %2424 = vxpose.xlu0.b32.cont [9/16] 0.0, 128
    %2425 = vxpose.xlu0.b32.cont [10/16] 0.0, 128
    %2426 = vxpose.xlu0.b32.cont [11/16] 0.0, 128
    %2427 = vxpose.xlu0.b32.cont [12/16] 0.0, 128
    %2428 = vxpose.xlu0.b32.cont [13/16] 0.0, 128
    %2429 = vxpose.xlu0.b32.cont [14/16] 0.0, 128
    %2430 = vxpose.xlu0.b32.cont [15/16] 0.0, 128
    %2431 = vxpose.xlu0.b32.end [16/16] 0.0, 128
    %v2432 = vpop.trf.xlu0
    %v2433 = vpop.trf.xlu0
    %v2434 = vpop.trf.xlu0
    %v2435 = vpop.trf.xlu0
    %v2436 = vpop.trf.xlu0
    %v2437 = vpop.trf.xlu0
    %v2438 = vpop.trf.xlu0
    %v2439 = vpop.trf.xlu0
    %v2440 = vpop.trf.xlu0
    %v2441 = vpop.trf.xlu0
    %v2442 = vpop.trf.xlu0
    %v2443 = vpop.trf.xlu0
    %v2444 = vpop.trf.xlu0
    %v2445 = vpop.trf.xlu0
    %v2446 = vpop.trf.xlu0
    %v2447 = vpop.trf.xlu0
    %v2449 = vsel %vm105, %v2432, 0
    %2451 = vmatpush.msra.mxu0 0.0
    %2452 = vmatpush.msra.mxu0 0.0
    %2453 = vmatpush.msra.mxu0 0.0
    %2454 = vmatpush.msra.mxu0 0.0
    %2455 = vmatpush.msra.mxu0 0.0
    %2456 = vmatpush.msra.mxu0 0.0
    %2457 = vmatpush.msra.mxu0 0.0
    %2458 = vmatpush.msra.mxu0 0.0
    %2459 = vmatpush.msra.mxu0 %v72
    %2460 = vmatpush.msra.mxu0 %v71
    %2461 = vmatpush.msra.mxu0 %v70
    %2462 = vmatpush.msra.mxu0 %v69
    %2463 = vmatpush.msra.mxu0 %v68
    %2464 = vmatpush.msra.mxu0 %v67
    %2465 = vmatpush.msra.mxu0 %v66
    %2466 = vmatpush.msra.mxu0 %v65
    %2467 = vmatmul.f32.gmra.mxu0 %v2449
    %v2468 = vpop.f32.mrf.mxu0
    %v2469 = vadd.f32 0.0, %v2468
    %2470 = vdwg.mxu0
    %2471 = vmatpush.msra.mxu0 0.0
    %2472 = vmatpush.msra.mxu0 0.0
    %2473 = vmatpush.msra.mxu0 0.0
    %2474 = vmatpush.msra.mxu0 0.0
    %2475 = vmatpush.msra.mxu0 0.0
    %2476 = vmatpush.msra.mxu0 0.0
    %2477 = vmatpush.msra.mxu0 0.0
    %2478 = vmatpush.msra.mxu0 0.0
    %2479 = vmatpush.msra.mxu0 %v2064
    %2480 = vmatpush.msra.mxu0 %v2063
    %2481 = vmatpush.msra.mxu0 %v2062
    %2482 = vmatpush.msra.mxu0 %v2061
    %2483 = vmatpush.msra.mxu0 %v2060
    %2484 = vmatpush.msra.mxu0 %v2059
    %2485 = vmatpush.msra.mxu0 %v2058
    %2486 = vmatpush.msra.mxu0 %v2057
    %2487 = vmatmul.f32.gmra.mxu0 %v2449
    %v2488 = vpop.f32.mrf.mxu0
    %v2489 = vadd.f32 0.0, %v2488
    %2490 = vdwg.mxu0
    %v2492 = vsel %vm149, %v2489, 0
    %2494 = vmatpush.msra.mxu0 0.0
    %2495 = vmatpush.msra.mxu0 0.0
    %2496 = vmatpush.msra.mxu0 0.0
    %2497 = vmatpush.msra.mxu0 0.0
    %2498 = vmatpush.msra.mxu0 0.0
    %2499 = vmatpush.msra.mxu0 0.0
    %2500 = vmatpush.msra.mxu0 0.0
    %2501 = vmatpush.msra.mxu0 0.0
    %2502 = vmatpush.msra.mxu0 0.0
    %2503 = vmatpush.msra.mxu0 0.0
    %2504 = vmatpush.msra.mxu0 0.0
    %2505 = vmatpush.msra.mxu0 0.0
    %2506 = vmatpush.msra.mxu0 0.0
    %2507 = vmatpush.msra.mxu0 0.0
    %2508 = vmatpush.msra.mxu0 0.0
    %2509 = vmatpush.msra.mxu0 %v1827
    %2510 = vmatmul.f32.gmra.mxu0 %v2492
    %v2511 = vpop.f32.mrf.mxu0
    %v2512 = vadd.f32 2e-08, %v2511
    %2513 = vdwg.mxu0
    %v2514 = vrcp.pop %v2512
    %v2515 = vmul.f32 %v2512, %v2514
    %v2516 = vsub.f32 1.0, %v2515
    %v2517 = vmul.f32 %v2514, %v2516
    %v2518 = vadd.f32 %v2514, %v2517
    %vm2519 = vweird.f32 %v2512
    %vm2520 = vweird.f32 %v2514
    %vm2521 = vmor %vm2519, %vm2520
    %v2522 = vsel %vm2521, %v2514, %v2518
    %v2523 = vand.u32 2147483647, %v2512
    %vm2524 = vcmp.eq.f32.partialorder %v2523, 8.507059e+37
    %v2525 = vand.u32 %v2512, 2147483648
    %v2526 = vor.u32 1.1754944e-38, %v2525
    %v2527 = vsel %vm2524, %v2526, %v2522
    %v2528 = vmul.f32 %v2469, %v2527
    %v2529 = vmul.f32 %v1827, %v2528
    %2530 = vmatpush.xpose.msra.mxu0 0.0
    %2531 = vmatpush.xpose.msra.mxu0 0.0
    %2532 = vmatpush.xpose.msra.mxu0 0.0
    %2533 = vmatpush.xpose.msra.mxu0 0.0
    %2534 = vmatpush.xpose.msra.mxu0 0.0
    %2535 = vmatpush.xpose.msra.mxu0 0.0
    %2536 = vmatpush.xpose.msra.mxu0 0.0
    %2537 = vmatpush.xpose.msra.mxu0 0.0
    %2538 = vmatpush.xpose.msra.mxu0 0.0
    %2539 = vmatpush.xpose.msra.mxu0 0.0
    %2540 = vmatpush.xpose.msra.mxu0 0.0
    %2541 = vmatpush.xpose.msra.mxu0 0.0
    %2542 = vmatpush.xpose.msra.mxu0 0.0
    %2543 = vmatpush.xpose.msra.mxu0 0.0
    %2544 = vmatpush.xpose.msra.mxu0 0.0
    %2545 = vmatpush.xpose.msra.mxu0 %v1827
    %2546 = vmatmul.f32.gmra.mxu0 %v65
    %v2547 = vpop.f32.mrf.mxu0
    %v2548 = vadd.f32 0.0, %v2547
    %2549 = vmatmul.f32.gmra.mxu0 %v66
    %v2550 = vpop.f32.mrf.mxu0
    %v2551 = vadd.f32 0.0, %v2550
    %2552 = vmatmul.f32.gmra.mxu0 %v67
    %v2553 = vpop.f32.mrf.mxu0
    %v2554 = vadd.f32 0.0, %v2553
    %2555 = vmatmul.f32.gmra.mxu0 %v68
    %v2556 = vpop.f32.mrf.mxu0
    %v2557 = vadd.f32 0.0, %v2556
    %2558 = vmatmul.f32.gmra.mxu0 %v69
    %v2559 = vpop.f32.mrf.mxu0
    %v2560 = vadd.f32 0.0, %v2559
    %2561 = vmatmul.f32.gmra.mxu0 %v70
    %v2562 = vpop.f32.mrf.mxu0
    %v2563 = vadd.f32 0.0, %v2562
    %2564 = vmatmul.f32.gmra.mxu0 %v71
    %v2565 = vpop.f32.mrf.mxu0
    %v2566 = vadd.f32 0.0, %v2565
    %2567 = vmatmul.f32.gmra.mxu0 %v72
    %v2568 = vpop.f32.mrf.mxu0
    %v2569 = vadd.f32 0.0, %v2568
    %2570 = vmatmul.f32.gmra.mxu0 %v1827
    %v2571 = vpop.f32.mrf.mxu0
    %v2572 = vadd.f32 0.0, %v2571
    %2573 = vdwg.mxu0
    %v2575 = vsel %vm149, %v2057, 0
    %v2578 = vsel %vm149, %v2058, 0
    %v2581 = vsel %vm149, %v2059, 0
    %v2584 = vsel %vm149, %v2060, 0
    %v2587 = vsel %vm149, %v2061, 0
    %v2590 = vsel %vm149, %v2062, 0
    %v2593 = vsel %vm149, %v2063, 0
    %v2596 = vsel %vm149, %v2064, 0
    %2598 = vmatpush.msra.mxu0 0.0
    %2599 = vmatpush.msra.mxu0 0.0
    %2600 = vmatpush.msra.mxu0 0.0
    %2601 = vmatpush.msra.mxu0 0.0
    %2602 = vmatpush.msra.mxu0 0.0
    %2603 = vmatpush.msra.mxu0 0.0
    %2604 = vmatpush.msra.mxu0 0.0
    %2605 = vmatpush.msra.mxu0 0.0
    %2606 = vmatpush.msra.mxu0 0.0
    %2607 = vmatpush.msra.mxu0 0.0
    %2608 = vmatpush.msra.mxu0 0.0
    %2609 = vmatpush.msra.mxu0 0.0
    %2610 = vmatpush.msra.mxu0 0.0
    %2611 = vmatpush.msra.mxu0 0.0
    %2612 = vmatpush.msra.mxu0 0.0
    %2613 = vmatpush.msra.mxu0 %v2572
    %2614 = vmatmul.f32.gmra.mxu0 %v2575
    %v2615 = vpop.f32.mrf.mxu0
    %v2616 = vadd.f32 2e-08, %v2615
    %2617 = vmatmul.f32.gmra.mxu0 %v2578
    %v2618 = vpop.f32.mrf.mxu0
    %v2619 = vadd.f32 2e-08, %v2618
    %2620 = vmatmul.f32.gmra.mxu0 %v2581
    %v2621 = vpop.f32.mrf.mxu0
    %v2622 = vadd.f32 2e-08, %v2621
    %2623 = vmatmul.f32.gmra.mxu0 %v2584
    %v2624 = vpop.f32.mrf.mxu0
    %v2625 = vadd.f32 2e-08, %v2624
    %2626 = vmatmul.f32.gmra.mxu0 %v2587
    %v2627 = vpop.f32.mrf.mxu0
    %v2628 = vadd.f32 2e-08, %v2627
    %2629 = vmatmul.f32.gmra.mxu0 %v2590
    %v2630 = vpop.f32.mrf.mxu0
    %v2631 = vadd.f32 2e-08, %v2630
    %2632 = vmatmul.f32.gmra.mxu0 %v2593
    %v2633 = vpop.f32.mrf.mxu0
    %v2634 = vadd.f32 2e-08, %v2633
    %2635 = vmatmul.f32.gmra.mxu0 %v2596
    %v2636 = vpop.f32.mrf.mxu0
    %v2637 = vadd.f32 2e-08, %v2636
    %2638 = vdwg.mxu0
    %v2639 = vrcp.pop %v2616
    %v2640 = vmul.f32 %v2616, %v2639
    %v2641 = vsub.f32 1.0, %v2640
    %v2642 = vmul.f32 %v2639, %v2641
    %v2643 = vadd.f32 %v2639, %v2642
    %vm2644 = vweird.f32 %v2616
    %vm2645 = vweird.f32 %v2639
    %vm2646 = vmor %vm2644, %vm2645
    %v2647 = vsel %vm2646, %v2639, %v2643
    %v2648 = vand.u32 2147483647, %v2616
    %vm2649 = vcmp.eq.f32.partialorder %v2648, 8.507059e+37
    %v2650 = vand.u32 %v2616, 2147483648
    %v2651 = vor.u32 1.1754944e-38, %v2650
    %v2652 = vsel %vm2649, %v2651, %v2647
    %v2653 = vmul.f32 %v2548, %v2652
    %v2654 = vrcp.pop %v2619
    %v2655 = vmul.f32 %v2619, %v2654
    %v2656 = vsub.f32 1.0, %v2655
    %v2657 = vmul.f32 %v2654, %v2656
    %v2658 = vadd.f32 %v2654, %v2657
    %vm2659 = vweird.f32 %v2619
    %vm2660 = vweird.f32 %v2654
    %vm2661 = vmor %vm2659, %vm2660
    %v2662 = vsel %vm2661, %v2654, %v2658
    %v2663 = vand.u32 2147483647, %v2619
    %vm2664 = vcmp.eq.f32.partialorder %v2663, 8.507059e+37
    %v2665 = vand.u32 %v2619, 2147483648
    %v2666 = vor.u32 1.1754944e-38, %v2665
    %v2667 = vsel %vm2664, %v2666, %v2662
    %v2668 = vmul.f32 %v2551, %v2667
    %v2669 = vrcp.pop %v2622
    %v2670 = vmul.f32 %v2622, %v2669
    %v2671 = vsub.f32 1.0, %v2670
    %v2672 = vmul.f32 %v2669, %v2671
    %v2673 = vadd.f32 %v2669, %v2672
    %vm2674 = vweird.f32 %v2622
    %vm2675 = vweird.f32 %v2669
    %vm2676 = vmor %vm2674, %vm2675
    %v2677 = vsel %vm2676, %v2669, %v2673
    %v2678 = vand.u32 2147483647, %v2622
    %vm2679 = vcmp.eq.f32.partialorder %v2678, 8.507059e+37
    %v2680 = vand.u32 %v2622, 2147483648
    %v2681 = vor.u32 1.1754944e-38, %v2680
    %v2682 = vsel %vm2679, %v2681, %v2677
    %v2683 = vmul.f32 %v2554, %v2682
    %v2684 = vrcp.pop %v2625
    %v2685 = vmul.f32 %v2625, %v2684
    %v2686 = vsub.f32 1.0, %v2685
    %v2687 = vmul.f32 %v2684, %v2686
    %v2688 = vadd.f32 %v2684, %v2687
    %vm2689 = vweird.f32 %v2625
    %vm2690 = vweird.f32 %v2684
    %vm2691 = vmor %vm2689, %vm2690
    %v2692 = vsel %vm2691, %v2684, %v2688
    %v2693 = vand.u32 2147483647, %v2625
    %vm2694 = vcmp.eq.f32.partialorder %v2693, 8.507059e+37
    %v2695 = vand.u32 %v2625, 2147483648
    %v2696 = vor.u32 1.1754944e-38, %v2695
    %v2697 = vsel %vm2694, %v2696, %v2692
    %v2698 = vmul.f32 %v2557, %v2697
    %v2699 = vrcp.pop %v2628
    %v2700 = vmul.f32 %v2628, %v2699
    %v2701 = vsub.f32 1.0, %v2700
    %v2702 = vmul.f32 %v2699, %v2701
    %v2703 = vadd.f32 %v2699, %v2702
    %vm2704 = vweird.f32 %v2628
    %vm2705 = vweird.f32 %v2699
    %vm2706 = vmor %vm2704, %vm2705
    %v2707 = vsel %vm2706, %v2699, %v2703
    %v2708 = vand.u32 2147483647, %v2628
    %vm2709 = vcmp.eq.f32.partialorder %v2708, 8.507059e+37
    %v2710 = vand.u32 %v2628, 2147483648
    %v2711 = vor.u32 1.1754944e-38, %v2710
    %v2712 = vsel %vm2709, %v2711, %v2707
    %v2713 = vmul.f32 %v2560, %v2712
    %v2714 = vrcp.pop %v2631
    %v2715 = vmul.f32 %v2631, %v2714
    %v2716 = vsub.f32 1.0, %v2715
    %v2717 = vmul.f32 %v2714, %v2716
    %v2718 = vadd.f32 %v2714, %v2717
    %vm2719 = vweird.f32 %v2631
    %vm2720 = vweird.f32 %v2714
    %vm2721 = vmor %vm2719, %vm2720
    %v2722 = vsel %vm2721, %v2714, %v2718
    %v2723 = vand.u32 2147483647, %v2631
    %vm2724 = vcmp.eq.f32.partialorder %v2723, 8.507059e+37
    %v2725 = vand.u32 %v2631, 2147483648
    %v2726 = vor.u32 1.1754944e-38, %v2725
    %v2727 = vsel %vm2724, %v2726, %v2722
    %v2728 = vmul.f32 %v2563, %v2727
    %v2729 = vrcp.pop %v2634
    %v2730 = vmul.f32 %v2634, %v2729
    %v2731 = vsub.f32 1.0, %v2730
    %v2732 = vmul.f32 %v2729, %v2731
    %v2733 = vadd.f32 %v2729, %v2732
    %vm2734 = vweird.f32 %v2634
    %vm2735 = vweird.f32 %v2729
    %vm2736 = vmor %vm2734, %vm2735
    %v2737 = vsel %vm2736, %v2729, %v2733
    %v2738 = vand.u32 2147483647, %v2634
    %vm2739 = vcmp.eq.f32.partialorder %v2738, 8.507059e+37
    %v2740 = vand.u32 %v2634, 2147483648
    %v2741 = vor.u32 1.1754944e-38, %v2740
    %v2742 = vsel %vm2739, %v2741, %v2737
    %v2743 = vmul.f32 %v2566, %v2742
    %v2744 = vrcp.pop %v2637
    %v2745 = vmul.f32 %v2637, %v2744
    %v2746 = vsub.f32 1.0, %v2745
    %v2747 = vmul.f32 %v2744, %v2746
    %v2748 = vadd.f32 %v2744, %v2747
    %vm2749 = vweird.f32 %v2637
    %vm2750 = vweird.f32 %v2744
    %vm2751 = vmor %vm2749, %vm2750
    %v2752 = vsel %vm2751, %v2744, %v2748
    %v2753 = vand.u32 2147483647, %v2637
    %vm2754 = vcmp.eq.f32.partialorder %v2753, 8.507059e+37
    %v2755 = vand.u32 %v2637, 2147483648
    %v2756 = vor.u32 1.1754944e-38, %v2755
    %v2757 = vsel %vm2754, %v2756, %v2752
    %v2758 = vmul.f32 %v2569, %v2757
    %v2759 = vmul.f32 %v2057, %v2653
    %v2760 = vmul.f32 %v2058, %v2668
    %v2761 = vmul.f32 %v2059, %v2683
    %v2762 = vmul.f32 %v2060, %v2698
    %v2763 = vmul.f32 %v2061, %v2713
    %v2764 = vmul.f32 %v2062, %v2728
    %v2765 = vmul.f32 %v2063, %v2743
    %v2766 = vmul.f32 %v2064, %v2758
    %2767 = vxpose.xlu0.b32.start [1/16] %v2408, 128
    %2768 = vxpose.xlu0.b32.cont [2/16] %v2409, 128
    %2769 = vxpose.xlu0.b32.cont [3/16] %v2410, 128
    %2770 = vxpose.xlu0.b32.cont [4/16] %v2411, 128
    %2771 = vxpose.xlu0.b32.cont [5/16] %v2412, 128
    %2772 = vxpose.xlu0.b32.cont [6/16] %v2413, 128
    %2773 = vxpose.xlu0.b32.cont [7/16] %v2414, 128
    %2774 = vxpose.xlu0.b32.cont [8/16] %v2415, 128
    %2775 = vxpose.xlu0.b32.cont [9/16] 0.0, 128
    %2776 = vxpose.xlu0.b32.cont [10/16] 0.0, 128
    %2777 = vxpose.xlu0.b32.cont [11/16] 0.0, 128
    %2778 = vxpose.xlu0.b32.cont [12/16] 0.0, 128
    %2779 = vxpose.xlu0.b32.cont [13/16] 0.0, 128
    %2780 = vxpose.xlu0.b32.cont [14/16] 0.0, 128
    %2781 = vxpose.xlu0.b32.cont [15/16] 0.0, 128
    %2782 = vxpose.xlu0.b32.end [16/16] 0.0, 128
    %v2783 = vpop.trf.xlu0
    %v2784 = vpop.trf.xlu0
    %v2785 = vpop.trf.xlu0
    %v2786 = vpop.trf.xlu0
    %v2787 = vpop.trf.xlu0
    %v2788 = vpop.trf.xlu0
    %v2789 = vpop.trf.xlu0
    %v2790 = vpop.trf.xlu0
    %v2791 = vpop.trf.xlu0
    %v2792 = vpop.trf.xlu0
    %v2793 = vpop.trf.xlu0
    %v2794 = vpop.trf.xlu0
    %v2795 = vpop.trf.xlu0
    %v2796 = vpop.trf.xlu0
    %v2797 = vpop.trf.xlu0
    %v2798 = vpop.trf.xlu0
    %v2800 = vsel %vm105, %v2783, 0
    %2802 = vmatpush.msra.mxu0 0.0
    %2803 = vmatpush.msra.mxu0 0.0
    %2804 = vmatpush.msra.mxu0 0.0
    %2805 = vmatpush.msra.mxu0 0.0
    %2806 = vmatpush.msra.mxu0 0.0
    %2807 = vmatpush.msra.mxu0 0.0
    %2808 = vmatpush.msra.mxu0 0.0
    %2809 = vmatpush.msra.mxu0 0.0
    %2810 = vmatpush.msra.mxu0 %v55
    %2811 = vmatpush.msra.mxu0 %v54
    %2812 = vmatpush.msra.mxu0 %v53
    %2813 = vmatpush.msra.mxu0 %v52
    %2814 = vmatpush.msra.mxu0 %v51
    %2815 = vmatpush.msra.mxu0 %v50
    %2816 = vmatpush.msra.mxu0 %v49
    %2817 = vmatpush.msra.mxu0 %v48
    %2818 = vmatmul.f32.gmra.mxu0 %v2800
    %v2819 = vpop.f32.mrf.mxu0
    %v2820 = vadd.f32 0.0, %v2819
    %2821 = vdwg.mxu0
    %2822 = vmatpush.msra.mxu0 0.0
    %2823 = vmatpush.msra.mxu0 0.0
    %2824 = vmatpush.msra.mxu0 0.0
    %2825 = vmatpush.msra.mxu0 0.0
    %2826 = vmatpush.msra.mxu0 0.0
    %2827 = vmatpush.msra.mxu0 0.0
    %2828 = vmatpush.msra.mxu0 0.0
    %2829 = vmatpush.msra.mxu0 0.0
    %2830 = vmatpush.msra.mxu0 %v2415
    %2831 = vmatpush.msra.mxu0 %v2414
    %2832 = vmatpush.msra.mxu0 %v2413
    %2833 = vmatpush.msra.mxu0 %v2412
    %2834 = vmatpush.msra.mxu0 %v2411
    %2835 = vmatpush.msra.mxu0 %v2410
    %2836 = vmatpush.msra.mxu0 %v2409
    %2837 = vmatpush.msra.mxu0 %v2408
    %2838 = vmatmul.f32.gmra.mxu0 %v2800
    %v2839 = vpop.f32.mrf.mxu0
    %v2840 = vadd.f32 0.0, %v2839
    %2841 = vdwg.mxu0
    %v2843 = vsel %vm149, %v2840, 0
    %2845 = vmatpush.msra.mxu0 0.0
    %2846 = vmatpush.msra.mxu0 0.0
    %2847 = vmatpush.msra.mxu0 0.0
    %2848 = vmatpush.msra.mxu0 0.0
    %2849 = vmatpush.msra.mxu0 0.0
    %2850 = vmatpush.msra.mxu0 0.0
    %2851 = vmatpush.msra.mxu0 0.0
    %2852 = vmatpush.msra.mxu0 0.0
    %2853 = vmatpush.msra.mxu0 0.0
    %2854 = vmatpush.msra.mxu0 0.0
    %2855 = vmatpush.msra.mxu0 0.0
    %2856 = vmatpush.msra.mxu0 0.0
    %2857 = vmatpush.msra.mxu0 0.0
    %2858 = vmatpush.msra.mxu0 0.0
    %2859 = vmatpush.msra.mxu0 0.0
    %2860 = vmatpush.msra.mxu0 %v2178
    %2861 = vmatmul.f32.gmra.mxu0 %v2843
    %v2862 = vpop.f32.mrf.mxu0
    %v2863 = vadd.f32 2e-08, %v2862
    %2864 = vdwg.mxu0
    %v2865 = vrcp.pop %v2863
    %v2866 = vmul.f32 %v2863, %v2865
    %v2867 = vsub.f32 1.0, %v2866
    %v2868 = vmul.f32 %v2865, %v2867
    %v2869 = vadd.f32 %v2865, %v2868
    %vm2870 = vweird.f32 %v2863
    %vm2871 = vweird.f32 %v2865
    %vm2872 = vmor %vm2870, %vm2871
    %v2873 = vsel %vm2872, %v2865, %v2869
    %v2874 = vand.u32 2147483647, %v2863
    %vm2875 = vcmp.eq.f32.partialorder %v2874, 8.507059e+37
    %v2876 = vand.u32 %v2863, 2147483648
    %v2877 = vor.u32 1.1754944e-38, %v2876
    %v2878 = vsel %vm2875, %v2877, %v2873
    %v2879 = vmul.f32 %v2820, %v2878
    %v2880 = vmul.f32 %v2178, %v2879
    %2881 = vmatpush.xpose.msra.mxu0 0.0
    %2882 = vmatpush.xpose.msra.mxu0 0.0
    %2883 = vmatpush.xpose.msra.mxu0 0.0
    %2884 = vmatpush.xpose.msra.mxu0 0.0
    %2885 = vmatpush.xpose.msra.mxu0 0.0
    %2886 = vmatpush.xpose.msra.mxu0 0.0
    %2887 = vmatpush.xpose.msra.mxu0 0.0
    %2888 = vmatpush.xpose.msra.mxu0 0.0
    %2889 = vmatpush.xpose.msra.mxu0 0.0
    %2890 = vmatpush.xpose.msra.mxu0 0.0
    %2891 = vmatpush.xpose.msra.mxu0 0.0
    %2892 = vmatpush.xpose.msra.mxu0 0.0
    %2893 = vmatpush.xpose.msra.mxu0 0.0
    %2894 = vmatpush.xpose.msra.mxu0 0.0
    %2895 = vmatpush.xpose.msra.mxu0 0.0
    %2896 = vmatpush.xpose.msra.mxu0 %v2178
    %2897 = vmatmul.f32.gmra.mxu0 %v48
    %v2898 = vpop.f32.mrf.mxu0
    %v2899 = vadd.f32 0.0, %v2898
    %2900 = vmatmul.f32.gmra.mxu0 %v49
    %v2901 = vpop.f32.mrf.mxu0
    %v2902 = vadd.f32 0.0, %v2901
    %2903 = vmatmul.f32.gmra.mxu0 %v50
    %v2904 = vpop.f32.mrf.mxu0
    %v2905 = vadd.f32 0.0, %v2904
    %2906 = vmatmul.f32.gmra.mxu0 %v51
    %v2907 = vpop.f32.mrf.mxu0
    %v2908 = vadd.f32 0.0, %v2907
    %2909 = vmatmul.f32.gmra.mxu0 %v52
    %v2910 = vpop.f32.mrf.mxu0
    %v2911 = vadd.f32 0.0, %v2910
    %2912 = vmatmul.f32.gmra.mxu0 %v53
    %v2913 = vpop.f32.mrf.mxu0
    %v2914 = vadd.f32 0.0, %v2913
    %2915 = vmatmul.f32.gmra.mxu0 %v54
    %v2916 = vpop.f32.mrf.mxu0
    %v2917 = vadd.f32 0.0, %v2916
    %2918 = vmatmul.f32.gmra.mxu0 %v55
    %v2919 = vpop.f32.mrf.mxu0
    %v2920 = vadd.f32 0.0, %v2919
    %2921 = vmatmul.f32.gmra.mxu0 %v2178
    %v2922 = vpop.f32.mrf.mxu0
    %v2923 = vadd.f32 0.0, %v2922
    %2924 = vdwg.mxu0
    %v2926 = vsel %vm149, %v2408, 0
    %v2929 = vsel %vm149, %v2409, 0
    %v2932 = vsel %vm149, %v2410, 0
    %v2935 = vsel %vm149, %v2411, 0
    %v2938 = vsel %vm149, %v2412, 0
    %v2941 = vsel %vm149, %v2413, 0
    %v2944 = vsel %vm149, %v2414, 0
    %v2947 = vsel %vm149, %v2415, 0
    %2949 = vmatpush.msra.mxu0 0.0
    %2950 = vmatpush.msra.mxu0 0.0
    %2951 = vmatpush.msra.mxu0 0.0
    %2952 = vmatpush.msra.mxu0 0.0
    %2953 = vmatpush.msra.mxu0 0.0
    %2954 = vmatpush.msra.mxu0 0.0
    %2955 = vmatpush.msra.mxu0 0.0
    %2956 = vmatpush.msra.mxu0 0.0
    %2957 = vmatpush.msra.mxu0 0.0
    %2958 = vmatpush.msra.mxu0 0.0
    %2959 = vmatpush.msra.mxu0 0.0
    %2960 = vmatpush.msra.mxu0 0.0
    %2961 = vmatpush.msra.mxu0 0.0
    %2962 = vmatpush.msra.mxu0 0.0
    %2963 = vmatpush.msra.mxu0 0.0
    %2964 = vmatpush.msra.mxu0 %v2923
    %2965 = vmatmul.f32.gmra.mxu0 %v2926
    %v2966 = vpop.f32.mrf.mxu0
    %v2967 = vadd.f32 2e-08, %v2966
    %2968 = vmatmul.f32.gmra.mxu0 %v2929
    %v2969 = vpop.f32.mrf.mxu0
    %v2970 = vadd.f32 2e-08, %v2969
    %2971 = vmatmul.f32.gmra.mxu0 %v2932
    %v2972 = vpop.f32.mrf.mxu0
    %v2973 = vadd.f32 2e-08, %v2972
    %2974 = vmatmul.f32.gmra.mxu0 %v2935
    %v2975 = vpop.f32.mrf.mxu0
    %v2976 = vadd.f32 2e-08, %v2975
    %2977 = vmatmul.f32.gmra.mxu0 %v2938
    %v2978 = vpop.f32.mrf.mxu0
    %v2979 = vadd.f32 2e-08, %v2978
    %2980 = vmatmul.f32.gmra.mxu0 %v2941
    %v2981 = vpop.f32.mrf.mxu0
    %v2982 = vadd.f32 2e-08, %v2981
    %2983 = vmatmul.f32.gmra.mxu0 %v2944
    %v2984 = vpop.f32.mrf.mxu0
    %v2985 = vadd.f32 2e-08, %v2984
    %2986 = vmatmul.f32.gmra.mxu0 %v2947
    %v2987 = vpop.f32.mrf.mxu0
    %v2988 = vadd.f32 2e-08, %v2987
    %2989 = vdwg.mxu0
    %v2990 = vrcp.pop %v2967
    %v2991 = vmul.f32 %v2967, %v2990
    %v2992 = vsub.f32 1.0, %v2991
    %v2993 = vmul.f32 %v2990, %v2992
    %v2994 = vadd.f32 %v2990, %v2993
    %vm2995 = vweird.f32 %v2967
    %vm2996 = vweird.f32 %v2990
    %vm2997 = vmor %vm2995, %vm2996
    %v2998 = vsel %vm2997, %v2990, %v2994
    %v2999 = vand.u32 2147483647, %v2967
    %vm3000 = vcmp.eq.f32.partialorder %v2999, 8.507059e+37
    %v3001 = vand.u32 %v2967, 2147483648
    %v3002 = vor.u32 1.1754944e-38, %v3001
    %v3003 = vsel %vm3000, %v3002, %v2998
    %v3004 = vmul.f32 %v2899, %v3003
    %v3005 = vrcp.pop %v2970
    %v3006 = vmul.f32 %v2970, %v3005
    %v3007 = vsub.f32 1.0, %v3006
    %v3008 = vmul.f32 %v3005, %v3007
    %v3009 = vadd.f32 %v3005, %v3008
    %vm3010 = vweird.f32 %v2970
    %vm3011 = vweird.f32 %v3005
    %vm3012 = vmor %vm3010, %vm3011
    %v3013 = vsel %vm3012, %v3005, %v3009
    %v3014 = vand.u32 2147483647, %v2970
    %vm3015 = vcmp.eq.f32.partialorder %v3014, 8.507059e+37
    %v3016 = vand.u32 %v2970, 2147483648
    %v3017 = vor.u32 1.1754944e-38, %v3016
    %v3018 = vsel %vm3015, %v3017, %v3013
    %v3019 = vmul.f32 %v2902, %v3018
    %v3020 = vrcp.pop %v2973
    %v3021 = vmul.f32 %v2973, %v3020
    %v3022 = vsub.f32 1.0, %v3021
    %v3023 = vmul.f32 %v3020, %v3022
    %v3024 = vadd.f32 %v3020, %v3023
    %vm3025 = vweird.f32 %v2973
    %vm3026 = vweird.f32 %v3020
    %vm3027 = vmor %vm3025, %vm3026
    %v3028 = vsel %vm3027, %v3020, %v3024
    %v3029 = vand.u32 2147483647, %v2973
    %vm3030 = vcmp.eq.f32.partialorder %v3029, 8.507059e+37
    %v3031 = vand.u32 %v2973, 2147483648
    %v3032 = vor.u32 1.1754944e-38, %v3031
    %v3033 = vsel %vm3030, %v3032, %v3028
    %v3034 = vmul.f32 %v2905, %v3033
    %v3035 = vrcp.pop %v2976
    %v3036 = vmul.f32 %v2976, %v3035
    %v3037 = vsub.f32 1.0, %v3036
    %v3038 = vmul.f32 %v3035, %v3037
    %v3039 = vadd.f32 %v3035, %v3038
    %vm3040 = vweird.f32 %v2976
    %vm3041 = vweird.f32 %v3035
    %vm3042 = vmor %vm3040, %vm3041
    %v3043 = vsel %vm3042, %v3035, %v3039
    %v3044 = vand.u32 2147483647, %v2976
    %vm3045 = vcmp.eq.f32.partialorder %v3044, 8.507059e+37
    %v3046 = vand.u32 %v2976, 2147483648
    %v3047 = vor.u32 1.1754944e-38, %v3046
    %v3048 = vsel %vm3045, %v3047, %v3043
    %v3049 = vmul.f32 %v2908, %v3048
    %v3050 = vrcp.pop %v2979
    %v3051 = vmul.f32 %v2979, %v3050
    %v3052 = vsub.f32 1.0, %v3051
    %v3053 = vmul.f32 %v3050, %v3052
    %v3054 = vadd.f32 %v3050, %v3053
    %vm3055 = vweird.f32 %v2979
    %vm3056 = vweird.f32 %v3050
    %vm3057 = vmor %vm3055, %vm3056
    %v3058 = vsel %vm3057, %v3050, %v3054
    %v3059 = vand.u32 2147483647, %v2979
    %vm3060 = vcmp.eq.f32.partialorder %v3059, 8.507059e+37
    %v3061 = vand.u32 %v2979, 2147483648
    %v3062 = vor.u32 1.1754944e-38, %v3061
    %v3063 = vsel %vm3060, %v3062, %v3058
    %v3064 = vmul.f32 %v2911, %v3063
    %v3065 = vrcp.pop %v2982
    %v3066 = vmul.f32 %v2982, %v3065
    %v3067 = vsub.f32 1.0, %v3066
    %v3068 = vmul.f32 %v3065, %v3067
    %v3069 = vadd.f32 %v3065, %v3068
    %vm3070 = vweird.f32 %v2982
    %vm3071 = vweird.f32 %v3065
    %vm3072 = vmor %vm3070, %vm3071
    %v3073 = vsel %vm3072, %v3065, %v3069
    %v3074 = vand.u32 2147483647, %v2982
    %vm3075 = vcmp.eq.f32.partialorder %v3074, 8.507059e+37
    %v3076 = vand.u32 %v2982, 2147483648
    %v3077 = vor.u32 1.1754944e-38, %v3076
    %v3078 = vsel %vm3075, %v3077, %v3073
    %v3079 = vmul.f32 %v2914, %v3078
    %v3080 = vrcp.pop %v2985
    %v3081 = vmul.f32 %v2985, %v3080
    %v3082 = vsub.f32 1.0, %v3081
    %v3083 = vmul.f32 %v3080, %v3082
    %v3084 = vadd.f32 %v3080, %v3083
    %vm3085 = vweird.f32 %v2985
    %vm3086 = vweird.f32 %v3080
    %vm3087 = vmor %vm3085, %vm3086
    %v3088 = vsel %vm3087, %v3080, %v3084
    %v3089 = vand.u32 2147483647, %v2985
    %vm3090 = vcmp.eq.f32.partialorder %v3089, 8.507059e+37
    %v3091 = vand.u32 %v2985, 2147483648
    %v3092 = vor.u32 1.1754944e-38, %v3091
    %v3093 = vsel %vm3090, %v3092, %v3088
    %v3094 = vmul.f32 %v2917, %v3093
    %v3095 = vrcp.pop %v2988
    %v3096 = vmul.f32 %v2988, %v3095
    %v3097 = vsub.f32 1.0, %v3096
    %v3098 = vmul.f32 %v3095, %v3097
    %v3099 = vadd.f32 %v3095, %v3098
    %vm3100 = vweird.f32 %v2988
    %vm3101 = vweird.f32 %v3095
    %vm3102 = vmor %vm3100, %vm3101
    %v3103 = vsel %vm3102, %v3095, %v3099
    %v3104 = vand.u32 2147483647, %v2988
    %vm3105 = vcmp.eq.f32.partialorder %v3104, 8.507059e+37
    %v3106 = vand.u32 %v2988, 2147483648
    %v3107 = vor.u32 1.1754944e-38, %v3106
    %v3108 = vsel %vm3105, %v3107, %v3103
    %v3109 = vmul.f32 %v2920, %v3108
    %v3110 = vmul.f32 %v2408, %v3004
    %v3111 = vmul.f32 %v2409, %v3019
    %v3112 = vmul.f32 %v2410, %v3034
    %v3113 = vmul.f32 %v2411, %v3049
    %v3114 = vmul.f32 %v2412, %v3064
    %v3115 = vmul.f32 %v2413, %v3079
    %v3116 = vmul.f32 %v2414, %v3094
    %v3117 = vmul.f32 %v2415, %v3109
    %3118 = vxpose.xlu0.b32.start [1/16] %v2759, 128
    %3119 = vxpose.xlu0.b32.cont [2/16] %v2760, 128
    %3120 = vxpose.xlu0.b32.cont [3/16] %v2761, 128
    %3121 = vxpose.xlu0.b32.cont [4/16] %v2762, 128
    %3122 = vxpose.xlu0.b32.cont [5/16] %v2763, 128
    %3123 = vxpose.xlu0.b32.cont [6/16] %v2764, 128
    %3124 = vxpose.xlu0.b32.cont [7/16] %v2765, 128
    %3125 = vxpose.xlu0.b32.cont [8/16] %v2766, 128
    %3126 = vxpose.xlu0.b32.cont [9/16] 0.0, 128
    %3127 = vxpose.xlu0.b32.cont [10/16] 0.0, 128
    %3128 = vxpose.xlu0.b32.cont [11/16] 0.0, 128
    %3129 = vxpose.xlu0.b32.cont [12/16] 0.0, 128
    %3130 = vxpose.xlu0.b32.cont [13/16] 0.0, 128
    %3131 = vxpose.xlu0.b32.cont [14/16] 0.0, 128
    %3132 = vxpose.xlu0.b32.cont [15/16] 0.0, 128
    %3133 = vxpose.xlu0.b32.end [16/16] 0.0, 128
    %v3134 = vpop.trf.xlu0
    %v3135 = vpop.trf.xlu0
    %v3136 = vpop.trf.xlu0
    %v3137 = vpop.trf.xlu0
    %v3138 = vpop.trf.xlu0
    %v3139 = vpop.trf.xlu0
    %v3140 = vpop.trf.xlu0
    %v3141 = vpop.trf.xlu0
    %v3142 = vpop.trf.xlu0
    %v3143 = vpop.trf.xlu0
    %v3144 = vpop.trf.xlu0
    %v3145 = vpop.trf.xlu0
    %v3146 = vpop.trf.xlu0
    %v3147 = vpop.trf.xlu0
    %v3148 = vpop.trf.xlu0
    %v3149 = vpop.trf.xlu0
    %v3151 = vsel %vm105, %v3134, 0
    %3153 = vmatpush.msra.mxu0 0.0
    %3154 = vmatpush.msra.mxu0 0.0
    %3155 = vmatpush.msra.mxu0 0.0
    %3156 = vmatpush.msra.mxu0 0.0
    %3157 = vmatpush.msra.mxu0 0.0
    %3158 = vmatpush.msra.mxu0 0.0
    %3159 = vmatpush.msra.mxu0 0.0
    %3160 = vmatpush.msra.mxu0 0.0
    %3161 = vmatpush.msra.mxu0 %v72
    %3162 = vmatpush.msra.mxu0 %v71
    %3163 = vmatpush.msra.mxu0 %v70
    %3164 = vmatpush.msra.mxu0 %v69
    %3165 = vmatpush.msra.mxu0 %v68
    %3166 = vmatpush.msra.mxu0 %v67
    %3167 = vmatpush.msra.mxu0 %v66
    %3168 = vmatpush.msra.mxu0 %v65
    %3169 = vmatmul.f32.gmra.mxu0 %v3151
    %v3170 = vpop.f32.mrf.mxu0
    %v3171 = vadd.f32 0.0, %v3170
    %3172 = vdwg.mxu0
    %3173 = vmatpush.msra.mxu0 0.0
    %3174 = vmatpush.msra.mxu0 0.0
    %3175 = vmatpush.msra.mxu0 0.0
    %3176 = vmatpush.msra.mxu0 0.0
    %3177 = vmatpush.msra.mxu0 0.0
    %3178 = vmatpush.msra.mxu0 0.0
    %3179 = vmatpush.msra.mxu0 0.0
    %3180 = vmatpush.msra.mxu0 0.0
    %3181 = vmatpush.msra.mxu0 %v2766
    %3182 = vmatpush.msra.mxu0 %v2765
    %3183 = vmatpush.msra.mxu0 %v2764
    %3184 = vmatpush.msra.mxu0 %v2763
    %3185 = vmatpush.msra.mxu0 %v2762
    %3186 = vmatpush.msra.mxu0 %v2761
    %3187 = vmatpush.msra.mxu0 %v2760
    %3188 = vmatpush.msra.mxu0 %v2759
    %3189 = vmatmul.f32.gmra.mxu0 %v3151
    %v3190 = vpop.f32.mrf.mxu0
    %v3191 = vadd.f32 0.0, %v3190
    %3192 = vdwg.mxu0
    %v3194 = vsel %vm149, %v3191, 0
    %3196 = vmatpush.msra.mxu0 0.0
    %3197 = vmatpush.msra.mxu0 0.0
    %3198 = vmatpush.msra.mxu0 0.0
    %3199 = vmatpush.msra.mxu0 0.0
    %3200 = vmatpush.msra.mxu0 0.0
    %3201 = vmatpush.msra.mxu0 0.0
    %3202 = vmatpush.msra.mxu0 0.0
    %3203 = vmatpush.msra.mxu0 0.0
    %3204 = vmatpush.msra.mxu0 0.0
    %3205 = vmatpush.msra.mxu0 0.0
    %3206 = vmatpush.msra.mxu0 0.0
    %3207 = vmatpush.msra.mxu0 0.0
    %3208 = vmatpush.msra.mxu0 0.0
    %3209 = vmatpush.msra.mxu0 0.0
    %3210 = vmatpush.msra.mxu0 0.0
    %3211 = vmatpush.msra.mxu0 %v2529
    %3212 = vmatmul.f32.gmra.mxu0 %v3194
    %v3213 = vpop.f32.mrf.mxu0
    %v3214 = vadd.f32 2e-08, %v3213
    %3215 = vdwg.mxu0
    %v3216 = vrcp.pop %v3214
    %v3217 = vmul.f32 %v3214, %v3216
    %v3218 = vsub.f32 1.0, %v3217
    %v3219 = vmul.f32 %v3216, %v3218
    %v3220 = vadd.f32 %v3216, %v3219
    %vm3221 = vweird.f32 %v3214
    %vm3222 = vweird.f32 %v3216
    %vm3223 = vmor %vm3221, %vm3222
    %v3224 = vsel %vm3223, %v3216, %v3220
    %v3225 = vand.u32 2147483647, %v3214
    %vm3226 = vcmp.eq.f32.partialorder %v3225, 8.507059e+37
    %v3227 = vand.u32 %v3214, 2147483648
    %v3228 = vor.u32 1.1754944e-38, %v3227
    %v3229 = vsel %vm3226, %v3228, %v3224
    %v3230 = vmul.f32 %v3171, %v3229
    %v3231 = vmul.f32 %v2529, %v3230
    %3232 = vmatpush.xpose.msra.mxu0 0.0
    %3233 = vmatpush.xpose.msra.mxu0 0.0
    %3234 = vmatpush.xpose.msra.mxu0 0.0
    %3235 = vmatpush.xpose.msra.mxu0 0.0
    %3236 = vmatpush.xpose.msra.mxu0 0.0
    %3237 = vmatpush.xpose.msra.mxu0 0.0
    %3238 = vmatpush.xpose.msra.mxu0 0.0
    %3239 = vmatpush.xpose.msra.mxu0 0.0
    %3240 = vmatpush.xpose.msra.mxu0 0.0
    %3241 = vmatpush.xpose.msra.mxu0 0.0
    %3242 = vmatpush.xpose.msra.mxu0 0.0
    %3243 = vmatpush.xpose.msra.mxu0 0.0
    %3244 = vmatpush.xpose.msra.mxu0 0.0
    %3245 = vmatpush.xpose.msra.mxu0 0.0
    %3246 = vmatpush.xpose.msra.mxu0 0.0
    %3247 = vmatpush.xpose.msra.mxu0 %v2529
    %3248 = vmatmul.f32.gmra.mxu0 %v65
    %v3249 = vpop.f32.mrf.mxu0
    %v3250 = vadd.f32 0.0, %v3249
    %3251 = vmatmul.f32.gmra.mxu0 %v66
    %v3252 = vpop.f32.mrf.mxu0
    %v3253 = vadd.f32 0.0, %v3252
    %3254 = vmatmul.f32.gmra.mxu0 %v67
    %v3255 = vpop.f32.mrf.mxu0
    %v3256 = vadd.f32 0.0, %v3255
    %3257 = vmatmul.f32.gmra.mxu0 %v68
    %v3258 = vpop.f32.mrf.mxu0
    %v3259 = vadd.f32 0.0, %v3258
    %3260 = vmatmul.f32.gmra.mxu0 %v69
    %v3261 = vpop.f32.mrf.mxu0
    %v3262 = vadd.f32 0.0, %v3261
    %3263 = vmatmul.f32.gmra.mxu0 %v70
    %v3264 = vpop.f32.mrf.mxu0
    %v3265 = vadd.f32 0.0, %v3264
    %3266 = vmatmul.f32.gmra.mxu0 %v71
    %v3267 = vpop.f32.mrf.mxu0
    %v3268 = vadd.f32 0.0, %v3267
    %3269 = vmatmul.f32.gmra.mxu0 %v72
    %v3270 = vpop.f32.mrf.mxu0
    %v3271 = vadd.f32 0.0, %v3270
    %3272 = vmatmul.f32.gmra.mxu0 %v2529
    %v3273 = vpop.f32.mrf.mxu0
    %v3274 = vadd.f32 0.0, %v3273
    %3275 = vdwg.mxu0
    %v3277 = vsel %vm149, %v2759, 0
    %v3280 = vsel %vm149, %v2760, 0
    %v3283 = vsel %vm149, %v2761, 0
    %v3286 = vsel %vm149, %v2762, 0
    %v3289 = vsel %vm149, %v2763, 0
    %v3292 = vsel %vm149, %v2764, 0
    %v3295 = vsel %vm149, %v2765, 0
    %v3298 = vsel %vm149, %v2766, 0
    %3300 = vmatpush.msra.mxu0 0.0
    %3301 = vmatpush.msra.mxu0 0.0
    %3302 = vmatpush.msra.mxu0 0.0
    %3303 = vmatpush.msra.mxu0 0.0
    %3304 = vmatpush.msra.mxu0 0.0
    %3305 = vmatpush.msra.mxu0 0.0
    %3306 = vmatpush.msra.mxu0 0.0
    %3307 = vmatpush.msra.mxu0 0.0
    %3308 = vmatpush.msra.mxu0 0.0
    %3309 = vmatpush.msra.mxu0 0.0
    %3310 = vmatpush.msra.mxu0 0.0
    %3311 = vmatpush.msra.mxu0 0.0
    %3312 = vmatpush.msra.mxu0 0.0
    %3313 = vmatpush.msra.mxu0 0.0
    %3314 = vmatpush.msra.mxu0 0.0
    %3315 = vmatpush.msra.mxu0 %v3274
    %3316 = vmatmul.f32.gmra.mxu0 %v3277
    %v3317 = vpop.f32.mrf.mxu0
    %v3318 = vadd.f32 2e-08, %v3317
    %3319 = vmatmul.f32.gmra.mxu0 %v3280
    %v3320 = vpop.f32.mrf.mxu0
    %v3321 = vadd.f32 2e-08, %v3320
    %3322 = vmatmul.f32.gmra.mxu0 %v3283
    %v3323 = vpop.f32.mrf.mxu0
    %v3324 = vadd.f32 2e-08, %v3323
    %3325 = vmatmul.f32.gmra.mxu0 %v3286
    %v3326 = vpop.f32.mrf.mxu0
    %v3327 = vadd.f32 2e-08, %v3326
    %3328 = vmatmul.f32.gmra.mxu0 %v3289
    %v3329 = vpop.f32.mrf.mxu0
    %v3330 = vadd.f32 2e-08, %v3329
    %3331 = vmatmul.f32.gmra.mxu0 %v3292
    %v3332 = vpop.f32.mrf.mxu0
    %v3333 = vadd.f32 2e-08, %v3332
    %3334 = vmatmul.f32.gmra.mxu0 %v3295
    %v3335 = vpop.f32.mrf.mxu0
    %v3336 = vadd.f32 2e-08, %v3335
    %3337 = vmatmul.f32.gmra.mxu0 %v3298
    %v3338 = vpop.f32.mrf.mxu0
    %v3339 = vadd.f32 2e-08, %v3338
    %3340 = vdwg.mxu0
    %v3341 = vrcp.pop %v3318
    %v3342 = vmul.f32 %v3318, %v3341
    %v3343 = vsub.f32 1.0, %v3342
    %v3344 = vmul.f32 %v3341, %v3343
    %v3345 = vadd.f32 %v3341, %v3344
    %vm3346 = vweird.f32 %v3318
    %vm3347 = vweird.f32 %v3341
    %vm3348 = vmor %vm3346, %vm3347
    %v3349 = vsel %vm3348, %v3341, %v3345
    %v3350 = vand.u32 2147483647, %v3318
    %vm3351 = vcmp.eq.f32.partialorder %v3350, 8.507059e+37
    %v3352 = vand.u32 %v3318, 2147483648
    %v3353 = vor.u32 1.1754944e-38, %v3352
    %v3354 = vsel %vm3351, %v3353, %v3349
    %v3355 = vmul.f32 %v3250, %v3354
    %v3356 = vrcp.pop %v3321
    %v3357 = vmul.f32 %v3321, %v3356
    %v3358 = vsub.f32 1.0, %v3357
    %v3359 = vmul.f32 %v3356, %v3358
    %v3360 = vadd.f32 %v3356, %v3359
    %vm3361 = vweird.f32 %v3321
    %vm3362 = vweird.f32 %v3356
    %vm3363 = vmor %vm3361, %vm3362
    %v3364 = vsel %vm3363, %v3356, %v3360
    %v3365 = vand.u32 2147483647, %v3321
    %vm3366 = vcmp.eq.f32.partialorder %v3365, 8.507059e+37
    %v3367 = vand.u32 %v3321, 2147483648
    %v3368 = vor.u32 1.1754944e-38, %v3367
    %v3369 = vsel %vm3366, %v3368, %v3364
    %v3370 = vmul.f32 %v3253, %v3369
    %v3371 = vrcp.pop %v3324
    %v3372 = vmul.f32 %v3324, %v3371
    %v3373 = vsub.f32 1.0, %v3372
    %v3374 = vmul.f32 %v3371, %v3373
    %v3375 = vadd.f32 %v3371, %v3374
    %vm3376 = vweird.f32 %v3324
    %vm3377 = vweird.f32 %v3371
    %vm3378 = vmor %vm3376, %vm3377
    %v3379 = vsel %vm3378, %v3371, %v3375
    %v3380 = vand.u32 2147483647, %v3324
    %vm3381 = vcmp.eq.f32.partialorder %v3380, 8.507059e+37
    %v3382 = vand.u32 %v3324, 2147483648
    %v3383 = vor.u32 1.1754944e-38, %v3382
    %v3384 = vsel %vm3381, %v3383, %v3379
    %v3385 = vmul.f32 %v3256, %v3384
    %v3386 = vrcp.pop %v3327
    %v3387 = vmul.f32 %v3327, %v3386
    %v3388 = vsub.f32 1.0, %v3387
    %v3389 = vmul.f32 %v3386, %v3388
    %v3390 = vadd.f32 %v3386, %v3389
    %vm3391 = vweird.f32 %v3327
    %vm3392 = vweird.f32 %v3386
    %vm3393 = vmor %vm3391, %vm3392
    %v3394 = vsel %vm3393, %v3386, %v3390
    %v3395 = vand.u32 2147483647, %v3327
    %vm3396 = vcmp.eq.f32.partialorder %v3395, 8.507059e+37
    %v3397 = vand.u32 %v3327, 2147483648
    %v3398 = vor.u32 1.1754944e-38, %v3397
    %v3399 = vsel %vm3396, %v3398, %v3394
    %v3400 = vmul.f32 %v3259, %v3399
    %v3401 = vrcp.pop %v3330
    %v3402 = vmul.f32 %v3330, %v3401
    %v3403 = vsub.f32 1.0, %v3402
    %v3404 = vmul.f32 %v3401, %v3403
    %v3405 = vadd.f32 %v3401, %v3404
    %vm3406 = vweird.f32 %v3330
    %vm3407 = vweird.f32 %v3401
    %vm3408 = vmor %vm3406, %vm3407
    %v3409 = vsel %vm3408, %v3401, %v3405
    %v3410 = vand.u32 2147483647, %v3330
    %vm3411 = vcmp.eq.f32.partialorder %v3410, 8.507059e+37
    %v3412 = vand.u32 %v3330, 2147483648
    %v3413 = vor.u32 1.1754944e-38, %v3412
    %v3414 = vsel %vm3411, %v3413, %v3409
    %v3415 = vmul.f32 %v3262, %v3414
    %v3416 = vrcp.pop %v3333
    %v3417 = vmul.f32 %v3333, %v3416
    %v3418 = vsub.f32 1.0, %v3417
    %v3419 = vmul.f32 %v3416, %v3418
    %v3420 = vadd.f32 %v3416, %v3419
    %vm3421 = vweird.f32 %v3333
    %vm3422 = vweird.f32 %v3416
    %vm3423 = vmor %vm3421, %vm3422
    %v3424 = vsel %vm3423, %v3416, %v3420
    %v3425 = vand.u32 2147483647, %v3333
    %vm3426 = vcmp.eq.f32.partialorder %v3425, 8.507059e+37
    %v3427 = vand.u32 %v3333, 2147483648
    %v3428 = vor.u32 1.1754944e-38, %v3427
    %v3429 = vsel %vm3426, %v3428, %v3424
    %v3430 = vmul.f32 %v3265, %v3429
    %v3431 = vrcp.pop %v3336
    %v3432 = vmul.f32 %v3336, %v3431
    %v3433 = vsub.f32 1.0, %v3432
    %v3434 = vmul.f32 %v3431, %v3433
    %v3435 = vadd.f32 %v3431, %v3434
    %vm3436 = vweird.f32 %v3336
    %vm3437 = vweird.f32 %v3431
    %vm3438 = vmor %vm3436, %vm3437
    %v3439 = vsel %vm3438, %v3431, %v3435
    %v3440 = vand.u32 2147483647, %v3336
    %vm3441 = vcmp.eq.f32.partialorder %v3440, 8.507059e+37
    %v3442 = vand.u32 %v3336, 2147483648
    %v3443 = vor.u32 1.1754944e-38, %v3442
    %v3444 = vsel %vm3441, %v3443, %v3439
    %v3445 = vmul.f32 %v3268, %v3444
    %v3446 = vrcp.pop %v3339
    %v3447 = vmul.f32 %v3339, %v3446
    %v3448 = vsub.f32 1.0, %v3447
    %v3449 = vmul.f32 %v3446, %v3448
    %v3450 = vadd.f32 %v3446, %v3449
    %vm3451 = vweird.f32 %v3339
    %vm3452 = vweird.f32 %v3446
    %vm3453 = vmor %vm3451, %vm3452
    %v3454 = vsel %vm3453, %v3446, %v3450
    %v3455 = vand.u32 2147483647, %v3339
    %vm3456 = vcmp.eq.f32.partialorder %v3455, 8.507059e+37
    %v3457 = vand.u32 %v3339, 2147483648
    %v3458 = vor.u32 1.1754944e-38, %v3457
    %v3459 = vsel %vm3456, %v3458, %v3454
    %v3460 = vmul.f32 %v3271, %v3459
    %v3461 = vmul.f32 %v2759, %v3355
    %v3462 = vmul.f32 %v2760, %v3370
    %v3463 = vmul.f32 %v2761, %v3385
    %v3464 = vmul.f32 %v2762, %v3400
    %v3465 = vmul.f32 %v2763, %v3415
    %v3466 = vmul.f32 %v2764, %v3430
    %v3467 = vmul.f32 %v2765, %v3445
    %v3468 = vmul.f32 %v2766, %v3460
    %3469 = vxpose.xlu0.b32.start [1/16] %v3110, 128
    %3470 = vxpose.xlu0.b32.cont [2/16] %v3111, 128
    %3471 = vxpose.xlu0.b32.cont [3/16] %v3112, 128
    %3472 = vxpose.xlu0.b32.cont [4/16] %v3113, 128
    %3473 = vxpose.xlu0.b32.cont [5/16] %v3114, 128
    %3474 = vxpose.xlu0.b32.cont [6/16] %v3115, 128
    %3475 = vxpose.xlu0.b32.cont [7/16] %v3116, 128
    %3476 = vxpose.xlu0.b32.cont [8/16] %v3117, 128
    %3477 = vxpose.xlu0.b32.cont [9/16] 0.0, 128
    %3478 = vxpose.xlu0.b32.cont [10/16] 0.0, 128
    %3479 = vxpose.xlu0.b32.cont [11/16] 0.0, 128
    %3480 = vxpose.xlu0.b32.cont [12/16] 0.0, 128
    %3481 = vxpose.xlu0.b32.cont [13/16] 0.0, 128
    %3482 = vxpose.xlu0.b32.cont [14/16] 0.0, 128
    %3483 = vxpose.xlu0.b32.cont [15/16] 0.0, 128
    %3484 = vxpose.xlu0.b32.end [16/16] 0.0, 128
    %v3485 = vpop.trf.xlu0
    %v3486 = vpop.trf.xlu0
    %v3487 = vpop.trf.xlu0
    %v3488 = vpop.trf.xlu0
    %v3489 = vpop.trf.xlu0
    %v3490 = vpop.trf.xlu0
    %v3491 = vpop.trf.xlu0
    %v3492 = vpop.trf.xlu0
    %v3493 = vpop.trf.xlu0
    %v3494 = vpop.trf.xlu0
    %v3495 = vpop.trf.xlu0
    %v3496 = vpop.trf.xlu0
    %v3497 = vpop.trf.xlu0
    %v3498 = vpop.trf.xlu0
    %v3499 = vpop.trf.xlu0
    %v3500 = vpop.trf.xlu0
    %v3502 = vsel %vm105, %v3485, 0
    %3504 = vmatpush.msra.mxu0 0.0
    %3505 = vmatpush.msra.mxu0 0.0
    %3506 = vmatpush.msra.mxu0 0.0
    %3507 = vmatpush.msra.mxu0 0.0
    %3508 = vmatpush.msra.mxu0 0.0
    %3509 = vmatpush.msra.mxu0 0.0
    %3510 = vmatpush.msra.mxu0 0.0
    %3511 = vmatpush.msra.mxu0 0.0
    %3512 = vmatpush.msra.mxu0 %v55
    %3513 = vmatpush.msra.mxu0 %v54
    %3514 = vmatpush.msra.mxu0 %v53
    %3515 = vmatpush.msra.mxu0 %v52
    %3516 = vmatpush.msra.mxu0 %v51
    %3517 = vmatpush.msra.mxu0 %v50
    %3518 = vmatpush.msra.mxu0 %v49
    %3519 = vmatpush.msra.mxu0 %v48
    %3520 = vmatmul.f32.gmra.mxu0 %v3502
    %v3521 = vpop.f32.mrf.mxu0
    %v3522 = vadd.f32 0.0, %v3521
    %3523 = vdwg.mxu0
    %3524 = vmatpush.msra.mxu0 0.0
    %3525 = vmatpush.msra.mxu0 0.0
    %3526 = vmatpush.msra.mxu0 0.0
    %3527 = vmatpush.msra.mxu0 0.0
    %3528 = vmatpush.msra.mxu0 0.0
    %3529 = vmatpush.msra.mxu0 0.0
    %3530 = vmatpush.msra.mxu0 0.0
    %3531 = vmatpush.msra.mxu0 0.0
    %3532 = vmatpush.msra.mxu0 %v3117
    %3533 = vmatpush.msra.mxu0 %v3116
    %3534 = vmatpush.msra.mxu0 %v3115
    %3535 = vmatpush.msra.mxu0 %v3114
    %3536 = vmatpush.msra.mxu0 %v3113
    %3537 = vmatpush.msra.mxu0 %v3112
    %3538 = vmatpush.msra.mxu0 %v3111
    %3539 = vmatpush.msra.mxu0 %v3110
    %3540 = vmatmul.f32.gmra.mxu0 %v3502
    %v3541 = vpop.f32.mrf.mxu0
    %v3542 = vadd.f32 0.0, %v3541
    %3543 = vdwg.mxu0
    %v3545 = vsel %vm149, %v3542, 0
    %3547 = vmatpush.msra.mxu0 0.0
    %3548 = vmatpush.msra.mxu0 0.0
    %3549 = vmatpush.msra.mxu0 0.0
    %3550 = vmatpush.msra.mxu0 0.0
    %3551 = vmatpush.msra.mxu0 0.0
    %3552 = vmatpush.msra.mxu0 0.0
    %3553 = vmatpush.msra.mxu0 0.0
    %3554 = vmatpush.msra.mxu0 0.0
    %3555 = vmatpush.msra.mxu0 0.0
    %3556 = vmatpush.msra.mxu0 0.0
    %3557 = vmatpush.msra.mxu0 0.0
    %3558 = vmatpush.msra.mxu0 0.0
    %3559 = vmatpush.msra.mxu0 0.0
    %3560 = vmatpush.msra.mxu0 0.0
    %3561 = vmatpush.msra.mxu0 0.0
    %3562 = vmatpush.msra.mxu0 %v2880
    %3563 = vmatmul.f32.gmra.mxu0 %v3545
    %v3564 = vpop.f32.mrf.mxu0
    %v3565 = vadd.f32 2e-08, %v3564
    %3566 = vdwg.mxu0
    %v3567 = vrcp.pop %v3565
    %v3568 = vmul.f32 %v3565, %v3567
    %v3569 = vsub.f32 1.0, %v3568
    %v3570 = vmul.f32 %v3567, %v3569
    %v3571 = vadd.f32 %v3567, %v3570
    %vm3572 = vweird.f32 %v3565
    %vm3573 = vweird.f32 %v3567
    %vm3574 = vmor %vm3572, %vm3573
    %v3575 = vsel %vm3574, %v3567, %v3571
    %v3576 = vand.u32 2147483647, %v3565
    %vm3577 = vcmp.eq.f32.partialorder %v3576, 8.507059e+37
    %v3578 = vand.u32 %v3565, 2147483648
    %v3579 = vor.u32 1.1754944e-38, %v3578
    %v3580 = vsel %vm3577, %v3579, %v3575
    %v3581 = vmul.f32 %v3522, %v3580
    %v3582 = vmul.f32 %v2880, %v3581
    %3583 = vmatpush.xpose.msra.mxu0 0.0
    %3584 = vmatpush.xpose.msra.mxu0 0.0
    %3585 = vmatpush.xpose.msra.mxu0 0.0
    %3586 = vmatpush.xpose.msra.mxu0 0.0
    %3587 = vmatpush.xpose.msra.mxu0 0.0
    %3588 = vmatpush.xpose.msra.mxu0 0.0
    %3589 = vmatpush.xpose.msra.mxu0 0.0
    %3590 = vmatpush.xpose.msra.mxu0 0.0
    %3591 = vmatpush.xpose.msra.mxu0 0.0
    %3592 = vmatpush.xpose.msra.mxu0 0.0
    %3593 = vmatpush.xpose.msra.mxu0 0.0
    %3594 = vmatpush.xpose.msra.mxu0 0.0
    %3595 = vmatpush.xpose.msra.mxu0 0.0
    %3596 = vmatpush.xpose.msra.mxu0 0.0
    %3597 = vmatpush.xpose.msra.mxu0 0.0
    %3598 = vmatpush.xpose.msra.mxu0 %v2880
    %3599 = vmatmul.f32.gmra.mxu0 %v48
    %v3600 = vpop.f32.mrf.mxu0
    %v3601 = vadd.f32 0.0, %v3600
    %3602 = vmatmul.f32.gmra.mxu0 %v49
    %v3603 = vpop.f32.mrf.mxu0
    %v3604 = vadd.f32 0.0, %v3603
    %3605 = vmatmul.f32.gmra.mxu0 %v50
    %v3606 = vpop.f32.mrf.mxu0
    %v3607 = vadd.f32 0.0, %v3606
    %3608 = vmatmul.f32.gmra.mxu0 %v51
    %v3609 = vpop.f32.mrf.mxu0
    %v3610 = vadd.f32 0.0, %v3609
    %3611 = vmatmul.f32.gmra.mxu0 %v52
    %v3612 = vpop.f32.mrf.mxu0
    %v3613 = vadd.f32 0.0, %v3612
    %3614 = vmatmul.f32.gmra.mxu0 %v53
    %v3615 = vpop.f32.mrf.mxu0
    %v3616 = vadd.f32 0.0, %v3615
    %3617 = vmatmul.f32.gmra.mxu0 %v54
    %v3618 = vpop.f32.mrf.mxu0
    %v3619 = vadd.f32 0.0, %v3618
    %3620 = vmatmul.f32.gmra.mxu0 %v55
    %v3621 = vpop.f32.mrf.mxu0
    %v3622 = vadd.f32 0.0, %v3621
    %3623 = vmatmul.f32.gmra.mxu0 %v2880
    %v3624 = vpop.f32.mrf.mxu0
    %v3625 = vadd.f32 0.0, %v3624
    %3626 = vdwg.mxu0
    %v3628 = vsel %vm149, %v3110, 0
    %v3631 = vsel %vm149, %v3111, 0
    %v3634 = vsel %vm149, %v3112, 0
    %v3637 = vsel %vm149, %v3113, 0
    %v3640 = vsel %vm149, %v3114, 0
    %v3643 = vsel %vm149, %v3115, 0
    %v3646 = vsel %vm149, %v3116, 0
    %v3649 = vsel %vm149, %v3117, 0
    %3651 = vmatpush.msra.mxu0 0.0
    %3652 = vmatpush.msra.mxu0 0.0
    %3653 = vmatpush.msra.mxu0 0.0
    %3654 = vmatpush.msra.mxu0 0.0
    %3655 = vmatpush.msra.mxu0 0.0
    %3656 = vmatpush.msra.mxu0 0.0
    %3657 = vmatpush.msra.mxu0 0.0
    %3658 = vmatpush.msra.mxu0 0.0
    %3659 = vmatpush.msra.mxu0 0.0
    %3660 = vmatpush.msra.mxu0 0.0
    %3661 = vmatpush.msra.mxu0 0.0
    %3662 = vmatpush.msra.mxu0 0.0
    %3663 = vmatpush.msra.mxu0 0.0
    %3664 = vmatpush.msra.mxu0 0.0
    %3665 = vmatpush.msra.mxu0 0.0
    %3666 = vmatpush.msra.mxu0 %v3625
    %3667 = vmatmul.f32.gmra.mxu0 %v3628
    %v3668 = vpop.f32.mrf.mxu0
    %v3669 = vadd.f32 2e-08, %v3668
    %3670 = vmatmul.f32.gmra.mxu0 %v3631
    %v3671 = vpop.f32.mrf.mxu0
    %v3672 = vadd.f32 2e-08, %v3671
    %3673 = vmatmul.f32.gmra.mxu0 %v3634
    %v3674 = vpop.f32.mrf.mxu0
    %v3675 = vadd.f32 2e-08, %v3674
    %3676 = vmatmul.f32.gmra.mxu0 %v3637
    %v3677 = vpop.f32.mrf.mxu0
    %v3678 = vadd.f32 2e-08, %v3677
    %3679 = vmatmul.f32.gmra.mxu0 %v3640
    %v3680 = vpop.f32.mrf.mxu0
    %v3681 = vadd.f32 2e-08, %v3680
    %3682 = vmatmul.f32.gmra.mxu0 %v3643
    %v3683 = vpop.f32.mrf.mxu0
    %v3684 = vadd.f32 2e-08, %v3683
    %3685 = vmatmul.f32.gmra.mxu0 %v3646
    %v3686 = vpop.f32.mrf.mxu0
    %v3687 = vadd.f32 2e-08, %v3686
    %3688 = vmatmul.f32.gmra.mxu0 %v3649
    %v3689 = vpop.f32.mrf.mxu0
    %v3690 = vadd.f32 2e-08, %v3689
    %3691 = vdwg.mxu0
    %v3692 = vrcp.pop %v3669
    %v3693 = vmul.f32 %v3669, %v3692
    %v3694 = vsub.f32 1.0, %v3693
    %v3695 = vmul.f32 %v3692, %v3694
    %v3696 = vadd.f32 %v3692, %v3695
    %vm3697 = vweird.f32 %v3669
    %vm3698 = vweird.f32 %v3692
    %vm3699 = vmor %vm3697, %vm3698
    %v3700 = vsel %vm3699, %v3692, %v3696
    %v3701 = vand.u32 2147483647, %v3669
    %vm3702 = vcmp.eq.f32.partialorder %v3701, 8.507059e+37
    %v3703 = vand.u32 %v3669, 2147483648
    %v3704 = vor.u32 1.1754944e-38, %v3703
    %v3705 = vsel %vm3702, %v3704, %v3700
    %v3706 = vmul.f32 %v3601, %v3705
    %v3707 = vrcp.pop %v3672
    %v3708 = vmul.f32 %v3672, %v3707
    %v3709 = vsub.f32 1.0, %v3708
    %v3710 = vmul.f32 %v3707, %v3709
    %v3711 = vadd.f32 %v3707, %v3710
    %vm3712 = vweird.f32 %v3672
    %vm3713 = vweird.f32 %v3707
    %vm3714 = vmor %vm3712, %vm3713
    %v3715 = vsel %vm3714, %v3707, %v3711
    %v3716 = vand.u32 2147483647, %v3672
    %vm3717 = vcmp.eq.f32.partialorder %v3716, 8.507059e+37
    %v3718 = vand.u32 %v3672, 2147483648
    %v3719 = vor.u32 1.1754944e-38, %v3718
    %v3720 = vsel %vm3717, %v3719, %v3715
    %v3721 = vmul.f32 %v3604, %v3720
    %v3722 = vrcp.pop %v3675
    %v3723 = vmul.f32 %v3675, %v3722
    %v3724 = vsub.f32 1.0, %v3723
    %v3725 = vmul.f32 %v3722, %v3724
    %v3726 = vadd.f32 %v3722, %v3725
    %vm3727 = vweird.f32 %v3675
    %vm3728 = vweird.f32 %v3722
    %vm3729 = vmor %vm3727, %vm3728
    %v3730 = vsel %vm3729, %v3722, %v3726
    %v3731 = vand.u32 2147483647, %v3675
    %vm3732 = vcmp.eq.f32.partialorder %v3731, 8.507059e+37
    %v3733 = vand.u32 %v3675, 2147483648
    %v3734 = vor.u32 1.1754944e-38, %v3733
    %v3735 = vsel %vm3732, %v3734, %v3730
    %v3736 = vmul.f32 %v3607, %v3735
    %v3737 = vrcp.pop %v3678
    %v3738 = vmul.f32 %v3678, %v3737
    %v3739 = vsub.f32 1.0, %v3738
    %v3740 = vmul.f32 %v3737, %v3739
    %v3741 = vadd.f32 %v3737, %v3740
    %vm3742 = vweird.f32 %v3678
    %vm3743 = vweird.f32 %v3737
    %vm3744 = vmor %vm3742, %vm3743
    %v3745 = vsel %vm3744, %v3737, %v3741
    %v3746 = vand.u32 2147483647, %v3678
    %vm3747 = vcmp.eq.f32.partialorder %v3746, 8.507059e+37
    %v3748 = vand.u32 %v3678, 2147483648
    %v3749 = vor.u32 1.1754944e-38, %v3748
    %v3750 = vsel %vm3747, %v3749, %v3745
    %v3751 = vmul.f32 %v3610, %v3750
    %v3752 = vrcp.pop %v3681
    %v3753 = vmul.f32 %v3681, %v3752
    %v3754 = vsub.f32 1.0, %v3753
    %v3755 = vmul.f32 %v3752, %v3754
    %v3756 = vadd.f32 %v3752, %v3755
    %vm3757 = vweird.f32 %v3681
    %vm3758 = vweird.f32 %v3752
    %vm3759 = vmor %vm3757, %vm3758
    %v3760 = vsel %vm3759, %v3752, %v3756
    %v3761 = vand.u32 2147483647, %v3681
    %vm3762 = vcmp.eq.f32.partialorder %v3761, 8.507059e+37
    %v3763 = vand.u32 %v3681, 2147483648
    %v3764 = vor.u32 1.1754944e-38, %v3763
    %v3765 = vsel %vm3762, %v3764, %v3760
    %v3766 = vmul.f32 %v3613, %v3765
    %v3767 = vrcp.pop %v3684
    %v3768 = vmul.f32 %v3684, %v3767
    %v3769 = vsub.f32 1.0, %v3768
    %v3770 = vmul.f32 %v3767, %v3769
    %v3771 = vadd.f32 %v3767, %v3770
    %vm3772 = vweird.f32 %v3684
    %vm3773 = vweird.f32 %v3767
    %vm3774 = vmor %vm3772, %vm3773
    %v3775 = vsel %vm3774, %v3767, %v3771
    %v3776 = vand.u32 2147483647, %v3684
    %vm3777 = vcmp.eq.f32.partialorder %v3776, 8.507059e+37
    %v3778 = vand.u32 %v3684, 2147483648
    %v3779 = vor.u32 1.1754944e-38, %v3778
    %v3780 = vsel %vm3777, %v3779, %v3775
    %v3781 = vmul.f32 %v3616, %v3780
    %v3782 = vrcp.pop %v3687
    %v3783 = vmul.f32 %v3687, %v3782
    %v3784 = vsub.f32 1.0, %v3783
    %v3785 = vmul.f32 %v3782, %v3784
    %v3786 = vadd.f32 %v3782, %v3785
    %vm3787 = vweird.f32 %v3687
    %vm3788 = vweird.f32 %v3782
    %vm3789 = vmor %vm3787, %vm3788
    %v3790 = vsel %vm3789, %v3782, %v3786
    %v3791 = vand.u32 2147483647, %v3687
    %vm3792 = vcmp.eq.f32.partialorder %v3791, 8.507059e+37
    %v3793 = vand.u32 %v3687, 2147483648
    %v3794 = vor.u32 1.1754944e-38, %v3793
    %v3795 = vsel %vm3792, %v3794, %v3790
    %v3796 = vmul.f32 %v3619, %v3795
    %v3797 = vrcp.pop %v3690
    %v3798 = vmul.f32 %v3690, %v3797
    %v3799 = vsub.f32 1.0, %v3798
    %v3800 = vmul.f32 %v3797, %v3799
    %v3801 = vadd.f32 %v3797, %v3800
    %vm3802 = vweird.f32 %v3690
    %vm3803 = vweird.f32 %v3797
    %vm3804 = vmor %vm3802, %vm3803
    %v3805 = vsel %vm3804, %v3797, %v3801
    %v3806 = vand.u32 2147483647, %v3690
    %vm3807 = vcmp.eq.f32.partialorder %v3806, 8.507059e+37
    %v3808 = vand.u32 %v3690, 2147483648
    %v3809 = vor.u32 1.1754944e-38, %v3808
    %v3810 = vsel %vm3807, %v3809, %v3805
    %v3811 = vmul.f32 %v3622, %v3810
    %v3812 = vmul.f32 %v3110, %v3706
    %v3813 = vmul.f32 %v3111, %v3721
    %v3814 = vmul.f32 %v3112, %v3736
    %v3815 = vmul.f32 %v3113, %v3751
    %v3816 = vmul.f32 %v3114, %v3766
    %v3817 = vmul.f32 %v3115, %v3781
    %v3818 = vmul.f32 %v3116, %v3796
    %v3819 = vmul.f32 %v3117, %v3811
    %3820 = vxpose.xlu0.b32.start [1/16] %v3461, 128
    %3821 = vxpose.xlu0.b32.cont [2/16] %v3462, 128
    %3822 = vxpose.xlu0.b32.cont [3/16] %v3463, 128
    %3823 = vxpose.xlu0.b32.cont [4/16] %v3464, 128
    %3824 = vxpose.xlu0.b32.cont [5/16] %v3465, 128
    %3825 = vxpose.xlu0.b32.cont [6/16] %v3466, 128
    %3826 = vxpose.xlu0.b32.cont [7/16] %v3467, 128
    %3827 = vxpose.xlu0.b32.cont [8/16] %v3468, 128
    %3828 = vxpose.xlu0.b32.cont [9/16] 0.0, 128
    %3829 = vxpose.xlu0.b32.cont [10/16] 0.0, 128
    %3830 = vxpose.xlu0.b32.cont [11/16] 0.0, 128
    %3831 = vxpose.xlu0.b32.cont [12/16] 0.0, 128
    %3832 = vxpose.xlu0.b32.cont [13/16] 0.0, 128
    %3833 = vxpose.xlu0.b32.cont [14/16] 0.0, 128
    %3834 = vxpose.xlu0.b32.cont [15/16] 0.0, 128
    %3835 = vxpose.xlu0.b32.end [16/16] 0.0, 128
    %v3836 = vpop.trf.xlu0
    %v3837 = vpop.trf.xlu0
    %v3838 = vpop.trf.xlu0
    %v3839 = vpop.trf.xlu0
    %v3840 = vpop.trf.xlu0
    %v3841 = vpop.trf.xlu0
    %v3842 = vpop.trf.xlu0
    %v3843 = vpop.trf.xlu0
    %v3844 = vpop.trf.xlu0
    %v3845 = vpop.trf.xlu0
    %v3846 = vpop.trf.xlu0
    %v3847 = vpop.trf.xlu0
    %v3848 = vpop.trf.xlu0
    %v3849 = vpop.trf.xlu0
    %v3850 = vpop.trf.xlu0
    %v3851 = vpop.trf.xlu0
    %v3853 = vsel %vm105, %v3836, 0
    %3855 = vmatpush.msra.mxu0 0.0
    %3856 = vmatpush.msra.mxu0 0.0
    %3857 = vmatpush.msra.mxu0 0.0
    %3858 = vmatpush.msra.mxu0 0.0
    %3859 = vmatpush.msra.mxu0 0.0
    %3860 = vmatpush.msra.mxu0 0.0
    %3861 = vmatpush.msra.mxu0 0.0
    %3862 = vmatpush.msra.mxu0 0.0
    %3863 = vmatpush.msra.mxu0 %v72
    %3864 = vmatpush.msra.mxu0 %v71
    %3865 = vmatpush.msra.mxu0 %v70
    %3866 = vmatpush.msra.mxu0 %v69
    %3867 = vmatpush.msra.mxu0 %v68
    %3868 = vmatpush.msra.mxu0 %v67
    %3869 = vmatpush.msra.mxu0 %v66
    %3870 = vmatpush.msra.mxu0 %v65
    %3871 = vmatmul.f32.gmra.mxu0 %v3853
    %v3872 = vpop.f32.mrf.mxu0
    %v3873 = vadd.f32 0.0, %v3872
    %3874 = vdwg.mxu0
    %3875 = vmatpush.msra.mxu0 0.0
    %3876 = vmatpush.msra.mxu0 0.0
    %3877 = vmatpush.msra.mxu0 0.0
    %3878 = vmatpush.msra.mxu0 0.0
    %3879 = vmatpush.msra.mxu0 0.0
    %3880 = vmatpush.msra.mxu0 0.0
    %3881 = vmatpush.msra.mxu0 0.0
    %3882 = vmatpush.msra.mxu0 0.0
    %3883 = vmatpush.msra.mxu0 %v3468
    %3884 = vmatpush.msra.mxu0 %v3467
    %3885 = vmatpush.msra.mxu0 %v3466
    %3886 = vmatpush.msra.mxu0 %v3465
    %3887 = vmatpush.msra.mxu0 %v3464
    %3888 = vmatpush.msra.mxu0 %v3463
    %3889 = vmatpush.msra.mxu0 %v3462
    %3890 = vmatpush.msra.mxu0 %v3461
    %3891 = vmatmul.f32.gmra.mxu0 %v3853
    %v3892 = vpop.f32.mrf.mxu0
    %v3893 = vadd.f32 0.0, %v3892
    %3894 = vdwg.mxu0
    %v3896 = vsel %vm149, %v3893, 0
    %3898 = vmatpush.msra.mxu0 0.0
    %3899 = vmatpush.msra.mxu0 0.0
    %3900 = vmatpush.msra.mxu0 0.0
    %3901 = vmatpush.msra.mxu0 0.0
    %3902 = vmatpush.msra.mxu0 0.0
    %3903 = vmatpush.msra.mxu0 0.0
    %3904 = vmatpush.msra.mxu0 0.0
    %3905 = vmatpush.msra.mxu0 0.0
    %3906 = vmatpush.msra.mxu0 0.0
    %3907 = vmatpush.msra.mxu0 0.0
    %3908 = vmatpush.msra.mxu0 0.0
    %3909 = vmatpush.msra.mxu0 0.0
    %3910 = vmatpush.msra.mxu0 0.0
    %3911 = vmatpush.msra.mxu0 0.0
    %3912 = vmatpush.msra.mxu0 0.0
    %3913 = vmatpush.msra.mxu0 %v3231
    %3914 = vmatmul.f32.gmra.mxu0 %v3896
    %v3915 = vpop.f32.mrf.mxu0
    %v3916 = vadd.f32 2e-08, %v3915
    %3917 = vdwg.mxu0
    %v3918 = vrcp.pop %v3916
    %v3919 = vmul.f32 %v3916, %v3918
    %v3920 = vsub.f32 1.0, %v3919
    %v3921 = vmul.f32 %v3918, %v3920
    %v3922 = vadd.f32 %v3918, %v3921
    %vm3923 = vweird.f32 %v3916
    %vm3924 = vweird.f32 %v3918
    %vm3925 = vmor %vm3923, %vm3924
    %v3926 = vsel %vm3925, %v3918, %v3922
    %v3927 = vand.u32 2147483647, %v3916
    %vm3928 = vcmp.eq.f32.partialorder %v3927, 8.507059e+37
    %v3929 = vand.u32 %v3916, 2147483648
    %v3930 = vor.u32 1.1754944e-38, %v3929
    %v3931 = vsel %vm3928, %v3930, %v3926
    %v3932 = vmul.f32 %v3873, %v3931
    %v3933 = vmul.f32 %v3231, %v3932
    %3934 = vmatpush.xpose.msra.mxu0 0.0
    %3935 = vmatpush.xpose.msra.mxu0 0.0
    %3936 = vmatpush.xpose.msra.mxu0 0.0
    %3937 = vmatpush.xpose.msra.mxu0 0.0
    %3938 = vmatpush.xpose.msra.mxu0 0.0
    %3939 = vmatpush.xpose.msra.mxu0 0.0
    %3940 = vmatpush.xpose.msra.mxu0 0.0
    %3941 = vmatpush.xpose.msra.mxu0 0.0
    %3942 = vmatpush.xpose.msra.mxu0 0.0
    %3943 = vmatpush.xpose.msra.mxu0 0.0
    %3944 = vmatpush.xpose.msra.mxu0 0.0
    %3945 = vmatpush.xpose.msra.mxu0 0.0
    %3946 = vmatpush.xpose.msra.mxu0 0.0
    %3947 = vmatpush.xpose.msra.mxu0 0.0
    %3948 = vmatpush.xpose.msra.mxu0 0.0
    %3949 = vmatpush.xpose.msra.mxu0 %v3231
    %3950 = vmatmul.f32.gmra.mxu0 %v65
    %v3951 = vpop.f32.mrf.mxu0
    %v3952 = vadd.f32 0.0, %v3951
    %3953 = vmatmul.f32.gmra.mxu0 %v66
    %v3954 = vpop.f32.mrf.mxu0
    %v3955 = vadd.f32 0.0, %v3954
    %3956 = vmatmul.f32.gmra.mxu0 %v67
    %v3957 = vpop.f32.mrf.mxu0
    %v3958 = vadd.f32 0.0, %v3957
    %3959 = vmatmul.f32.gmra.mxu0 %v68
    %v3960 = vpop.f32.mrf.mxu0
    %v3961 = vadd.f32 0.0, %v3960
    %3962 = vmatmul.f32.gmra.mxu0 %v69
    %v3963 = vpop.f32.mrf.mxu0
    %v3964 = vadd.f32 0.0, %v3963
    %3965 = vmatmul.f32.gmra.mxu0 %v70
    %v3966 = vpop.f32.mrf.mxu0
    %v3967 = vadd.f32 0.0, %v3966
    %3968 = vmatmul.f32.gmra.mxu0 %v71
    %v3969 = vpop.f32.mrf.mxu0
    %v3970 = vadd.f32 0.0, %v3969
    %3971 = vmatmul.f32.gmra.mxu0 %v72
    %v3972 = vpop.f32.mrf.mxu0
    %v3973 = vadd.f32 0.0, %v3972
    %3974 = vmatmul.f32.gmra.mxu0 %v3231
    %v3975 = vpop.f32.mrf.mxu0
    %v3976 = vadd.f32 0.0, %v3975
    %3977 = vdwg.mxu0
    %v3979 = vsel %vm149, %v3461, 0
    %v3982 = vsel %vm149, %v3462, 0
    %v3985 = vsel %vm149, %v3463, 0
    %v3988 = vsel %vm149, %v3464, 0
    %v3991 = vsel %vm149, %v3465, 0
    %v3994 = vsel %vm149, %v3466, 0
    %v3997 = vsel %vm149, %v3467, 0
    %v4000 = vsel %vm149, %v3468, 0
    %4002 = vmatpush.msra.mxu0 0.0
    %4003 = vmatpush.msra.mxu0 0.0
    %4004 = vmatpush.msra.mxu0 0.0
    %4005 = vmatpush.msra.mxu0 0.0
    %4006 = vmatpush.msra.mxu0 0.0
    %4007 = vmatpush.msra.mxu0 0.0
    %4008 = vmatpush.msra.mxu0 0.0
    %4009 = vmatpush.msra.mxu0 0.0
    %4010 = vmatpush.msra.mxu0 0.0
    %4011 = vmatpush.msra.mxu0 0.0
    %4012 = vmatpush.msra.mxu0 0.0
    %4013 = vmatpush.msra.mxu0 0.0
    %4014 = vmatpush.msra.mxu0 0.0
    %4015 = vmatpush.msra.mxu0 0.0
    %4016 = vmatpush.msra.mxu0 0.0
    %4017 = vmatpush.msra.mxu0 %v3976
    %4018 = vmatmul.f32.gmra.mxu0 %v3979
    %v4019 = vpop.f32.mrf.mxu0
    %v4020 = vadd.f32 2e-08, %v4019
    %4021 = vmatmul.f32.gmra.mxu0 %v3982
    %v4022 = vpop.f32.mrf.mxu0
    %v4023 = vadd.f32 2e-08, %v4022
    %4024 = vmatmul.f32.gmra.mxu0 %v3985
    %v4025 = vpop.f32.mrf.mxu0
    %v4026 = vadd.f32 2e-08, %v4025
    %4027 = vmatmul.f32.gmra.mxu0 %v3988
    %v4028 = vpop.f32.mrf.mxu0
    %v4029 = vadd.f32 2e-08, %v4028
    %4030 = vmatmul.f32.gmra.mxu0 %v3991
    %v4031 = vpop.f32.mrf.mxu0
    %v4032 = vadd.f32 2e-08, %v4031
    %4033 = vmatmul.f32.gmra.mxu0 %v3994
    %v4034 = vpop.f32.mrf.mxu0
    %v4035 = vadd.f32 2e-08, %v4034
    %4036 = vmatmul.f32.gmra.mxu0 %v3997
    %v4037 = vpop.f32.mrf.mxu0
    %v4038 = vadd.f32 2e-08, %v4037
    %4039 = vmatmul.f32.gmra.mxu0 %v4000
    %v4040 = vpop.f32.mrf.mxu0
    %v4041 = vadd.f32 2e-08, %v4040
    %4042 = vdwg.mxu0
    %v4043 = vrcp.pop %v4020
    %v4044 = vmul.f32 %v4020, %v4043
    %v4045 = vsub.f32 1.0, %v4044
    %v4046 = vmul.f32 %v4043, %v4045
    %v4047 = vadd.f32 %v4043, %v4046
    %vm4048 = vweird.f32 %v4020
    %vm4049 = vweird.f32 %v4043
    %vm4050 = vmor %vm4048, %vm4049
    %v4051 = vsel %vm4050, %v4043, %v4047
    %v4052 = vand.u32 2147483647, %v4020
    %vm4053 = vcmp.eq.f32.partialorder %v4052, 8.507059e+37
    %v4054 = vand.u32 %v4020, 2147483648
    %v4055 = vor.u32 1.1754944e-38, %v4054
    %v4056 = vsel %vm4053, %v4055, %v4051
    %v4057 = vmul.f32 %v3952, %v4056
    %v4058 = vrcp.pop %v4023
    %v4059 = vmul.f32 %v4023, %v4058
    %v4060 = vsub.f32 1.0, %v4059
    %v4061 = vmul.f32 %v4058, %v4060
    %v4062 = vadd.f32 %v4058, %v4061
    %vm4063 = vweird.f32 %v4023
    %vm4064 = vweird.f32 %v4058
    %vm4065 = vmor %vm4063, %vm4064
    %v4066 = vsel %vm4065, %v4058, %v4062
    %v4067 = vand.u32 2147483647, %v4023
    %vm4068 = vcmp.eq.f32.partialorder %v4067, 8.507059e+37
    %v4069 = vand.u32 %v4023, 2147483648
    %v4070 = vor.u32 1.1754944e-38, %v4069
    %v4071 = vsel %vm4068, %v4070, %v4066
    %v4072 = vmul.f32 %v3955, %v4071
    %v4073 = vrcp.pop %v4026
    %v4074 = vmul.f32 %v4026, %v4073
    %v4075 = vsub.f32 1.0, %v4074
    %v4076 = vmul.f32 %v4073, %v4075
    %v4077 = vadd.f32 %v4073, %v4076
    %vm4078 = vweird.f32 %v4026
    %vm4079 = vweird.f32 %v4073
    %vm4080 = vmor %vm4078, %vm4079
    %v4081 = vsel %vm4080, %v4073, %v4077
    %v4082 = vand.u32 2147483647, %v4026
    %vm4083 = vcmp.eq.f32.partialorder %v4082, 8.507059e+37
    %v4084 = vand.u32 %v4026, 2147483648
    %v4085 = vor.u32 1.1754944e-38, %v4084
    %v4086 = vsel %vm4083, %v4085, %v4081
    %v4087 = vmul.f32 %v3958, %v4086
    %v4088 = vrcp.pop %v4029
    %v4089 = vmul.f32 %v4029, %v4088
    %v4090 = vsub.f32 1.0, %v4089
    %v4091 = vmul.f32 %v4088, %v4090
    %v4092 = vadd.f32 %v4088, %v4091
    %vm4093 = vweird.f32 %v4029
    %vm4094 = vweird.f32 %v4088
    %vm4095 = vmor %vm4093, %vm4094
    %v4096 = vsel %vm4095, %v4088, %v4092
    %v4097 = vand.u32 2147483647, %v4029
    %vm4098 = vcmp.eq.f32.partialorder %v4097, 8.507059e+37
    %v4099 = vand.u32 %v4029, 2147483648
    %v4100 = vor.u32 1.1754944e-38, %v4099
    %v4101 = vsel %vm4098, %v4100, %v4096
    %v4102 = vmul.f32 %v3961, %v4101
    %v4103 = vrcp.pop %v4032
    %v4104 = vmul.f32 %v4032, %v4103
    %v4105 = vsub.f32 1.0, %v4104
    %v4106 = vmul.f32 %v4103, %v4105
    %v4107 = vadd.f32 %v4103, %v4106
    %vm4108 = vweird.f32 %v4032
    %vm4109 = vweird.f32 %v4103
    %vm4110 = vmor %vm4108, %vm4109
    %v4111 = vsel %vm4110, %v4103, %v4107
    %v4112 = vand.u32 2147483647, %v4032
    %vm4113 = vcmp.eq.f32.partialorder %v4112, 8.507059e+37
    %v4114 = vand.u32 %v4032, 2147483648
    %v4115 = vor.u32 1.1754944e-38, %v4114
    %v4116 = vsel %vm4113, %v4115, %v4111
    %v4117 = vmul.f32 %v3964, %v4116
    %v4118 = vrcp.pop %v4035
    %v4119 = vmul.f32 %v4035, %v4118
    %v4120 = vsub.f32 1.0, %v4119
    %v4121 = vmul.f32 %v4118, %v4120
    %v4122 = vadd.f32 %v4118, %v4121
    %vm4123 = vweird.f32 %v4035
    %vm4124 = vweird.f32 %v4118
    %vm4125 = vmor %vm4123, %vm4124
    %v4126 = vsel %vm4125, %v4118, %v4122
    %v4127 = vand.u32 2147483647, %v4035
    %vm4128 = vcmp.eq.f32.partialorder %v4127, 8.507059e+37
    %v4129 = vand.u32 %v4035, 2147483648
    %v4130 = vor.u32 1.1754944e-38, %v4129
    %v4131 = vsel %vm4128, %v4130, %v4126
    %v4132 = vmul.f32 %v3967, %v4131
    %v4133 = vrcp.pop %v4038
    %v4134 = vmul.f32 %v4038, %v4133
    %v4135 = vsub.f32 1.0, %v4134
    %v4136 = vmul.f32 %v4133, %v4135
    %v4137 = vadd.f32 %v4133, %v4136
    %vm4138 = vweird.f32 %v4038
    %vm4139 = vweird.f32 %v4133
    %vm4140 = vmor %vm4138, %vm4139
    %v4141 = vsel %vm4140, %v4133, %v4137
    %v4142 = vand.u32 2147483647, %v4038
    %vm4143 = vcmp.eq.f32.partialorder %v4142, 8.507059e+37
    %v4144 = vand.u32 %v4038, 2147483648
    %v4145 = vor.u32 1.1754944e-38, %v4144
    %v4146 = vsel %vm4143, %v4145, %v4141
    %v4147 = vmul.f32 %v3970, %v4146
    %v4148 = vrcp.pop %v4041
    %v4149 = vmul.f32 %v4041, %v4148
    %v4150 = vsub.f32 1.0, %v4149
    %v4151 = vmul.f32 %v4148, %v4150
    %v4152 = vadd.f32 %v4148, %v4151
    %vm4153 = vweird.f32 %v4041
    %vm4154 = vweird.f32 %v4148
    %vm4155 = vmor %vm4153, %vm4154
    %v4156 = vsel %vm4155, %v4148, %v4152
    %v4157 = vand.u32 2147483647, %v4041
    %vm4158 = vcmp.eq.f32.partialorder %v4157, 8.507059e+37
    %v4159 = vand.u32 %v4041, 2147483648
    %v4160 = vor.u32 1.1754944e-38, %v4159
    %v4161 = vsel %vm4158, %v4160, %v4156
    %v4162 = vmul.f32 %v3973, %v4161
    %v4163 = vmul.f32 %v3461, %v4057
    %v4164 = vmul.f32 %v3462, %v4072
    %v4165 = vmul.f32 %v3463, %v4087
    %v4166 = vmul.f32 %v3464, %v4102
    %v4167 = vmul.f32 %v3465, %v4117
    %v4168 = vmul.f32 %v3466, %v4132
    %v4169 = vmul.f32 %v3467, %v4147
    %v4170 = vmul.f32 %v3468, %v4162
    %v4172 = vsel %vm149, %v3812, 0
    %v4175 = vsel %vm149, %v3813, 0
    %v4178 = vsel %vm149, %v3814, 0
    %v4181 = vsel %vm149, %v3815, 0
    %v4184 = vsel %vm149, %v3816, 0
    %v4187 = vsel %vm149, %v3817, 0
    %v4190 = vsel %vm149, %v3818, 0
    %v4193 = vsel %vm149, %v3819, 0
    %4195 = vmatpush.msra.mxu0 0.0
    %4196 = vmatpush.msra.mxu0 0.0
    %4197 = vmatpush.msra.mxu0 0.0
    %4198 = vmatpush.msra.mxu0 0.0
    %4199 = vmatpush.msra.mxu0 0.0
    %4200 = vmatpush.msra.mxu0 0.0
    %4201 = vmatpush.msra.mxu0 0.0
    %4202 = vmatpush.msra.mxu0 0.0
    %4203 = vmatpush.msra.mxu0 0.0
    %4204 = vmatpush.msra.mxu0 0.0
    %4205 = vmatpush.msra.mxu0 0.0
    %4206 = vmatpush.msra.mxu0 0.0
    %4207 = vmatpush.msra.mxu0 0.0
    %4208 = vmatpush.msra.mxu0 0.0
    %4209 = vmatpush.msra.mxu0 0.0
    %4210 = vmatpush.msra.mxu0 %v3582
    %4211 = vmatmul.f32.gmra.mxu0 %v4172
    %v4212 = vpop.f32.mrf.mxu0
    %v4213 = vadd.f32 0.0, %v4212
    %4214 = vmatmul.f32.gmra.mxu0 %v4175
    %v4215 = vpop.f32.mrf.mxu0
    %v4216 = vadd.f32 0.0, %v4215
    %4217 = vmatmul.f32.gmra.mxu0 %v4178
    %v4218 = vpop.f32.mrf.mxu0
    %v4219 = vadd.f32 0.0, %v4218
    %4220 = vmatmul.f32.gmra.mxu0 %v4181
    %v4221 = vpop.f32.mrf.mxu0
    %v4222 = vadd.f32 0.0, %v4221
    %4223 = vmatmul.f32.gmra.mxu0 %v4184
    %v4224 = vpop.f32.mrf.mxu0
    %v4225 = vadd.f32 0.0, %v4224
    %4226 = vmatmul.f32.gmra.mxu0 %v4187
    %v4227 = vpop.f32.mrf.mxu0
    %v4228 = vadd.f32 0.0, %v4227
    %4229 = vmatmul.f32.gmra.mxu0 %v4190
    %v4230 = vpop.f32.mrf.mxu0
    %v4231 = vadd.f32 0.0, %v4230
    %4232 = vmatmul.f32.gmra.mxu0 %v4193
    %v4233 = vpop.f32.mrf.mxu0
    %v4234 = vadd.f32 0.0, %v4233
    %4235 = vdwg.mxu0
    %4236 = vst [vmem:[#allocation5] sm:$0xff] %v4213
    %4237 = vst [vmem:[#allocation5 + $0x8] sm:$0xff] %v4216
    %4238 = vst [vmem:[#allocation5 + $0x10] sm:$0xff] %v4219
    %4239 = vst [vmem:[#allocation5 + $0x18] sm:$0xff] %v4222
    %4240 = vst [vmem:[#allocation5 + $0x20] sm:$0xff] %v4225
    %4241 = vst [vmem:[#allocation5 + $0x28] sm:$0xff] %v4228
    %4242 = vst [vmem:[#allocation5 + $0x30] sm:$0xff] %v4231
    %4243 = vst [vmem:[#allocation5 + $0x38] sm:$0xff] %v4234
    %v4245 = vsel %vm149, %v4163, 0
    %v4248 = vsel %vm149, %v4164, 0
    %v4251 = vsel %vm149, %v4165, 0
    %v4254 = vsel %vm149, %v4166, 0
    %v4257 = vsel %vm149, %v4167, 0
    %v4260 = vsel %vm149, %v4168, 0
    %v4263 = vsel %vm149, %v4169, 0
    %v4266 = vsel %vm149, %v4170, 0
    %4268 = vmatpush.msra.mxu0 0.0
    %4269 = vmatpush.msra.mxu0 0.0
    %4270 = vmatpush.msra.mxu0 0.0
    %4271 = vmatpush.msra.mxu0 0.0
    %4272 = vmatpush.msra.mxu0 0.0
    %4273 = vmatpush.msra.mxu0 0.0
    %4274 = vmatpush.msra.mxu0 0.0
    %4275 = vmatpush.msra.mxu0 0.0
    %4276 = vmatpush.msra.mxu0 0.0
    %4277 = vmatpush.msra.mxu0 0.0
    %4278 = vmatpush.msra.mxu0 0.0
    %4279 = vmatpush.msra.mxu0 0.0
    %4280 = vmatpush.msra.mxu0 0.0
    %4281 = vmatpush.msra.mxu0 0.0
    %4282 = vmatpush.msra.mxu0 0.0
    %4283 = vmatpush.msra.mxu0 %v3933
    %4284 = vmatmul.f32.gmra.mxu0 %v4245
    %v4285 = vpop.f32.mrf.mxu0
    %v4286 = vadd.f32 0.0, %v4285
    %4287 = vmatmul.f32.gmra.mxu0 %v4248
    %v4288 = vpop.f32.mrf.mxu0
    %v4289 = vadd.f32 0.0, %v4288
    %4290 = vmatmul.f32.gmra.mxu0 %v4251
    %v4291 = vpop.f32.mrf.mxu0
    %v4292 = vadd.f32 0.0, %v4291
    %4293 = vmatmul.f32.gmra.mxu0 %v4254
    %v4294 = vpop.f32.mrf.mxu0
    %v4295 = vadd.f32 0.0, %v4294
    %4296 = vmatmul.f32.gmra.mxu0 %v4257
    %v4297 = vpop.f32.mrf.mxu0
    %v4298 = vadd.f32 0.0, %v4297
    %4299 = vmatmul.f32.gmra.mxu0 %v4260
    %v4300 = vpop.f32.mrf.mxu0
    %v4301 = vadd.f32 0.0, %v4300
    %4302 = vmatmul.f32.gmra.mxu0 %v4263
    %v4303 = vpop.f32.mrf.mxu0
    %v4304 = vadd.f32 0.0, %v4303
    %4305 = vmatmul.f32.gmra.mxu0 %v4266
    %v4306 = vpop.f32.mrf.mxu0
    %v4307 = vadd.f32 0.0, %v4306
    %4308 = vdwg.mxu0
    %s4309 = scalar_lea.vmem [#allocation5], 64
    %4310 = vst [vmem:[%s4309] sm:$0xff] %v4286
    %4311 = vst [vmem:[%s4309 + $0x8] sm:$0xff] %v4289
    %4312 = vst [vmem:[%s4309 + $0x10] sm:$0xff] %v4292
    %4313 = vst [vmem:[%s4309 + $0x18] sm:$0xff] %v4295
    %4314 = vst [vmem:[%s4309 + $0x20] sm:$0xff] %v4298
    %4315 = vst [vmem:[%s4309 + $0x28] sm:$0xff] %v4301
    %4316 = vst [vmem:[%s4309 + $0x30] sm:$0xff] %v4304
    %4317 = vst [vmem:[%s4309 + $0x38] sm:$0xff] %v4307
    // Predicated region
    $region18: #{tpu_custom_call.1} parent=1 // pred_check
      _
    $region19: #{tpu_custom_call.1} parent=1 // pred_check_branch
      %4319 = sbr.rel (0) target = $region21
    $region20: #{tpu_custom_call.1} parent=1 // pred_region
      %4321 = vsyncadd [#allocation4], 0
      %s4322 = sshll.u32 [#allocation5], 4
      %s4323 = int_to_ptr.vmem [resolvable:$true] %s4322
      %s4324 = sshll.u32 %s3, 4
      %s4325 = int_to_ptr.hbm [resolvable:$true] %s4324
      %4330 = dma.vmem_to_hbm [thread:$0]  %s4323, 2048, %s4325, [#allocation4], 128, 128, 8
    $region21: #{tpu_custom_call.1} parent=1 // pred_fallthru
      _
    // Predicated region
    $region22: #{tpu_custom_call.1} parent=1 // pred_check
      _
    $region23: #{tpu_custom_call.1} parent=1 // pred_check_branch
      %4332 = sbr.rel (0) target = $region25
    $region24: #{tpu_custom_call.1} parent=1 // pred_region
      %4334 = dma.done [#allocation4], 2048
    $region25: #{tpu_custom_call.1} parent=1 // pred_fallthru
      _
    %4335 = vsyncpa [#allocation3], 1
    %4336 = vsyncpa [#allocation4], 1

</llo_original>
